<compile_context>
chip_gen: v5e
topology: v5e:2x2
jax: 0.10.0
libtpu: 0.0.40
codegen_flags: <defaults>
</compile_context>

<pallas_src>
import math

import jax
import jax.numpy as jnp
from jax.experimental import pallas as pl
from jax.experimental.pallas import tpu as pltpu

# ---- model hyper-parameters (small, synthetic) ----
D_MODEL = 32
N_HEADS = 4
D_HEAD = D_MODEL // N_HEADS
D_FF = 64
N_LAYERS = 2
VOCAB = 16
MAX_LEN = 64
EPS = 1e-6
NEG_BIAS = 1e9          # additive mask bias magnitude
LANES = 128             # lane width of the packed weight slabs


# ---------------------------------------------------------------------------
# Static layout of the two packed weight slabs
#   wmat: [W_ROWS, 128] bf16   (all matmul weights + embedding tables)
#   bvec: [V_ROWS, 128] f32    (all biases and layernorm gains/offsets, one per row)
# ---------------------------------------------------------------------------

def _build_layout():
    w_off, v_off = {}, {}
    wr = 0
    vr = 0

    def add_w(name, l, rows, cols):
        nonlocal wr
        w_off[(name, l)] = (wr, rows, cols)
        wr += rows

    def add_v(name, l, cols):
        nonlocal vr
        v_off[(name, l)] = (vr, cols)
        vr += 1

    D, F, L, Vc = D_MODEL, D_FF, N_LAYERS, VOCAB
    for l in range(L):
        add_w("e_wqkv", l, D, 3 * D)
        add_w("e_wo", l, D, D)
        add_w("e_w1", l, D, F)
        add_w("e_w2", l, F, D)
    for l in range(L):
        add_w("d_wqkv", l, D, 3 * D)
        add_w("d_wo", l, D, D)
        add_w("d_cwq", l, D, D)
        add_w("d_cwkv", l, D, 2 * D)
        add_w("d_cwo", l, D, D)
        add_w("d_w1", l, D, F)
        add_w("d_w2", l, F, D)
    add_w("src_emb", 0, Vc, D)
    add_w("tgt_emb", 0, Vc, D)

    for l in range(L):
        for n, c in (("e_bqkv", 3 * D), ("e_bo", D), ("e_b1", F), ("e_b2", D),
                     ("e_ln1g", D), ("e_ln1b", D), ("e_ln2g", D), ("e_ln2b", D)):
            add_v(n, l, c)
    for l in range(L):
        for n, c in (("d_bqkv", 3 * D), ("d_bo", D), ("d_cbq", D), ("d_cbkv", 2 * D),
                     ("d_cbo", D), ("d_b1", F), ("d_b2", D),
                     ("d_ln1g", D), ("d_ln1b", D), ("d_ln2g", D), ("d_ln2b", D),
                     ("d_ln3g", D), ("d_ln3b", D)):
            add_v(n, l, c)
    for n in ("e_fg", "e_fb", "d_fg", "d_fb"):
        add_v(n, 0, D)

    w_rows = -(-wr // 16) * 16      # bf16 native sublane tiling
    v_rows = -(-vr // 8) * 8
    return w_off, v_off, w_rows, v_rows


W_OFF, V_OFF, W_ROWS, V_ROWS = _build_layout()


# ---------------------------------------------------------------------------
# Fused whole-model kernel (single grid step; batch flattened into rows)
# ---------------------------------------------------------------------------

def _encdec_kernel(src_ids_ref, tgt_ids_ref, pe_src_ref, pe_tgt_ref,
                   enc_bias_ref, self_bias_ref, cross_bias_ref,
                   wmat_ref, bvec_ref, out_ref):
    bs_src = src_ids_ref.shape[0]
    bs_tgt = tgt_ids_ref.shape[0]

    def wt(name, l=0):
        off, rows, cols = W_OFF[(name, l)]
        return wmat_ref[off:off + rows, 0:cols]          # bf16 [rows, cols]

    def vec(name, l=0):
        row, cols = V_OFF[(name, l)]
        return bvec_ref[row:row + 1, 0:cols]             # f32  [1, cols]

    def mm(x, w):                                        # f32 act x bf16 weight -> f32
        return jnp.dot(x.astype(jnp.bfloat16), w, preferred_element_type=jnp.float32)

    def layer_norm(x, g, b):
        mu = jnp.mean(x, axis=-1, keepdims=True)
        var = jnp.mean(jnp.square(x - mu), axis=-1, keepdims=True)
        return (x - mu) * jax.lax.rsqrt(var + EPS) * g + b

    def embed(ids_ref, emb_name, pe_ref, n_rows):
        # one-hot [n, VOCAB] @ [VOCAB, D] (sqrt(d_model) already folded into the table)
        ids = ids_ref[...]                                           # [n, 1] int32
        iota = jax.lax.broadcasted_iota(jnp.int32, (n_rows, VOCAB), 1)
        onehot = (iota == ids).astype(jnp.float32)
        return mm(onehot, wt(emb_name)) + pe_ref[...]

    def attention(q, k, v, bias, wo, bo):
        # q: [Sq, D], k/v: [Sk, D] (flattened batch rows), bias: additive [Sq, Sk]
        # (block-diagonal over batch + padding/causal mask); scale folded into Wq.
        def split(t):
            return jnp.stack(
                [t[:, h * D_HEAD:(h + 1) * D_HEAD] for h in range(N_HEADS)], axis=0)
        qh, kh, vh = split(q), split(k), split(v)                    # [H, S, Dh]
        s = jnp.einsum("hqd,hkd->hqk", qh, kh,
                       preferred_element_type=jnp.float32) + bias[None, :, :]
        s = s - jnp.max(s, axis=-1, keepdims=True)
        e = jnp.exp(s)
        e = e * pl.reciprocal(jnp.sum(e, axis=-1, keepdims=True), approx=True)
        o = jnp.einsum("hqk,hkd->hqd", e, vh,
                       preferred_element_type=jnp.float32)           # [H, Sq, Dh]
        o_cat = jnp.concatenate([o[h] for h in range(N_HEADS)], axis=-1)  # [Sq, D]
        return mm(o_cat, wo) + bo

    enc_bias = enc_bias_ref[...]        # [BS_src, BS_src]
    self_bias = self_bias_ref[...]      # [BS_tgt, BS_tgt]
    cross_bias = cross_bias_ref[...]    # [BS_tgt, BS_src]

    # ----------------------------- encoder -----------------------------
    x = embed(src_ids_ref, "src_emb", pe_src_ref, bs_src)            # [BS_src, D]
    for l in range(N_LAYERS):
        h = layer_norm(x, vec("e_ln1g", l), vec("e_ln1b", l))
        qkv = mm(h, wt("e_wqkv", l)) + vec("e_bqkv", l)
        x = x + attention(qkv[:, :D_MODEL], qkv[:, D_MODEL:2 * D_MODEL],
                          qkv[:, 2 * D_MODEL:], enc_bias,
                          wt("e_wo", l), vec("e_bo", l))
        h = layer_norm(x, vec("e_ln2g", l), vec("e_ln2b", l))
        f = jnp.maximum(mm(h, wt("e_w1", l)) + vec("e_b1", l), 0.0)
        x = x + mm(f, wt("e_w2", l)) + vec("e_b2", l)
    memory = layer_norm(x, vec("e_fg"), vec("e_fb"))                 # [BS_src, D]

    # ----------------------------- decoder -----------------------------
    y = embed(tgt_ids_ref, "tgt_emb", pe_tgt_ref, bs_tgt)            # [BS_tgt, D]
    for l in range(N_LAYERS):
        # masked self-attention
        h = layer_norm(y, vec("d_ln1g", l), vec("d_ln1b", l))
        qkv = mm(h, wt("d_wqkv", l)) + vec("d_bqkv", l)
        y = y + attention(qkv[:, :D_MODEL], qkv[:, D_MODEL:2 * D_MODEL],
                          qkv[:, 2 * D_MODEL:], self_bias,
                          wt("d_wo", l), vec("d_bo", l))
        # cross-attention
        h = layer_norm(y, vec("d_ln2g", l), vec("d_ln2b", l))
        q = mm(h, wt("d_cwq", l)) + vec("d_cbq", l)
        kv = mm(memory, wt("d_cwkv", l)) + vec("d_cbkv", l)
        y = y + attention(q, kv[:, :D_MODEL], kv[:, D_MODEL:], cross_bias,
                          wt("d_cwo", l), vec("d_cbo", l))
        # feed-forward
        h = layer_norm(y, vec("d_ln3g", l), vec("d_ln3b", l))
        f = jnp.maximum(mm(h, wt("d_w1", l)) + vec("d_b1", l), 0.0)
        y = y + mm(f, wt("d_w2", l)) + vec("d_b2", l)

    out_ref[...] = layer_norm(y, vec("d_fg"), vec("d_fb"))


# ---------------------------------------------------------------------------
# Wrapper
# ---------------------------------------------------------------------------

def _full_spec(shape):
    nd = len(shape)
    return pl.BlockSpec(tuple(shape), lambda *_: (0,) * nd)


def encode_decode_forward(packed, src, tgt, src_mask, tgt_mask):
    """Mirrors EncodeDecode.forward: decode(encode(src, src_mask), src_mask, tgt, tgt_mask)."""
    B, s_src = src.shape
    _, s_tgt = tgt.shape
    pe = packed["pe"]

    src_ids = src.reshape(B * s_src, 1).astype(jnp.int32)
    tgt_ids = tgt.reshape(B * s_tgt, 1).astype(jnp.int32)
    pe_src = jnp.broadcast_to(pe[None, :s_src, :], (B, s_src, D_MODEL)
                              ).reshape(B * s_src, D_MODEL)
    pe_tgt = jnp.broadcast_to(pe[None, :s_tgt, :], (B, s_tgt, D_MODEL)
                              ).reshape(B * s_tgt, D_MODEL)

    # Block-diagonal additive biases over the flattened batch:
    # 0 where (same batch element AND mask allows), -1e9 elsewhere.
    eye = jnp.eye(B, dtype=jnp.float32)

    def block_bias(mask, sq, sk):
        m = jnp.broadcast_to(mask.astype(jnp.float32), (B, sq, sk))
        allow = m[:, :, None, :] * eye[:, None, :, None]       # [B, sq, B, sk]
        return (allow - 1.0).reshape(B * sq, B * sk) * NEG_BIAS

    enc_bias = block_bias(src_mask, s_src, s_src)               # encoder self-attn
    self_bias = block_bias(tgt_mask, s_tgt, s_tgt)              # decoder self-attn (causal)
    cross_bias = block_bias(src_mask, s_tgt, s_src)             # decoder cross-attn

    inputs = (src_ids, tgt_ids, pe_src, pe_tgt,
              enc_bias, self_bias, cross_bias,
              packed["wmat"], packed["bvec"])

    out = pl.pallas_call(
        _encdec_kernel,
        out_shape=jax.ShapeDtypeStruct((B * s_tgt, D_MODEL), jnp.float32),
        grid=(1,),
        in_specs=[_full_spec(x.shape) for x in inputs],
        out_specs=_full_spec((B * s_tgt, D_MODEL)),
        compiler_params=pltpu.CompilerParams(dimension_semantics=("arbitrary",)),
    )(*inputs)
    return out.reshape(B, s_tgt, D_MODEL)   # generator is not applied (reference forward doesn't)


# ---------------------------------------------------------------------------
# Deterministic parameter init + packing into lane-dense slabs
# ---------------------------------------------------------------------------

def sinusoidal_pe(max_len, d_model):
    pos = jnp.arange(max_len, dtype=jnp.float32)[:, None]
    div = jnp.exp(jnp.arange(0, d_model, 2, dtype=jnp.float32) *
                  (-math.log(10000.0) / d_model))
    pe = jnp.zeros((max_len, d_model), jnp.float32)
    pe = pe.at[:, 0::2].set(jnp.sin(pos * div))
    pe = pe.at[:, 1::2].set(jnp.cos(pos * div))
    return pe


def init_params(key):
    ks = iter(jax.random.split(key, 64))

    def w(shape, scale=0.05):
        return jax.random.normal(next(ks), shape, jnp.float32) * scale

    z = lambda shape: jnp.zeros(shape, jnp.float32)
    o = lambda shape: jnp.ones(shape, jnp.float32)

    L, D, F = N_LAYERS, D_MODEL, D_FF
    return dict(
        src_emb=w((VOCAB, D), 0.1), tgt_emb=w((VOCAB, D), 0.1),
        pe=sinusoidal_pe(MAX_LEN, D),
        # ----- encoder -----
        e_wqkv=w((L, D, 3 * D)), e_bqkv=z((L, 3 * D)),
        e_wo=w((L, D, D)),       e_bo=z((L, D)),
        e_w1=w((L, D, F)),       e_b1=z((L, F)),
        e_w2=w((L, F, D)),       e_b2=z((L, D)),
        e_ln1g=o((L, D)), e_ln1b=z((L, D)),
        e_ln2g=o((L, D)), e_ln2b=z((L, D)),
        e_fg=o((D,)), e_fb=z((D,)),
        # ----- decoder -----
        d_wqkv=w((L, D, 3 * D)), d_bqkv=z((L, 3 * D)),
        d_wo=w((L, D, D)),       d_bo=z((L, D)),
        d_cwq=w((L, D, D)),      d_cbq=z((L, D)),
        d_cwkv=w((L, D, 2 * D)), d_cbkv=z((L, 2 * D)),
        d_cwo=w((L, D, D)),      d_cbo=z((L, D)),
        d_w1=w((L, D, F)),       d_b1=z((L, F)),
        d_w2=w((L, F, D)),       d_b2=z((L, D)),
        d_ln1g=o((L, D)), d_ln1b=z((L, D)),
        d_ln2g=o((L, D)), d_ln2b=z((L, D)),
        d_ln3g=o((L, D)), d_ln3b=z((L, D)),
        d_fg=o((D,)), d_fb=z((D,)),
        # generator (vocab projection) exists on the module but forward() never calls it
        gen_w=w((D, VOCAB)), gen_b=z((VOCAB,)),
    )


def pack_params(params):
    """Fold scales host-side and pack all weights into two lane-dense VMEM slabs."""
    sq = 1.0 / math.sqrt(D_HEAD)
    sd = math.sqrt(D_MODEL)
    p = dict(params)
    # fold 1/sqrt(d_head) score scale into the Q projections (weights + biases)
    p["e_wqkv"] = p["e_wqkv"].at[:, :, :D_MODEL].multiply(sq)
    p["e_bqkv"] = p["e_bqkv"].at[:, :D_MODEL].multiply(sq)
    p["d_wqkv"] = p["d_wqkv"].at[:, :, :D_MODEL].multiply(sq)
    p["d_bqkv"] = p["d_bqkv"].at[:, :D_MODEL].multiply(sq)
    p["d_cwq"] = p["d_cwq"] * sq
    p["d_cbq"] = p["d_cbq"] * sq
    # fold sqrt(d_model) embedding scale into the embedding tables
    p["src_emb"] = p["src_emb"] * sd
    p["tgt_emb"] = p["tgt_emb"] * sd

    wmat = jnp.zeros((W_ROWS, LANES), jnp.float32)
    for (name, l), (off, rows, cols) in W_OFF.items():
        arr = p[name] if p[name].ndim == 2 else p[name][l]
        wmat = wmat.at[off:off + rows, :cols].set(arr)

    bvec = jnp.zeros((V_ROWS, LANES), jnp.float32)
    for (name, l), (row, cols) in V_OFF.items():
        arr = p[name] if p[name].ndim == 1 else p[name][l]
        bvec = bvec.at[row, :cols].set(arr)

    return {"wmat": wmat.astype(jnp.bfloat16), "bvec": bvec, "pe": p["pe"]}


# ---------------------------------------------------------------------------
# Main
# ---------------------------------------------------------------------------

if __name__ == "__main__":
    key = jax.random.PRNGKey(0)
    k_src, k_tgt, k_par = jax.random.split(key, 3)

    B, S_SRC, S_TGT = 2, 8, 8
    src = jax.random.randint(k_src, (B, S_SRC), 1, VOCAB, dtype=jnp.int32)
    tgt = jax.random.randint(k_tgt, (B, S_TGT), 1, VOCAB, dtype=jnp.int32)

    # src_mask: all-visible padding mask [B, 1, S_src]; tgt_mask: causal [B, S_tgt, S_tgt]
    src_mask = jnp.ones((B, 1, S_SRC), jnp.float32)
    tgt_mask = jnp.broadcast_to(
        jnp.tril(jnp.ones((S_TGT, S_TGT), jnp.float32))[None, :, :], (B, S_TGT, S_TGT))

    params = init_params(k_par)
    packed = pack_params(params)

    fwd = jax.jit(encode_decode_forward)
    out = jax.block_until_ready(fwd(packed, src, tgt, src_mask, tgt_mask))

    assert out.shape == (B, S_TGT, D_MODEL)
    assert out.dtype == jnp.float32
    assert bool(jnp.all(jnp.isfinite(out)))
    print("KERNEL_OK")
</pallas_src>

<mosaic_0001>
module attributes {stable_mosaic.version = 11 : i64} {
  func.func @_encdec_kernel(%arg0: i32, %arg1: memref<16x1xi32, #tpu.memory_space<vmem>>, %arg2: memref<16x1xi32, #tpu.memory_space<vmem>>, %arg3: memref<16x32xf32, #tpu.memory_space<vmem>>, %arg4: memref<16x32xf32, #tpu.memory_space<vmem>>, %arg5: memref<16x16xf32, #tpu.memory_space<vmem>>, %arg6: memref<16x16xf32, #tpu.memory_space<vmem>>, %arg7: memref<16x16xf32, #tpu.memory_space<vmem>>, %arg8: memref<864x128xbf16, #tpu.memory_space<vmem>>, %arg9: memref<48x128xf32, #tpu.memory_space<vmem>>, %arg10: memref<16x32xf32, #tpu.memory_space<vmem>>) attributes {dimension_semantics = [#tpu.dimension_semantics<arbitrary>], iteration_bounds = array<i64: 1>, scalar_prefetch = 0 : i64, scratch_operands = 0 : i64, tpu.core_type = #tpu.core_type<tc>, window_params = [{pipeline_mode = #tpu.pipeline_mode<synchronous>, transform_indices = @transform_0, window_bounds = array<i64: 16, 1>}, {pipeline_mode = #tpu.pipeline_mode<synchronous>, transform_indices = @transform_1, window_bounds = array<i64: 16, 1>}, {pipeline_mode = #tpu.pipeline_mode<synchronous>, transform_indices = @transform_2, window_bounds = array<i64: 16, 32>}, {pipeline_mode = #tpu.pipeline_mode<synchronous>, transform_indices = @transform_3, window_bounds = array<i64: 16, 32>}, {pipeline_mode = #tpu.pipeline_mode<synchronous>, transform_indices = @transform_4, window_bounds = array<i64: 16, 16>}, {pipeline_mode = #tpu.pipeline_mode<synchronous>, transform_indices = @transform_5, window_bounds = array<i64: 16, 16>}, {pipeline_mode = #tpu.pipeline_mode<synchronous>, transform_indices = @transform_6, window_bounds = array<i64: 16, 16>}, {pipeline_mode = #tpu.pipeline_mode<synchronous>, transform_indices = @transform_7, window_bounds = array<i64: 864, 128>}, {pipeline_mode = #tpu.pipeline_mode<synchronous>, transform_indices = @transform_8, window_bounds = array<i64: 48, 128>}, {pipeline_mode = #tpu.pipeline_mode<synchronous>, transform_indices = @transform_9, window_bounds = array<i64: 16, 32>}]} {
    %c0 = arith.constant 0 : index
    %c0_0 = arith.constant 0 : index
    %0 = vector.load %arg5[%c0, %c0_0] : memref<16x16xf32, #tpu.memory_space<vmem>>, vector<16x16xf32>
    %c0_1 = arith.constant 0 : index
    %c0_2 = arith.constant 0 : index
    %1 = vector.load %arg6[%c0_1, %c0_2] : memref<16x16xf32, #tpu.memory_space<vmem>>, vector<16x16xf32>
    %c0_3 = arith.constant 0 : index
    %c0_4 = arith.constant 0 : index
    %2 = vector.load %arg7[%c0_3, %c0_4] : memref<16x16xf32, #tpu.memory_space<vmem>>, vector<16x16xf32>
    %c0_5 = arith.constant 0 : index
    %c0_6 = arith.constant 0 : index
    %3 = vector.load %arg1[%c0_5, %c0_6] : memref<16x1xi32, #tpu.memory_space<vmem>>, vector<16x1xi32>
    %4 = tpu.iota {dimensions = array<i32: 1>} : vector<16x16xi32>
    %5 = vector.broadcast %3 : vector<16x1xi32> to vector<16x16xi32>
    %6 = arith.cmpi eq, %4, %5 : vector<16x16xi32>
    %7 = arith.extui %6 : vector<16x16xi1> to vector<16x16xi32>
    %8 = arith.sitofp %7 : vector<16x16xi32> to vector<16x16xf32>
    %c832 = arith.constant 832 : index
    %c0_7 = arith.constant 0 : index
    %9 = vector.load %arg8[%c832, %c0_7] : memref<864x128xbf16, #tpu.memory_space<vmem>>, vector<16x32xbf16>
    %10 = arith.truncf %8 : vector<16x16xf32> to vector<16x16xbf16>
    %cst = arith.constant dense<0.000000e+00> : vector<16x32xf32>
    %11 = tpu.matmul %10, %9, %cst {dimension_numbers = #tpu.dot_dimension_numbers<[1], [0], [0], [1], [0, 0, 1, 1], [], []>} : vector<16x16xbf16>, vector<16x32xbf16>, vector<16x32xf32> -> vector<16x32xf32>
    %c0_8 = arith.constant 0 : index
    %c0_9 = arith.constant 0 : index
    %12 = vector.load %arg3[%c0_8, %c0_9] : memref<16x32xf32, #tpu.memory_space<vmem>>, vector<16x32xf32>
    %13 = arith.addf %11, %12 : vector<16x32xf32>
    %c4 = arith.constant 4 : index
    %c0_10 = arith.constant 0 : index
    %14 = vector.load %arg9[%c4, %c0_10] : memref<48x128xf32, #tpu.memory_space<vmem>>, vector<1x32xf32>
    %c5 = arith.constant 5 : index
    %c0_11 = arith.constant 0 : index
    %15 = vector.load %arg9[%c5, %c0_11] : memref<48x128xf32, #tpu.memory_space<vmem>>, vector<1x32xf32>
    %cst_12 = arith.constant dense<0.000000e+00> : vector<16xf32>
    %16 = vector.multi_reduction <add>, %13, %cst_12 [1] : vector<16x32xf32> to vector<16xf32>
    %17 = vector.shape_cast %16 : vector<16xf32> to vector<16x1xf32>
    %cst_13 = arith.constant 3.200000e+01 : f32
    %18 = vector.broadcast %cst_13 : f32 to vector<16x1xf32>
    %19 = arith.divf %17, %18 : vector<16x1xf32>
    %20 = vector.broadcast %19 : vector<16x1xf32> to vector<16x32xf32>
    %21 = arith.subf %13, %20 : vector<16x32xf32>
    %22 = arith.mulf %21, %21 : vector<16x32xf32>
    %cst_14 = arith.constant dense<0.000000e+00> : vector<16xf32>
    %23 = vector.multi_reduction <add>, %22, %cst_14 [1] : vector<16x32xf32> to vector<16xf32>
    %24 = vector.shape_cast %23 : vector<16xf32> to vector<16x1xf32>
    %cst_15 = arith.constant 3.200000e+01 : f32
    %25 = vector.broadcast %cst_15 : f32 to vector<16x1xf32>
    %26 = arith.divf %24, %25 : vector<16x1xf32>
    %27 = vector.broadcast %19 : vector<16x1xf32> to vector<16x32xf32>
    %28 = arith.subf %13, %27 : vector<16x32xf32>
    %cst_16 = arith.constant 9.99999997E-7 : f32
    %29 = vector.broadcast %cst_16 : f32 to vector<16x1xf32>
    %30 = arith.addf %26, %29 : vector<16x1xf32>
    %31 = math.rsqrt %30 : vector<16x1xf32>
    %32 = vector.broadcast %31 : vector<16x1xf32> to vector<16x32xf32>
    %33 = arith.mulf %28, %32 : vector<16x32xf32>
    %34 = vector.broadcast %14 : vector<1x32xf32> to vector<16x32xf32>
    %35 = arith.mulf %33, %34 : vector<16x32xf32>
    %36 = vector.broadcast %15 : vector<1x32xf32> to vector<16x32xf32>
    %37 = arith.addf %35, %36 : vector<16x32xf32>
    %c0_17 = arith.constant 0 : index
    %c0_18 = arith.constant 0 : index
    %38 = vector.load %arg8[%c0_17, %c0_18] : memref<864x128xbf16, #tpu.memory_space<vmem>>, vector<32x96xbf16>
    %39 = arith.truncf %37 : vector<16x32xf32> to vector<16x32xbf16>
    %cst_19 = arith.constant dense<0.000000e+00> : vector<16x96xf32>
    %40 = tpu.matmul %39, %38, %cst_19 {dimension_numbers = #tpu.dot_dimension_numbers<[1], [0], [0], [1], [0, 0, 1, 1], [], []>} : vector<16x32xbf16>, vector<32x96xbf16>, vector<16x96xf32> -> vector<16x96xf32>
    %c0_20 = arith.constant 0 : index
    %c0_21 = arith.constant 0 : index
    %41 = vector.load %arg9[%c0_20, %c0_21] : memref<48x128xf32, #tpu.memory_space<vmem>>, vector<1x96xf32>
    %42 = vector.broadcast %41 : vector<1x96xf32> to vector<16x96xf32>
    %43 = arith.addf %40, %42 : vector<16x96xf32>
    %44 = vector.extract_strided_slice %43 {offsets = [0, 0], sizes = [16, 32], strides = [1, 1]} : vector<16x96xf32> to vector<16x32xf32>
    %45 = vector.extract_strided_slice %43 {offsets = [0, 32], sizes = [16, 32], strides = [1, 1]} : vector<16x96xf32> to vector<16x32xf32>
    %46 = vector.extract_strided_slice %43 {offsets = [0, 64], sizes = [16, 32], strides = [1, 1]} : vector<16x96xf32> to vector<16x32xf32>
    %c32 = arith.constant 32 : index
    %c0_22 = arith.constant 0 : index
    %47 = vector.load %arg8[%c32, %c0_22] : memref<864x128xbf16, #tpu.memory_space<vmem>>, vector<32x32xbf16>
    %c1 = arith.constant 1 : index
    %c0_23 = arith.constant 0 : index
    %48 = vector.load %arg9[%c1, %c0_23] : memref<48x128xf32, #tpu.memory_space<vmem>>, vector<1x32xf32>
    %49 = vector.extract_strided_slice %44 {offsets = [0, 0], sizes = [16, 8], strides = [1, 1]} : vector<16x32xf32> to vector<16x8xf32>
    %50 = vector.extract_strided_slice %44 {offsets = [0, 8], sizes = [16, 8], strides = [1, 1]} : vector<16x32xf32> to vector<16x8xf32>
    %51 = vector.extract_strided_slice %44 {offsets = [0, 16], sizes = [16, 8], strides = [1, 1]} : vector<16x32xf32> to vector<16x8xf32>
    %52 = vector.extract_strided_slice %44 {offsets = [0, 24], sizes = [16, 8], strides = [1, 1]} : vector<16x32xf32> to vector<16x8xf32>
    %53 = vector.shape_cast %49 : vector<16x8xf32> to vector<1x16x8xf32>
    %54 = vector.shape_cast %50 : vector<16x8xf32> to vector<1x16x8xf32>
    %55 = vector.shape_cast %51 : vector<16x8xf32> to vector<1x16x8xf32>
    %56 = vector.shape_cast %52 : vector<16x8xf32> to vector<1x16x8xf32>
    %57 = tpu.concatenate %53, %54, %55, %56 in 0 : vector<1x16x8xf32>, vector<1x16x8xf32>, vector<1x16x8xf32>, vector<1x16x8xf32> -> vector<4x16x8xf32>
    %58 = vector.extract_strided_slice %45 {offsets = [0, 0], sizes = [16, 8], strides = [1, 1]} : vector<16x32xf32> to vector<16x8xf32>
    %59 = vector.extract_strided_slice %45 {offsets = [0, 8], sizes = [16, 8], strides = [1, 1]} : vector<16x32xf32> to vector<16x8xf32>
    %60 = vector.extract_strided_slice %45 {offsets = [0, 16], sizes = [16, 8], strides = [1, 1]} : vector<16x32xf32> to vector<16x8xf32>
    %61 = vector.extract_strided_slice %45 {offsets = [0, 24], sizes = [16, 8], strides = [1, 1]} : vector<16x32xf32> to vector<16x8xf32>
    %62 = vector.shape_cast %58 : vector<16x8xf32> to vector<1x16x8xf32>
    %63 = vector.shape_cast %59 : vector<16x8xf32> to vector<1x16x8xf32>
    %64 = vector.shape_cast %60 : vector<16x8xf32> to vector<1x16x8xf32>
    %65 = vector.shape_cast %61 : vector<16x8xf32> to vector<1x16x8xf32>
    %66 = tpu.concatenate %62, %63, %64, %65 in 0 : vector<1x16x8xf32>, vector<1x16x8xf32>, vector<1x16x8xf32>, vector<1x16x8xf32> -> vector<4x16x8xf32>
    %67 = vector.extract_strided_slice %46 {offsets = [0, 0], sizes = [16, 8], strides = [1, 1]} : vector<16x32xf32> to vector<16x8xf32>
    %68 = vector.extract_strided_slice %46 {offsets = [0, 8], sizes = [16, 8], strides = [1, 1]} : vector<16x32xf32> to vector<16x8xf32>
    %69 = vector.extract_strided_slice %46 {offsets = [0, 16], sizes = [16, 8], strides = [1, 1]} : vector<16x32xf32> to vector<16x8xf32>
    %70 = vector.extract_strided_slice %46 {offsets = [0, 24], sizes = [16, 8], strides = [1, 1]} : vector<16x32xf32> to vector<16x8xf32>
    %71 = vector.shape_cast %67 : vector<16x8xf32> to vector<1x16x8xf32>
    %72 = vector.shape_cast %68 : vector<16x8xf32> to vector<1x16x8xf32>
    %73 = vector.shape_cast %69 : vector<16x8xf32> to vector<1x16x8xf32>
    %74 = vector.shape_cast %70 : vector<16x8xf32> to vector<1x16x8xf32>
    %75 = tpu.concatenate %71, %72, %73, %74 in 0 : vector<1x16x8xf32>, vector<1x16x8xf32>, vector<1x16x8xf32>, vector<1x16x8xf32> -> vector<4x16x8xf32>
    "tpu.trace_start"() <{level = 10 : i32, message = "hqd,hkd->hqk"}> : () -> ()
    %cst_24 = arith.constant dense<0.000000e+00> : vector<4x16x16xf32>
    %76 = tpu.matmul %57, %66, %cst_24 {dimension_numbers = #tpu.dot_dimension_numbers<[2], [2], [1], [1], [0, 0, 0, 1, 1, 1], [0], [0]>} : vector<4x16x8xf32>, vector<4x16x8xf32>, vector<4x16x16xf32> -> vector<4x16x16xf32>
    "tpu.trace_stop"() : () -> ()
    %77 = vector.shape_cast %0 : vector<16x16xf32> to vector<1x16x16xf32>
    %78 = vector.broadcast %77 : vector<1x16x16xf32> to vector<4x16x16xf32>
    %79 = arith.addf %76, %78 : vector<4x16x16xf32>
    %cst_25 = arith.constant dense<0xFF800000> : vector<4x16xf32>
    %80 = vector.multi_reduction <maximumf>, %79, %cst_25 [2] : vector<4x16x16xf32> to vector<4x16xf32>
    %81 = vector.shape_cast %80 : vector<4x16xf32> to vector<4x16x1xf32>
    %82 = vector.broadcast %81 : vector<4x16x1xf32> to vector<4x16x16xf32>
    %83 = arith.subf %79, %82 : vector<4x16x16xf32>
    %84 = math.exp %83 : vector<4x16x16xf32>
    %cst_26 = arith.constant dense<0.000000e+00> : vector<4x16xf32>
    %85 = vector.multi_reduction <add>, %84, %cst_26 [2] : vector<4x16x16xf32> to vector<4x16xf32>
    %86 = vector.shape_cast %85 : vector<4x16xf32> to vector<4x16x1xf32>
    %87 = tpu.reciprocal %86 {approx = true} : vector<4x16x1xf32> -> vector<4x16x1xf32>
    %88 = vector.broadcast %87 : vector<4x16x1xf32> to vector<4x16x16xf32>
    %89 = arith.mulf %84, %88 : vector<4x16x16xf32>
    "tpu.trace_start"() <{level = 10 : i32, message = "hqk,hkd->hqd"}> : () -> ()
    %cst_27 = arith.constant dense<0.000000e+00> : vector<4x16x8xf32>
    %90 = tpu.matmul %89, %75, %cst_27 {dimension_numbers = #tpu.dot_dimension_numbers<[2], [1], [1], [2], [0, 0, 0, 1, 1, 2], [0], [0]>} : vector<4x16x16xf32>, vector<4x16x8xf32>, vector<4x16x8xf32> -> vector<4x16x8xf32>
    "tpu.trace_stop"() : () -> ()
    %91 = vector.extract_strided_slice %90 {offsets = [0, 0, 0], sizes = [1, 16, 8], strides = [1, 1, 1]} : vector<4x16x8xf32> to vector<1x16x8xf32>
    %92 = vector.shape_cast %91 : vector<1x16x8xf32> to vector<16x8xf32>
    %93 = vector.extract_strided_slice %90 {offsets = [1, 0, 0], sizes = [1, 16, 8], strides = [1, 1, 1]} : vector<4x16x8xf32> to vector<1x16x8xf32>
    %94 = vector.shape_cast %93 : vector<1x16x8xf32> to vector<16x8xf32>
    %95 = vector.extract_strided_slice %90 {offsets = [2, 0, 0], sizes = [1, 16, 8], strides = [1, 1, 1]} : vector<4x16x8xf32> to vector<1x16x8xf32>
    %96 = vector.shape_cast %95 : vector<1x16x8xf32> to vector<16x8xf32>
    %97 = vector.extract_strided_slice %90 {offsets = [3, 0, 0], sizes = [1, 16, 8], strides = [1, 1, 1]} : vector<4x16x8xf32> to vector<1x16x8xf32>
    %98 = vector.shape_cast %97 : vector<1x16x8xf32> to vector<16x8xf32>
    %99 = tpu.concatenate %92, %94, %96, %98 in 1 : vector<16x8xf32>, vector<16x8xf32>, vector<16x8xf32>, vector<16x8xf32> -> vector<16x32xf32>
    %100 = arith.truncf %99 : vector<16x32xf32> to vector<16x32xbf16>
    %cst_28 = arith.constant dense<0.000000e+00> : vector<16x32xf32>
    %101 = tpu.matmul %100, %47, %cst_28 {dimension_numbers = #tpu.dot_dimension_numbers<[1], [0], [0], [1], [0, 0, 1, 1], [], []>} : vector<16x32xbf16>, vector<32x32xbf16>, vector<16x32xf32> -> vector<16x32xf32>
    %102 = vector.broadcast %48 : vector<1x32xf32> to vector<16x32xf32>
    %103 = arith.addf %101, %102 : vector<16x32xf32>
    %104 = arith.addf %13, %103 : vector<16x32xf32>
    %c6 = arith.constant 6 : index
    %c0_29 = arith.constant 0 : index
    %105 = vector.load %arg9[%c6, %c0_29] : memref<48x128xf32, #tpu.memory_space<vmem>>, vector<1x32xf32>
    %c7 = arith.constant 7 : index
    %c0_30 = arith.constant 0 : index
    %106 = vector.load %arg9[%c7, %c0_30] : memref<48x128xf32, #tpu.memory_space<vmem>>, vector<1x32xf32>
    %cst_31 = arith.constant dense<0.000000e+00> : vector<16xf32>
    %107 = vector.multi_reduction <add>, %104, %cst_31 [1] : vector<16x32xf32> to vector<16xf32>
    %108 = vector.shape_cast %107 : vector<16xf32> to vector<16x1xf32>
    %cst_32 = arith.constant 3.200000e+01 : f32
    %109 = vector.broadcast %cst_32 : f32 to vector<16x1xf32>
    %110 = arith.divf %108, %109 : vector<16x1xf32>
    %111 = vector.broadcast %110 : vector<16x1xf32> to vector<16x32xf32>
    %112 = arith.subf %104, %111 : vector<16x32xf32>
    %113 = arith.mulf %112, %112 : vector<16x32xf32>
    %cst_33 = arith.constant dense<0.000000e+00> : vector<16xf32>
    %114 = vector.multi_reduction <add>, %113, %cst_33 [1] : vector<16x32xf32> to vector<16xf32>
    %115 = vector.shape_cast %114 : vector<16xf32> to vector<16x1xf32>
    %cst_34 = arith.constant 3.200000e+01 : f32
    %116 = vector.broadcast %cst_34 : f32 to vector<16x1xf32>
    %117 = arith.divf %115, %116 : vector<16x1xf32>
    %118 = vector.broadcast %110 : vector<16x1xf32> to vector<16x32xf32>
    %119 = arith.subf %104, %118 : vector<16x32xf32>
    %cst_35 = arith.constant 9.99999997E-7 : f32
    %120 = vector.broadcast %cst_35 : f32 to vector<16x1xf32>
    %121 = arith.addf %117, %120 : vector<16x1xf32>
    %122 = math.rsqrt %121 : vector<16x1xf32>
    %123 = vector.broadcast %122 : vector<16x1xf32> to vector<16x32xf32>
    %124 = arith.mulf %119, %123 : vector<16x32xf32>
    %125 = vector.broadcast %105 : vector<1x32xf32> to vector<16x32xf32>
    %126 = arith.mulf %124, %125 : vector<16x32xf32>
    %127 = vector.broadcast %106 : vector<1x32xf32> to vector<16x32xf32>
    %128 = arith.addf %126, %127 : vector<16x32xf32>
    %c64 = arith.constant 64 : index
    %c0_36 = arith.constant 0 : index
    %129 = vector.load %arg8[%c64, %c0_36] : memref<864x128xbf16, #tpu.memory_space<vmem>>, vector<32x64xbf16>
    %130 = arith.truncf %128 : vector<16x32xf32> to vector<16x32xbf16>
    %cst_37 = arith.constant dense<0.000000e+00> : vector<16x64xf32>
    %131 = tpu.matmul %130, %129, %cst_37 {dimension_numbers = #tpu.dot_dimension_numbers<[1], [0], [0], [1], [0, 0, 1, 1], [], []>} : vector<16x32xbf16>, vector<32x64xbf16>, vector<16x64xf32> -> vector<16x64xf32>
    %c2 = arith.constant 2 : index
    %c0_38 = arith.constant 0 : index
    %132 = vector.load %arg9[%c2, %c0_38] : memref<48x128xf32, #tpu.memory_space<vmem>>, vector<1x64xf32>
    %133 = vector.broadcast %132 : vector<1x64xf32> to vector<16x64xf32>
    %134 = arith.addf %131, %133 : vector<16x64xf32>
    %cst_39 = arith.constant 0.000000e+00 : f32
    %135 = vector.broadcast %cst_39 : f32 to vector<16x64xf32>
    %136 = arith.maximumf %134, %135 : vector<16x64xf32>
    %c96 = arith.constant 96 : index
    %c0_40 = arith.constant 0 : index
    %137 = vector.load %arg8[%c96, %c0_40] : memref<864x128xbf16, #tpu.memory_space<vmem>>, vector<64x32xbf16>
    %138 = arith.truncf %136 : vector<16x64xf32> to vector<16x64xbf16>
    %cst_41 = arith.constant dense<0.000000e+00> : vector<16x32xf32>
    %139 = tpu.matmul %138, %137, %cst_41 {dimension_numbers = #tpu.dot_dimension_numbers<[1], [0], [0], [1], [0, 0, 1, 1], [], []>} : vector<16x64xbf16>, vector<64x32xbf16>, vector<16x32xf32> -> vector<16x32xf32>
    %140 = arith.addf %104, %139 : vector<16x32xf32>
    %c3 = arith.constant 3 : index
    %c0_42 = arith.constant 0 : index
    %141 = vector.load %arg9[%c3, %c0_42] : memref<48x128xf32, #tpu.memory_space<vmem>>, vector<1x32xf32>
    %142 = vector.broadcast %141 : vector<1x32xf32> to vector<16x32xf32>
    %143 = arith.addf %140, %142 : vector<16x32xf32>
    %c12 = arith.constant 12 : index
    %c0_43 = arith.constant 0 : index
    %144 = vector.load %arg9[%c12, %c0_43] : memref<48x128xf32, #tpu.memory_space<vmem>>, vector<1x32xf32>
    %c13 = arith.constant 13 : index
    %c0_44 = arith.constant 0 : index
    %145 = vector.load %arg9[%c13, %c0_44] : memref<48x128xf32, #tpu.memory_space<vmem>>, vector<1x32xf32>
    %cst_45 = arith.constant dense<0.000000e+00> : vector<16xf32>
    %146 = vector.multi_reduction <add>, %143, %cst_45 [1] : vector<16x32xf32> to vector<16xf32>
    %147 = vector.shape_cast %146 : vector<16xf32> to vector<16x1xf32>
    %cst_46 = arith.constant 3.200000e+01 : f32
    %148 = vector.broadcast %cst_46 : f32 to vector<16x1xf32>
    %149 = arith.divf %147, %148 : vector<16x1xf32>
    %150 = vector.broadcast %149 : vector<16x1xf32> to vector<16x32xf32>
    %151 = arith.subf %143, %150 : vector<16x32xf32>
    %152 = arith.mulf %151, %151 : vector<16x32xf32>
    %cst_47 = arith.constant dense<0.000000e+00> : vector<16xf32>
    %153 = vector.multi_reduction <add>, %152, %cst_47 [1] : vector<16x32xf32> to vector<16xf32>
    %154 = vector.shape_cast %153 : vector<16xf32> to vector<16x1xf32>
    %cst_48 = arith.constant 3.200000e+01 : f32
    %155 = vector.broadcast %cst_48 : f32 to vector<16x1xf32>
    %156 = arith.divf %154, %155 : vector<16x1xf32>
    %157 = vector.broadcast %149 : vector<16x1xf32> to vector<16x32xf32>
    %158 = arith.subf %143, %157 : vector<16x32xf32>
    %cst_49 = arith.constant 9.99999997E-7 : f32
    %159 = vector.broadcast %cst_49 : f32 to vector<16x1xf32>
    %160 = arith.addf %156, %159 : vector<16x1xf32>
    %161 = math.rsqrt %160 : vector<16x1xf32>
    %162 = vector.broadcast %161 : vector<16x1xf32> to vector<16x32xf32>
    %163 = arith.mulf %158, %162 : vector<16x32xf32>
    %164 = vector.broadcast %144 : vector<1x32xf32> to vector<16x32xf32>
    %165 = arith.mulf %163, %164 : vector<16x32xf32>
    %166 = vector.broadcast %145 : vector<1x32xf32> to vector<16x32xf32>
    %167 = arith.addf %165, %166 : vector<16x32xf32>
    %c160 = arith.constant 160 : index
    %c0_50 = arith.constant 0 : index
    %168 = vector.load %arg8[%c160, %c0_50] : memref<864x128xbf16, #tpu.memory_space<vmem>>, vector<32x96xbf16>
    %169 = arith.truncf %167 : vector<16x32xf32> to vector<16x32xbf16>
    %cst_51 = arith.constant dense<0.000000e+00> : vector<16x96xf32>
    %170 = tpu.matmul %169, %168, %cst_51 {dimension_numbers = #tpu.dot_dimension_numbers<[1], [0], [0], [1], [0, 0, 1, 1], [], []>} : vector<16x32xbf16>, vector<32x96xbf16>, vector<16x96xf32> -> vector<16x96xf32>
    %c8 = arith.constant 8 : index
    %c0_52 = arith.constant 0 : index
    %171 = vector.load %arg9[%c8, %c0_52] : memref<48x128xf32, #tpu.memory_space<vmem>>, vector<1x96xf32>
    %172 = vector.broadcast %171 : vector<1x96xf32> to vector<16x96xf32>
    %173 = arith.addf %170, %172 : vector<16x96xf32>
    %174 = vector.extract_strided_slice %173 {offsets = [0, 0], sizes = [16, 32], strides = [1, 1]} : vector<16x96xf32> to vector<16x32xf32>
    %175 = vector.extract_strided_slice %173 {offsets = [0, 32], sizes = [16, 32], strides = [1, 1]} : vector<16x96xf32> to vector<16x32xf32>
    %176 = vector.extract_strided_slice %173 {offsets = [0, 64], sizes = [16, 32], strides = [1, 1]} : vector<16x96xf32> to vector<16x32xf32>
    %c192 = arith.constant 192 : index
    %c0_53 = arith.constant 0 : index
    %177 = vector.load %arg8[%c192, %c0_53] : memref<864x128xbf16, #tpu.memory_space<vmem>>, vector<32x32xbf16>
    %c9 = arith.constant 9 : index
    %c0_54 = arith.constant 0 : index
    %178 = vector.load %arg9[%c9, %c0_54] : memref<48x128xf32, #tpu.memory_space<vmem>>, vector<1x32xf32>
    %179 = vector.extract_strided_slice %174 {offsets = [0, 0], sizes = [16, 8], strides = [1, 1]} : vector<16x32xf32> to vector<16x8xf32>
    %180 = vector.extract_strided_slice %174 {offsets = [0, 8], sizes = [16, 8], strides = [1, 1]} : vector<16x32xf32> to vector<16x8xf32>
    %181 = vector.extract_strided_slice %174 {offsets = [0, 16], sizes = [16, 8], strides = [1, 1]} : vector<16x32xf32> to vector<16x8xf32>
    %182 = vector.extract_strided_slice %174 {offsets = [0, 24], sizes = [16, 8], strides = [1, 1]} : vector<16x32xf32> to vector<16x8xf32>
    %183 = vector.shape_cast %179 : vector<16x8xf32> to vector<1x16x8xf32>
    %184 = vector.shape_cast %180 : vector<16x8xf32> to vector<1x16x8xf32>
    %185 = vector.shape_cast %181 : vector<16x8xf32> to vector<1x16x8xf32>
    %186 = vector.shape_cast %182 : vector<16x8xf32> to vector<1x16x8xf32>
    %187 = tpu.concatenate %183, %184, %185, %186 in 0 : vector<1x16x8xf32>, vector<1x16x8xf32>, vector<1x16x8xf32>, vector<1x16x8xf32> -> vector<4x16x8xf32>
    %188 = vector.extract_strided_slice %175 {offsets = [0, 0], sizes = [16, 8], strides = [1, 1]} : vector<16x32xf32> to vector<16x8xf32>
    %189 = vector.extract_strided_slice %175 {offsets = [0, 8], sizes = [16, 8], strides = [1, 1]} : vector<16x32xf32> to vector<16x8xf32>
    %190 = vector.extract_strided_slice %175 {offsets = [0, 16], sizes = [16, 8], strides = [1, 1]} : vector<16x32xf32> to vector<16x8xf32>
    %191 = vector.extract_strided_slice %175 {offsets = [0, 24], sizes = [16, 8], strides = [1, 1]} : vector<16x32xf32> to vector<16x8xf32>
    %192 = vector.shape_cast %188 : vector<16x8xf32> to vector<1x16x8xf32>
    %193 = vector.shape_cast %189 : vector<16x8xf32> to vector<1x16x8xf32>
    %194 = vector.shape_cast %190 : vector<16x8xf32> to vector<1x16x8xf32>
    %195 = vector.shape_cast %191 : vector<16x8xf32> to vector<1x16x8xf32>
    %196 = tpu.concatenate %192, %193, %194, %195 in 0 : vector<1x16x8xf32>, vector<1x16x8xf32>, vector<1x16x8xf32>, vector<1x16x8xf32> -> vector<4x16x8xf32>
    %197 = vector.extract_strided_slice %176 {offsets = [0, 0], sizes = [16, 8], strides = [1, 1]} : vector<16x32xf32> to vector<16x8xf32>
    %198 = vector.extract_strided_slice %176 {offsets = [0, 8], sizes = [16, 8], strides = [1, 1]} : vector<16x32xf32> to vector<16x8xf32>
    %199 = vector.extract_strided_slice %176 {offsets = [0, 16], sizes = [16, 8], strides = [1, 1]} : vector<16x32xf32> to vector<16x8xf32>
    %200 = vector.extract_strided_slice %176 {offsets = [0, 24], sizes = [16, 8], strides = [1, 1]} : vector<16x32xf32> to vector<16x8xf32>
    %201 = vector.shape_cast %197 : vector<16x8xf32> to vector<1x16x8xf32>
    %202 = vector.shape_cast %198 : vector<16x8xf32> to vector<1x16x8xf32>
    %203 = vector.shape_cast %199 : vector<16x8xf32> to vector<1x16x8xf32>
    %204 = vector.shape_cast %200 : vector<16x8xf32> to vector<1x16x8xf32>
    %205 = tpu.concatenate %201, %202, %203, %204 in 0 : vector<1x16x8xf32>, vector<1x16x8xf32>, vector<1x16x8xf32>, vector<1x16x8xf32> -> vector<4x16x8xf32>
    "tpu.trace_start"() <{level = 10 : i32, message = "hqd,hkd->hqk"}> : () -> ()
    %cst_55 = arith.constant dense<0.000000e+00> : vector<4x16x16xf32>
    %206 = tpu.matmul %187, %196, %cst_55 {dimension_numbers = #tpu.dot_dimension_numbers<[2], [2], [1], [1], [0, 0, 0, 1, 1, 1], [0], [0]>} : vector<4x16x8xf32>, vector<4x16x8xf32>, vector<4x16x16xf32> -> vector<4x16x16xf32>
    "tpu.trace_stop"() : () -> ()
    %207 = vector.shape_cast %0 : vector<16x16xf32> to vector<1x16x16xf32>
    %208 = vector.broadcast %207 : vector<1x16x16xf32> to vector<4x16x16xf32>
    %209 = arith.addf %206, %208 : vector<4x16x16xf32>
    %cst_56 = arith.constant dense<0xFF800000> : vector<4x16xf32>
    %210 = vector.multi_reduction <maximumf>, %209, %cst_56 [2] : vector<4x16x16xf32> to vector<4x16xf32>
    %211 = vector.shape_cast %210 : vector<4x16xf32> to vector<4x16x1xf32>
    %212 = vector.broadcast %211 : vector<4x16x1xf32> to vector<4x16x16xf32>
    %213 = arith.subf %209, %212 : vector<4x16x16xf32>
    %214 = math.exp %213 : vector<4x16x16xf32>
    %cst_57 = arith.constant dense<0.000000e+00> : vector<4x16xf32>
    %215 = vector.multi_reduction <add>, %214, %cst_57 [2] : vector<4x16x16xf32> to vector<4x16xf32>
    %216 = vector.shape_cast %215 : vector<4x16xf32> to vector<4x16x1xf32>
    %217 = tpu.reciprocal %216 {approx = true} : vector<4x16x1xf32> -> vector<4x16x1xf32>
    %218 = vector.broadcast %217 : vector<4x16x1xf32> to vector<4x16x16xf32>
    %219 = arith.mulf %214, %218 : vector<4x16x16xf32>
    "tpu.trace_start"() <{level = 10 : i32, message = "hqk,hkd->hqd"}> : () -> ()
    %cst_58 = arith.constant dense<0.000000e+00> : vector<4x16x8xf32>
    %220 = tpu.matmul %219, %205, %cst_58 {dimension_numbers = #tpu.dot_dimension_numbers<[2], [1], [1], [2], [0, 0, 0, 1, 1, 2], [0], [0]>} : vector<4x16x16xf32>, vector<4x16x8xf32>, vector<4x16x8xf32> -> vector<4x16x8xf32>
    "tpu.trace_stop"() : () -> ()
    %221 = vector.extract_strided_slice %220 {offsets = [0, 0, 0], sizes = [1, 16, 8], strides = [1, 1, 1]} : vector<4x16x8xf32> to vector<1x16x8xf32>
    %222 = vector.shape_cast %221 : vector<1x16x8xf32> to vector<16x8xf32>
    %223 = vector.extract_strided_slice %220 {offsets = [1, 0, 0], sizes = [1, 16, 8], strides = [1, 1, 1]} : vector<4x16x8xf32> to vector<1x16x8xf32>
    %224 = vector.shape_cast %223 : vector<1x16x8xf32> to vector<16x8xf32>
    %225 = vector.extract_strided_slice %220 {offsets = [2, 0, 0], sizes = [1, 16, 8], strides = [1, 1, 1]} : vector<4x16x8xf32> to vector<1x16x8xf32>
    %226 = vector.shape_cast %225 : vector<1x16x8xf32> to vector<16x8xf32>
    %227 = vector.extract_strided_slice %220 {offsets = [3, 0, 0], sizes = [1, 16, 8], strides = [1, 1, 1]} : vector<4x16x8xf32> to vector<1x16x8xf32>
    %228 = vector.shape_cast %227 : vector<1x16x8xf32> to vector<16x8xf32>
    %229 = tpu.concatenate %222, %224, %226, %228 in 1 : vector<16x8xf32>, vector<16x8xf32>, vector<16x8xf32>, vector<16x8xf32> -> vector<16x32xf32>
    %230 = arith.truncf %229 : vector<16x32xf32> to vector<16x32xbf16>
    %cst_59 = arith.constant dense<0.000000e+00> : vector<16x32xf32>
    %231 = tpu.matmul %230, %177, %cst_59 {dimension_numbers = #tpu.dot_dimension_numbers<[1], [0], [0], [1], [0, 0, 1, 1], [], []>} : vector<16x32xbf16>, vector<32x32xbf16>, vector<16x32xf32> -> vector<16x32xf32>
    %232 = vector.broadcast %178 : vector<1x32xf32> to vector<16x32xf32>
    %233 = arith.addf %231, %232 : vector<16x32xf32>
    %234 = arith.addf %143, %233 : vector<16x32xf32>
    %c14 = arith.constant 14 : index
    %c0_60 = arith.constant 0 : index
    %235 = vector.load %arg9[%c14, %c0_60] : memref<48x128xf32, #tpu.memory_space<vmem>>, vector<1x32xf32>
    %c15 = arith.constant 15 : index
    %c0_61 = arith.constant 0 : index
    %236 = vector.load %arg9[%c15, %c0_61] : memref<48x128xf32, #tpu.memory_space<vmem>>, vector<1x32xf32>
    %cst_62 = arith.constant dense<0.000000e+00> : vector<16xf32>
    %237 = vector.multi_reduction <add>, %234, %cst_62 [1] : vector<16x32xf32> to vector<16xf32>
    %238 = vector.shape_cast %237 : vector<16xf32> to vector<16x1xf32>
    %cst_63 = arith.constant 3.200000e+01 : f32
    %239 = vector.broadcast %cst_63 : f32 to vector<16x1xf32>
    %240 = arith.divf %238, %239 : vector<16x1xf32>
    %241 = vector.broadcast %240 : vector<16x1xf32> to vector<16x32xf32>
    %242 = arith.subf %234, %241 : vector<16x32xf32>
    %243 = arith.mulf %242, %242 : vector<16x32xf32>
    %cst_64 = arith.constant dense<0.000000e+00> : vector<16xf32>
    %244 = vector.multi_reduction <add>, %243, %cst_64 [1] : vector<16x32xf32> to vector<16xf32>
    %245 = vector.shape_cast %244 : vector<16xf32> to vector<16x1xf32>
    %cst_65 = arith.constant 3.200000e+01 : f32
    %246 = vector.broadcast %cst_65 : f32 to vector<16x1xf32>
    %247 = arith.divf %245, %246 : vector<16x1xf32>
    %248 = vector.broadcast %240 : vector<16x1xf32> to vector<16x32xf32>
    %249 = arith.subf %234, %248 : vector<16x32xf32>
    %cst_66 = arith.constant 9.99999997E-7 : f32
    %250 = vector.broadcast %cst_66 : f32 to vector<16x1xf32>
    %251 = arith.addf %247, %250 : vector<16x1xf32>
    %252 = math.rsqrt %251 : vector<16x1xf32>
    %253 = vector.broadcast %252 : vector<16x1xf32> to vector<16x32xf32>
    %254 = arith.mulf %249, %253 : vector<16x32xf32>
    %255 = vector.broadcast %235 : vector<1x32xf32> to vector<16x32xf32>
    %256 = arith.mulf %254, %255 : vector<16x32xf32>
    %257 = vector.broadcast %236 : vector<1x32xf32> to vector<16x32xf32>
    %258 = arith.addf %256, %257 : vector<16x32xf32>
    %c224 = arith.constant 224 : index
    %c0_67 = arith.constant 0 : index
    %259 = vector.load %arg8[%c224, %c0_67] : memref<864x128xbf16, #tpu.memory_space<vmem>>, vector<32x64xbf16>
    %260 = arith.truncf %258 : vector<16x32xf32> to vector<16x32xbf16>
    %cst_68 = arith.constant dense<0.000000e+00> : vector<16x64xf32>
    %261 = tpu.matmul %260, %259, %cst_68 {dimension_numbers = #tpu.dot_dimension_numbers<[1], [0], [0], [1], [0, 0, 1, 1], [], []>} : vector<16x32xbf16>, vector<32x64xbf16>, vector<16x64xf32> -> vector<16x64xf32>
    %c10 = arith.constant 10 : index
    %c0_69 = arith.constant 0 : index
    %262 = vector.load %arg9[%c10, %c0_69] : memref<48x128xf32, #tpu.memory_space<vmem>>, vector<1x64xf32>
    %263 = vector.broadcast %262 : vector<1x64xf32> to vector<16x64xf32>
    %264 = arith.addf %261, %263 : vector<16x64xf32>
    %cst_70 = arith.constant 0.000000e+00 : f32
    %265 = vector.broadcast %cst_70 : f32 to vector<16x64xf32>
    %266 = arith.maximumf %264, %265 : vector<16x64xf32>
    %c256 = arith.constant 256 : index
    %c0_71 = arith.constant 0 : index
    %267 = vector.load %arg8[%c256, %c0_71] : memref<864x128xbf16, #tpu.memory_space<vmem>>, vector<64x32xbf16>
    %268 = arith.truncf %266 : vector<16x64xf32> to vector<16x64xbf16>
    %cst_72 = arith.constant dense<0.000000e+00> : vector<16x32xf32>
    %269 = tpu.matmul %268, %267, %cst_72 {dimension_numbers = #tpu.dot_dimension_numbers<[1], [0], [0], [1], [0, 0, 1, 1], [], []>} : vector<16x64xbf16>, vector<64x32xbf16>, vector<16x32xf32> -> vector<16x32xf32>
    %270 = arith.addf %234, %269 : vector<16x32xf32>
    %c11 = arith.constant 11 : index
    %c0_73 = arith.constant 0 : index
    %271 = vector.load %arg9[%c11, %c0_73] : memref<48x128xf32, #tpu.memory_space<vmem>>, vector<1x32xf32>
    %272 = vector.broadcast %271 : vector<1x32xf32> to vector<16x32xf32>
    %273 = arith.addf %270, %272 : vector<16x32xf32>
    %c42 = arith.constant 42 : index
    %c0_74 = arith.constant 0 : index
    %274 = vector.load %arg9[%c42, %c0_74] : memref<48x128xf32, #tpu.memory_space<vmem>>, vector<1x32xf32>
    %c43 = arith.constant 43 : index
    %c0_75 = arith.constant 0 : index
    %275 = vector.load %arg9[%c43, %c0_75] : memref<48x128xf32, #tpu.memory_space<vmem>>, vector<1x32xf32>
    %cst_76 = arith.constant dense<0.000000e+00> : vector<16xf32>
    %276 = vector.multi_reduction <add>, %273, %cst_76 [1] : vector<16x32xf32> to vector<16xf32>
    %277 = vector.shape_cast %276 : vector<16xf32> to vector<16x1xf32>
    %cst_77 = arith.constant 3.200000e+01 : f32
    %278 = vector.broadcast %cst_77 : f32 to vector<16x1xf32>
    %279 = arith.divf %277, %278 : vector<16x1xf32>
    %280 = vector.broadcast %279 : vector<16x1xf32> to vector<16x32xf32>
    %281 = arith.subf %273, %280 : vector<16x32xf32>
    %282 = arith.mulf %281, %281 : vector<16x32xf32>
    %cst_78 = arith.constant dense<0.000000e+00> : vector<16xf32>
    %283 = vector.multi_reduction <add>, %282, %cst_78 [1] : vector<16x32xf32> to vector<16xf32>
    %284 = vector.shape_cast %283 : vector<16xf32> to vector<16x1xf32>
    %cst_79 = arith.constant 3.200000e+01 : f32
    %285 = vector.broadcast %cst_79 : f32 to vector<16x1xf32>
    %286 = arith.divf %284, %285 : vector<16x1xf32>
    %287 = vector.broadcast %279 : vector<16x1xf32> to vector<16x32xf32>
    %288 = arith.subf %273, %287 : vector<16x32xf32>
    %cst_80 = arith.constant 9.99999997E-7 : f32
    %289 = vector.broadcast %cst_80 : f32 to vector<16x1xf32>
    %290 = arith.addf %286, %289 : vector<16x1xf32>
    %291 = math.rsqrt %290 : vector<16x1xf32>
    %292 = vector.broadcast %291 : vector<16x1xf32> to vector<16x32xf32>
    %293 = arith.mulf %288, %292 : vector<16x32xf32>
    %294 = vector.broadcast %274 : vector<1x32xf32> to vector<16x32xf32>
    %295 = arith.mulf %293, %294 : vector<16x32xf32>
    %296 = vector.broadcast %275 : vector<1x32xf32> to vector<16x32xf32>
    %297 = arith.addf %295, %296 : vector<16x32xf32>
    %c0_81 = arith.constant 0 : index
    %c0_82 = arith.constant 0 : index
    %298 = vector.load %arg2[%c0_81, %c0_82] : memref<16x1xi32, #tpu.memory_space<vmem>>, vector<16x1xi32>
    %299 = tpu.iota {dimensions = array<i32: 1>} : vector<16x16xi32>
    %300 = vector.broadcast %298 : vector<16x1xi32> to vector<16x16xi32>
    %301 = arith.cmpi eq, %299, %300 : vector<16x16xi32>
    %302 = arith.extui %301 : vector<16x16xi1> to vector<16x16xi32>
    %303 = arith.sitofp %302 : vector<16x16xi32> to vector<16x16xf32>
    %c848 = arith.constant 848 : index
    %c0_83 = arith.constant 0 : index
    %304 = vector.load %arg8[%c848, %c0_83] : memref<864x128xbf16, #tpu.memory_space<vmem>>, vector<16x32xbf16>
    %305 = arith.truncf %303 : vector<16x16xf32> to vector<16x16xbf16>
    %cst_84 = arith.constant dense<0.000000e+00> : vector<16x32xf32>
    %306 = tpu.matmul %305, %304, %cst_84 {dimension_numbers = #tpu.dot_dimension_numbers<[1], [0], [0], [1], [0, 0, 1, 1], [], []>} : vector<16x16xbf16>, vector<16x32xbf16>, vector<16x32xf32> -> vector<16x32xf32>
    %c0_85 = arith.constant 0 : index
    %c0_86 = arith.constant 0 : index
    %307 = vector.load %arg4[%c0_85, %c0_86] : memref<16x32xf32, #tpu.memory_space<vmem>>, vector<16x32xf32>
    %308 = arith.addf %306, %307 : vector<16x32xf32>
    %c23 = arith.constant 23 : index
    %c0_87 = arith.constant 0 : index
    %309 = vector.load %arg9[%c23, %c0_87] : memref<48x128xf32, #tpu.memory_space<vmem>>, vector<1x32xf32>
    %c24 = arith.constant 24 : index
    %c0_88 = arith.constant 0 : index
    %310 = vector.load %arg9[%c24, %c0_88] : memref<48x128xf32, #tpu.memory_space<vmem>>, vector<1x32xf32>
    %cst_89 = arith.constant dense<0.000000e+00> : vector<16xf32>
    %311 = vector.multi_reduction <add>, %308, %cst_89 [1] : vector<16x32xf32> to vector<16xf32>
    %312 = vector.shape_cast %311 : vector<16xf32> to vector<16x1xf32>
    %cst_90 = arith.constant 3.200000e+01 : f32
    %313 = vector.broadcast %cst_90 : f32 to vector<16x1xf32>
    %314 = arith.divf %312, %313 : vector<16x1xf32>
    %315 = vector.broadcast %314 : vector<16x1xf32> to vector<16x32xf32>
    %316 = arith.subf %308, %315 : vector<16x32xf32>
    %317 = arith.mulf %316, %316 : vector<16x32xf32>
    %cst_91 = arith.constant dense<0.000000e+00> : vector<16xf32>
    %318 = vector.multi_reduction <add>, %317, %cst_91 [1] : vector<16x32xf32> to vector<16xf32>
    %319 = vector.shape_cast %318 : vector<16xf32> to vector<16x1xf32>
    %cst_92 = arith.constant 3.200000e+01 : f32
    %320 = vector.broadcast %cst_92 : f32 to vector<16x1xf32>
    %321 = arith.divf %319, %320 : vector<16x1xf32>
    %322 = vector.broadcast %314 : vector<16x1xf32> to vector<16x32xf32>
    %323 = arith.subf %308, %322 : vector<16x32xf32>
    %cst_93 = arith.constant 9.99999997E-7 : f32
    %324 = vector.broadcast %cst_93 : f32 to vector<16x1xf32>
    %325 = arith.addf %321, %324 : vector<16x1xf32>
    %326 = math.rsqrt %325 : vector<16x1xf32>
    %327 = vector.broadcast %326 : vector<16x1xf32> to vector<16x32xf32>
    %328 = arith.mulf %323, %327 : vector<16x32xf32>
    %329 = vector.broadcast %309 : vector<1x32xf32> to vector<16x32xf32>
    %330 = arith.mulf %328, %329 : vector<16x32xf32>
    %331 = vector.broadcast %310 : vector<1x32xf32> to vector<16x32xf32>
    %332 = arith.addf %330, %331 : vector<16x32xf32>
    %c320 = arith.constant 320 : index
    %c0_94 = arith.constant 0 : index
    %333 = vector.load %arg8[%c320, %c0_94] : memref<864x128xbf16, #tpu.memory_space<vmem>>, vector<32x96xbf16>
    %334 = arith.truncf %332 : vector<16x32xf32> to vector<16x32xbf16>
    %cst_95 = arith.constant dense<0.000000e+00> : vector<16x96xf32>
    %335 = tpu.matmul %334, %333, %cst_95 {dimension_numbers = #tpu.dot_dimension_numbers<[1], [0], [0], [1], [0, 0, 1, 1], [], []>} : vector<16x32xbf16>, vector<32x96xbf16>, vector<16x96xf32> -> vector<16x96xf32>
    %c16 = arith.constant 16 : index
    %c0_96 = arith.constant 0 : index
    %336 = vector.load %arg9[%c16, %c0_96] : memref<48x128xf32, #tpu.memory_space<vmem>>, vector<1x96xf32>
    %337 = vector.broadcast %336 : vector<1x96xf32> to vector<16x96xf32>
    %338 = arith.addf %335, %337 : vector<16x96xf32>
    %339 = vector.extract_strided_slice %338 {offsets = [0, 0], sizes = [16, 32], strides = [1, 1]} : vector<16x96xf32> to vector<16x32xf32>
    %340 = vector.extract_strided_slice %338 {offsets = [0, 32], sizes = [16, 32], strides = [1, 1]} : vector<16x96xf32> to vector<16x32xf32>
    %341 = vector.extract_strided_slice %338 {offsets = [0, 64], sizes = [16, 32], strides = [1, 1]} : vector<16x96xf32> to vector<16x32xf32>
    %c352 = arith.constant 352 : index
    %c0_97 = arith.constant 0 : index
    %342 = vector.load %arg8[%c352, %c0_97] : memref<864x128xbf16, #tpu.memory_space<vmem>>, vector<32x32xbf16>
    %c17 = arith.constant 17 : index
    %c0_98 = arith.constant 0 : index
    %343 = vector.load %arg9[%c17, %c0_98] : memref<48x128xf32, #tpu.memory_space<vmem>>, vector<1x32xf32>
    %344 = vector.extract_strided_slice %339 {offsets = [0, 0], sizes = [16, 8], strides = [1, 1]} : vector<16x32xf32> to vector<16x8xf32>
    %345 = vector.extract_strided_slice %339 {offsets = [0, 8], sizes = [16, 8], strides = [1, 1]} : vector<16x32xf32> to vector<16x8xf32>
    %346 = vector.extract_strided_slice %339 {offsets = [0, 16], sizes = [16, 8], strides = [1, 1]} : vector<16x32xf32> to vector<16x8xf32>
    %347 = vector.extract_strided_slice %339 {offsets = [0, 24], sizes = [16, 8], strides = [1, 1]} : vector<16x32xf32> to vector<16x8xf32>
    %348 = vector.shape_cast %344 : vector<16x8xf32> to vector<1x16x8xf32>
    %349 = vector.shape_cast %345 : vector<16x8xf32> to vector<1x16x8xf32>
    %350 = vector.shape_cast %346 : vector<16x8xf32> to vector<1x16x8xf32>
    %351 = vector.shape_cast %347 : vector<16x8xf32> to vector<1x16x8xf32>
    %352 = tpu.concatenate %348, %349, %350, %351 in 0 : vector<1x16x8xf32>, vector<1x16x8xf32>, vector<1x16x8xf32>, vector<1x16x8xf32> -> vector<4x16x8xf32>
    %353 = vector.extract_strided_slice %340 {offsets = [0, 0], sizes = [16, 8], strides = [1, 1]} : vector<16x32xf32> to vector<16x8xf32>
    %354 = vector.extract_strided_slice %340 {offsets = [0, 8], sizes = [16, 8], strides = [1, 1]} : vector<16x32xf32> to vector<16x8xf32>
    %355 = vector.extract_strided_slice %340 {offsets = [0, 16], sizes = [16, 8], strides = [1, 1]} : vector<16x32xf32> to vector<16x8xf32>
    %356 = vector.extract_strided_slice %340 {offsets = [0, 24], sizes = [16, 8], strides = [1, 1]} : vector<16x32xf32> to vector<16x8xf32>
    %357 = vector.shape_cast %353 : vector<16x8xf32> to vector<1x16x8xf32>
    %358 = vector.shape_cast %354 : vector<16x8xf32> to vector<1x16x8xf32>
    %359 = vector.shape_cast %355 : vector<16x8xf32> to vector<1x16x8xf32>
    %360 = vector.shape_cast %356 : vector<16x8xf32> to vector<1x16x8xf32>
    %361 = tpu.concatenate %357, %358, %359, %360 in 0 : vector<1x16x8xf32>, vector<1x16x8xf32>, vector<1x16x8xf32>, vector<1x16x8xf32> -> vector<4x16x8xf32>
    %362 = vector.extract_strided_slice %341 {offsets = [0, 0], sizes = [16, 8], strides = [1, 1]} : vector<16x32xf32> to vector<16x8xf32>
    %363 = vector.extract_strided_slice %341 {offsets = [0, 8], sizes = [16, 8], strides = [1, 1]} : vector<16x32xf32> to vector<16x8xf32>
    %364 = vector.extract_strided_slice %341 {offsets = [0, 16], sizes = [16, 8], strides = [1, 1]} : vector<16x32xf32> to vector<16x8xf32>
    %365 = vector.extract_strided_slice %341 {offsets = [0, 24], sizes = [16, 8], strides = [1, 1]} : vector<16x32xf32> to vector<16x8xf32>
    %366 = vector.shape_cast %362 : vector<16x8xf32> to vector<1x16x8xf32>
    %367 = vector.shape_cast %363 : vector<16x8xf32> to vector<1x16x8xf32>
    %368 = vector.shape_cast %364 : vector<16x8xf32> to vector<1x16x8xf32>
    %369 = vector.shape_cast %365 : vector<16x8xf32> to vector<1x16x8xf32>
    %370 = tpu.concatenate %366, %367, %368, %369 in 0 : vector<1x16x8xf32>, vector<1x16x8xf32>, vector<1x16x8xf32>, vector<1x16x8xf32> -> vector<4x16x8xf32>
    "tpu.trace_start"() <{level = 10 : i32, message = "hqd,hkd->hqk"}> : () -> ()
    %cst_99 = arith.constant dense<0.000000e+00> : vector<4x16x16xf32>
    %371 = tpu.matmul %352, %361, %cst_99 {dimension_numbers = #tpu.dot_dimension_numbers<[2], [2], [1], [1], [0, 0, 0, 1, 1, 1], [0], [0]>} : vector<4x16x8xf32>, vector<4x16x8xf32>, vector<4x16x16xf32> -> vector<4x16x16xf32>
    "tpu.trace_stop"() : () -> ()
    %372 = vector.shape_cast %1 : vector<16x16xf32> to vector<1x16x16xf32>
    %373 = vector.broadcast %372 : vector<1x16x16xf32> to vector<4x16x16xf32>
    %374 = arith.addf %371, %373 : vector<4x16x16xf32>
    %cst_100 = arith.constant dense<0xFF800000> : vector<4x16xf32>
    %375 = vector.multi_reduction <maximumf>, %374, %cst_100 [2] : vector<4x16x16xf32> to vector<4x16xf32>
    %376 = vector.shape_cast %375 : vector<4x16xf32> to vector<4x16x1xf32>
    %377 = vector.broadcast %376 : vector<4x16x1xf32> to vector<4x16x16xf32>
    %378 = arith.subf %374, %377 : vector<4x16x16xf32>
    %379 = math.exp %378 : vector<4x16x16xf32>
    %cst_101 = arith.constant dense<0.000000e+00> : vector<4x16xf32>
    %380 = vector.multi_reduction <add>, %379, %cst_101 [2] : vector<4x16x16xf32> to vector<4x16xf32>
    %381 = vector.shape_cast %380 : vector<4x16xf32> to vector<4x16x1xf32>
    %382 = tpu.reciprocal %381 {approx = true} : vector<4x16x1xf32> -> vector<4x16x1xf32>
    %383 = vector.broadcast %382 : vector<4x16x1xf32> to vector<4x16x16xf32>
    %384 = arith.mulf %379, %383 : vector<4x16x16xf32>
    "tpu.trace_start"() <{level = 10 : i32, message = "hqk,hkd->hqd"}> : () -> ()
    %cst_102 = arith.constant dense<0.000000e+00> : vector<4x16x8xf32>
    %385 = tpu.matmul %384, %370, %cst_102 {dimension_numbers = #tpu.dot_dimension_numbers<[2], [1], [1], [2], [0, 0, 0, 1, 1, 2], [0], [0]>} : vector<4x16x16xf32>, vector<4x16x8xf32>, vector<4x16x8xf32> -> vector<4x16x8xf32>
    "tpu.trace_stop"() : () -> ()
    %386 = vector.extract_strided_slice %385 {offsets = [0, 0, 0], sizes = [1, 16, 8], strides = [1, 1, 1]} : vector<4x16x8xf32> to vector<1x16x8xf32>
    %387 = vector.shape_cast %386 : vector<1x16x8xf32> to vector<16x8xf32>
    %388 = vector.extract_strided_slice %385 {offsets = [1, 0, 0], sizes = [1, 16, 8], strides = [1, 1, 1]} : vector<4x16x8xf32> to vector<1x16x8xf32>
    %389 = vector.shape_cast %388 : vector<1x16x8xf32> to vector<16x8xf32>
    %390 = vector.extract_strided_slice %385 {offsets = [2, 0, 0], sizes = [1, 16, 8], strides = [1, 1, 1]} : vector<4x16x8xf32> to vector<1x16x8xf32>
    %391 = vector.shape_cast %390 : vector<1x16x8xf32> to vector<16x8xf32>
    %392 = vector.extract_strided_slice %385 {offsets = [3, 0, 0], sizes = [1, 16, 8], strides = [1, 1, 1]} : vector<4x16x8xf32> to vector<1x16x8xf32>
    %393 = vector.shape_cast %392 : vector<1x16x8xf32> to vector<16x8xf32>
    %394 = tpu.concatenate %387, %389, %391, %393 in 1 : vector<16x8xf32>, vector<16x8xf32>, vector<16x8xf32>, vector<16x8xf32> -> vector<16x32xf32>
    %395 = arith.truncf %394 : vector<16x32xf32> to vector<16x32xbf16>
    %cst_103 = arith.constant dense<0.000000e+00> : vector<16x32xf32>
    %396 = tpu.matmul %395, %342, %cst_103 {dimension_numbers = #tpu.dot_dimension_numbers<[1], [0], [0], [1], [0, 0, 1, 1], [], []>} : vector<16x32xbf16>, vector<32x32xbf16>, vector<16x32xf32> -> vector<16x32xf32>
    %397 = vector.broadcast %343 : vector<1x32xf32> to vector<16x32xf32>
    %398 = arith.addf %396, %397 : vector<16x32xf32>
    %399 = arith.addf %308, %398 : vector<16x32xf32>
    %c25 = arith.constant 25 : index
    %c0_104 = arith.constant 0 : index
    %400 = vector.load %arg9[%c25, %c0_104] : memref<48x128xf32, #tpu.memory_space<vmem>>, vector<1x32xf32>
    %c26 = arith.constant 26 : index
    %c0_105 = arith.constant 0 : index
    %401 = vector.load %arg9[%c26, %c0_105] : memref<48x128xf32, #tpu.memory_space<vmem>>, vector<1x32xf32>
    %cst_106 = arith.constant dense<0.000000e+00> : vector<16xf32>
    %402 = vector.multi_reduction <add>, %399, %cst_106 [1] : vector<16x32xf32> to vector<16xf32>
    %403 = vector.shape_cast %402 : vector<16xf32> to vector<16x1xf32>
    %cst_107 = arith.constant 3.200000e+01 : f32
    %404 = vector.broadcast %cst_107 : f32 to vector<16x1xf32>
    %405 = arith.divf %403, %404 : vector<16x1xf32>
    %406 = vector.broadcast %405 : vector<16x1xf32> to vector<16x32xf32>
    %407 = arith.subf %399, %406 : vector<16x32xf32>
    %408 = arith.mulf %407, %407 : vector<16x32xf32>
    %cst_108 = arith.constant dense<0.000000e+00> : vector<16xf32>
    %409 = vector.multi_reduction <add>, %408, %cst_108 [1] : vector<16x32xf32> to vector<16xf32>
    %410 = vector.shape_cast %409 : vector<16xf32> to vector<16x1xf32>
    %cst_109 = arith.constant 3.200000e+01 : f32
    %411 = vector.broadcast %cst_109 : f32 to vector<16x1xf32>
    %412 = arith.divf %410, %411 : vector<16x1xf32>
    %413 = vector.broadcast %405 : vector<16x1xf32> to vector<16x32xf32>
    %414 = arith.subf %399, %413 : vector<16x32xf32>
    %cst_110 = arith.constant 9.99999997E-7 : f32
    %415 = vector.broadcast %cst_110 : f32 to vector<16x1xf32>
    %416 = arith.addf %412, %415 : vector<16x1xf32>
    %417 = math.rsqrt %416 : vector<16x1xf32>
    %418 = vector.broadcast %417 : vector<16x1xf32> to vector<16x32xf32>
    %419 = arith.mulf %414, %418 : vector<16x32xf32>
    %420 = vector.broadcast %400 : vector<1x32xf32> to vector<16x32xf32>
    %421 = arith.mulf %419, %420 : vector<16x32xf32>
    %422 = vector.broadcast %401 : vector<1x32xf32> to vector<16x32xf32>
    %423 = arith.addf %421, %422 : vector<16x32xf32>
    %c384 = arith.constant 384 : index
    %c0_111 = arith.constant 0 : index
    %424 = vector.load %arg8[%c384, %c0_111] : memref<864x128xbf16, #tpu.memory_space<vmem>>, vector<32x32xbf16>
    %425 = arith.truncf %423 : vector<16x32xf32> to vector<16x32xbf16>
    %cst_112 = arith.constant dense<0.000000e+00> : vector<16x32xf32>
    %426 = tpu.matmul %425, %424, %cst_112 {dimension_numbers = #tpu.dot_dimension_numbers<[1], [0], [0], [1], [0, 0, 1, 1], [], []>} : vector<16x32xbf16>, vector<32x32xbf16>, vector<16x32xf32> -> vector<16x32xf32>
    %c18 = arith.constant 18 : index
    %c0_113 = arith.constant 0 : index
    %427 = vector.load %arg9[%c18, %c0_113] : memref<48x128xf32, #tpu.memory_space<vmem>>, vector<1x32xf32>
    %428 = vector.broadcast %427 : vector<1x32xf32> to vector<16x32xf32>
    %429 = arith.addf %426, %428 : vector<16x32xf32>
    %c416 = arith.constant 416 : index
    %c0_114 = arith.constant 0 : index
    %430 = vector.load %arg8[%c416, %c0_114] : memref<864x128xbf16, #tpu.memory_space<vmem>>, vector<32x64xbf16>
    %431 = arith.truncf %297 : vector<16x32xf32> to vector<16x32xbf16>
    %cst_115 = arith.constant dense<0.000000e+00> : vector<16x64xf32>
    %432 = tpu.matmul %431, %430, %cst_115 {dimension_numbers = #tpu.dot_dimension_numbers<[1], [0], [0], [1], [0, 0, 1, 1], [], []>} : vector<16x32xbf16>, vector<32x64xbf16>, vector<16x64xf32> -> vector<16x64xf32>
    %c19 = arith.constant 19 : index
    %c0_116 = arith.constant 0 : index
    %433 = vector.load %arg9[%c19, %c0_116] : memref<48x128xf32, #tpu.memory_space<vmem>>, vector<1x64xf32>
    %434 = vector.broadcast %433 : vector<1x64xf32> to vector<16x64xf32>
    %435 = arith.addf %432, %434 : vector<16x64xf32>
    %436 = vector.extract_strided_slice %435 {offsets = [0, 0], sizes = [16, 32], strides = [1, 1]} : vector<16x64xf32> to vector<16x32xf32>
    %437 = vector.extract_strided_slice %435 {offsets = [0, 32], sizes = [16, 32], strides = [1, 1]} : vector<16x64xf32> to vector<16x32xf32>
    %c448 = arith.constant 448 : index
    %c0_117 = arith.constant 0 : index
    %438 = vector.load %arg8[%c448, %c0_117] : memref<864x128xbf16, #tpu.memory_space<vmem>>, vector<32x32xbf16>
    %c20 = arith.constant 20 : index
    %c0_118 = arith.constant 0 : index
    %439 = vector.load %arg9[%c20, %c0_118] : memref<48x128xf32, #tpu.memory_space<vmem>>, vector<1x32xf32>
    %440 = vector.extract_strided_slice %429 {offsets = [0, 0], sizes = [16, 8], strides = [1, 1]} : vector<16x32xf32> to vector<16x8xf32>
    %441 = vector.extract_strided_slice %429 {offsets = [0, 8], sizes = [16, 8], strides = [1, 1]} : vector<16x32xf32> to vector<16x8xf32>
    %442 = vector.extract_strided_slice %429 {offsets = [0, 16], sizes = [16, 8], strides = [1, 1]} : vector<16x32xf32> to vector<16x8xf32>
    %443 = vector.extract_strided_slice %429 {offsets = [0, 24], sizes = [16, 8], strides = [1, 1]} : vector<16x32xf32> to vector<16x8xf32>
    %444 = vector.shape_cast %440 : vector<16x8xf32> to vector<1x16x8xf32>
    %445 = vector.shape_cast %441 : vector<16x8xf32> to vector<1x16x8xf32>
    %446 = vector.shape_cast %442 : vector<16x8xf32> to vector<1x16x8xf32>
    %447 = vector.shape_cast %443 : vector<16x8xf32> to vector<1x16x8xf32>
    %448 = tpu.concatenate %444, %445, %446, %447 in 0 : vector<1x16x8xf32>, vector<1x16x8xf32>, vector<1x16x8xf32>, vector<1x16x8xf32> -> vector<4x16x8xf32>
    %449 = vector.extract_strided_slice %436 {offsets = [0, 0], sizes = [16, 8], strides = [1, 1]} : vector<16x32xf32> to vector<16x8xf32>
    %450 = vector.extract_strided_slice %436 {offsets = [0, 8], sizes = [16, 8], strides = [1, 1]} : vector<16x32xf32> to vector<16x8xf32>
    %451 = vector.extract_strided_slice %436 {offsets = [0, 16], sizes = [16, 8], strides = [1, 1]} : vector<16x32xf32> to vector<16x8xf32>
    %452 = vector.extract_strided_slice %436 {offsets = [0, 24], sizes = [16, 8], strides = [1, 1]} : vector<16x32xf32> to vector<16x8xf32>
    %453 = vector.shape_cast %449 : vector<16x8xf32> to vector<1x16x8xf32>
    %454 = vector.shape_cast %450 : vector<16x8xf32> to vector<1x16x8xf32>
    %455 = vector.shape_cast %451 : vector<16x8xf32> to vector<1x16x8xf32>
    %456 = vector.shape_cast %452 : vector<16x8xf32> to vector<1x16x8xf32>
    %457 = tpu.concatenate %453, %454, %455, %456 in 0 : vector<1x16x8xf32>, vector<1x16x8xf32>, vector<1x16x8xf32>, vector<1x16x8xf32> -> vector<4x16x8xf32>
    %458 = vector.extract_strided_slice %437 {offsets = [0, 0], sizes = [16, 8], strides = [1, 1]} : vector<16x32xf32> to vector<16x8xf32>
    %459 = vector.extract_strided_slice %437 {offsets = [0, 8], sizes = [16, 8], strides = [1, 1]} : vector<16x32xf32> to vector<16x8xf32>
    %460 = vector.extract_strided_slice %437 {offsets = [0, 16], sizes = [16, 8], strides = [1, 1]} : vector<16x32xf32> to vector<16x8xf32>
    %461 = vector.extract_strided_slice %437 {offsets = [0, 24], sizes = [16, 8], strides = [1, 1]} : vector<16x32xf32> to vector<16x8xf32>
    %462 = vector.shape_cast %458 : vector<16x8xf32> to vector<1x16x8xf32>
    %463 = vector.shape_cast %459 : vector<16x8xf32> to vector<1x16x8xf32>
    %464 = vector.shape_cast %460 : vector<16x8xf32> to vector<1x16x8xf32>
    %465 = vector.shape_cast %461 : vector<16x8xf32> to vector<1x16x8xf32>
    %466 = tpu.concatenate %462, %463, %464, %465 in 0 : vector<1x16x8xf32>, vector<1x16x8xf32>, vector<1x16x8xf32>, vector<1x16x8xf32> -> vector<4x16x8xf32>
    "tpu.trace_start"() <{level = 10 : i32, message = "hqd,hkd->hqk"}> : () -> ()
    %cst_119 = arith.constant dense<0.000000e+00> : vector<4x16x16xf32>
    %467 = tpu.matmul %448, %457, %cst_119 {dimension_numbers = #tpu.dot_dimension_numbers<[2], [2], [1], [1], [0, 0, 0, 1, 1, 1], [0], [0]>} : vector<4x16x8xf32>, vector<4x16x8xf32>, vector<4x16x16xf32> -> vector<4x16x16xf32>
    "tpu.trace_stop"() : () -> ()
    %468 = vector.shape_cast %2 : vector<16x16xf32> to vector<1x16x16xf32>
    %469 = vector.broadcast %468 : vector<1x16x16xf32> to vector<4x16x16xf32>
    %470 = arith.addf %467, %469 : vector<4x16x16xf32>
    %cst_120 = arith.constant dense<0xFF800000> : vector<4x16xf32>
    %471 = vector.multi_reduction <maximumf>, %470, %cst_120 [2] : vector<4x16x16xf32> to vector<4x16xf32>
    %472 = vector.shape_cast %471 : vector<4x16xf32> to vector<4x16x1xf32>
    %473 = vector.broadcast %472 : vector<4x16x1xf32> to vector<4x16x16xf32>
    %474 = arith.subf %470, %473 : vector<4x16x16xf32>
    %475 = math.exp %474 : vector<4x16x16xf32>
    %cst_121 = arith.constant dense<0.000000e+00> : vector<4x16xf32>
    %476 = vector.multi_reduction <add>, %475, %cst_121 [2] : vector<4x16x16xf32> to vector<4x16xf32>
    %477 = vector.shape_cast %476 : vector<4x16xf32> to vector<4x16x1xf32>
    %478 = tpu.reciprocal %477 {approx = true} : vector<4x16x1xf32> -> vector<4x16x1xf32>
    %479 = vector.broadcast %478 : vector<4x16x1xf32> to vector<4x16x16xf32>
    %480 = arith.mulf %475, %479 : vector<4x16x16xf32>
    "tpu.trace_start"() <{level = 10 : i32, message = "hqk,hkd->hqd"}> : () -> ()
    %cst_122 = arith.constant dense<0.000000e+00> : vector<4x16x8xf32>
    %481 = tpu.matmul %480, %466, %cst_122 {dimension_numbers = #tpu.dot_dimension_numbers<[2], [1], [1], [2], [0, 0, 0, 1, 1, 2], [0], [0]>} : vector<4x16x16xf32>, vector<4x16x8xf32>, vector<4x16x8xf32> -> vector<4x16x8xf32>
    "tpu.trace_stop"() : () -> ()
    %482 = vector.extract_strided_slice %481 {offsets = [0, 0, 0], sizes = [1, 16, 8], strides = [1, 1, 1]} : vector<4x16x8xf32> to vector<1x16x8xf32>
    %483 = vector.shape_cast %482 : vector<1x16x8xf32> to vector<16x8xf32>
    %484 = vector.extract_strided_slice %481 {offsets = [1, 0, 0], sizes = [1, 16, 8], strides = [1, 1, 1]} : vector<4x16x8xf32> to vector<1x16x8xf32>
    %485 = vector.shape_cast %484 : vector<1x16x8xf32> to vector<16x8xf32>
    %486 = vector.extract_strided_slice %481 {offsets = [2, 0, 0], sizes = [1, 16, 8], strides = [1, 1, 1]} : vector<4x16x8xf32> to vector<1x16x8xf32>
    %487 = vector.shape_cast %486 : vector<1x16x8xf32> to vector<16x8xf32>
    %488 = vector.extract_strided_slice %481 {offsets = [3, 0, 0], sizes = [1, 16, 8], strides = [1, 1, 1]} : vector<4x16x8xf32> to vector<1x16x8xf32>
    %489 = vector.shape_cast %488 : vector<1x16x8xf32> to vector<16x8xf32>
    %490 = tpu.concatenate %483, %485, %487, %489 in 1 : vector<16x8xf32>, vector<16x8xf32>, vector<16x8xf32>, vector<16x8xf32> -> vector<16x32xf32>
    %491 = arith.truncf %490 : vector<16x32xf32> to vector<16x32xbf16>
    %cst_123 = arith.constant dense<0.000000e+00> : vector<16x32xf32>
    %492 = tpu.matmul %491, %438, %cst_123 {dimension_numbers = #tpu.dot_dimension_numbers<[1], [0], [0], [1], [0, 0, 1, 1], [], []>} : vector<16x32xbf16>, vector<32x32xbf16>, vector<16x32xf32> -> vector<16x32xf32>
    %493 = vector.broadcast %439 : vector<1x32xf32> to vector<16x32xf32>
    %494 = arith.addf %492, %493 : vector<16x32xf32>
    %495 = arith.addf %399, %494 : vector<16x32xf32>
    %c27 = arith.constant 27 : index
    %c0_124 = arith.constant 0 : index
    %496 = vector.load %arg9[%c27, %c0_124] : memref<48x128xf32, #tpu.memory_space<vmem>>, vector<1x32xf32>
    %c28 = arith.constant 28 : index
    %c0_125 = arith.constant 0 : index
    %497 = vector.load %arg9[%c28, %c0_125] : memref<48x128xf32, #tpu.memory_space<vmem>>, vector<1x32xf32>
    %cst_126 = arith.constant dense<0.000000e+00> : vector<16xf32>
    %498 = vector.multi_reduction <add>, %495, %cst_126 [1] : vector<16x32xf32> to vector<16xf32>
    %499 = vector.shape_cast %498 : vector<16xf32> to vector<16x1xf32>
    %cst_127 = arith.constant 3.200000e+01 : f32
    %500 = vector.broadcast %cst_127 : f32 to vector<16x1xf32>
    %501 = arith.divf %499, %500 : vector<16x1xf32>
    %502 = vector.broadcast %501 : vector<16x1xf32> to vector<16x32xf32>
    %503 = arith.subf %495, %502 : vector<16x32xf32>
    %504 = arith.mulf %503, %503 : vector<16x32xf32>
    %cst_128 = arith.constant dense<0.000000e+00> : vector<16xf32>
    %505 = vector.multi_reduction <add>, %504, %cst_128 [1] : vector<16x32xf32> to vector<16xf32>
    %506 = vector.shape_cast %505 : vector<16xf32> to vector<16x1xf32>
    %cst_129 = arith.constant 3.200000e+01 : f32
    %507 = vector.broadcast %cst_129 : f32 to vector<16x1xf32>
    %508 = arith.divf %506, %507 : vector<16x1xf32>
    %509 = vector.broadcast %501 : vector<16x1xf32> to vector<16x32xf32>
    %510 = arith.subf %495, %509 : vector<16x32xf32>
    %cst_130 = arith.constant 9.99999997E-7 : f32
    %511 = vector.broadcast %cst_130 : f32 to vector<16x1xf32>
    %512 = arith.addf %508, %511 : vector<16x1xf32>
    %513 = math.rsqrt %512 : vector<16x1xf32>
    %514 = vector.broadcast %513 : vector<16x1xf32> to vector<16x32xf32>
    %515 = arith.mulf %510, %514 : vector<16x32xf32>
    %516 = vector.broadcast %496 : vector<1x32xf32> to vector<16x32xf32>
    %517 = arith.mulf %515, %516 : vector<16x32xf32>
    %518 = vector.broadcast %497 : vector<1x32xf32> to vector<16x32xf32>
    %519 = arith.addf %517, %518 : vector<16x32xf32>
    %c480 = arith.constant 480 : index
    %c0_131 = arith.constant 0 : index
    %520 = vector.load %arg8[%c480, %c0_131] : memref<864x128xbf16, #tpu.memory_space<vmem>>, vector<32x64xbf16>
    %521 = arith.truncf %519 : vector<16x32xf32> to vector<16x32xbf16>
    %cst_132 = arith.constant dense<0.000000e+00> : vector<16x64xf32>
    %522 = tpu.matmul %521, %520, %cst_132 {dimension_numbers = #tpu.dot_dimension_numbers<[1], [0], [0], [1], [0, 0, 1, 1], [], []>} : vector<16x32xbf16>, vector<32x64xbf16>, vector<16x64xf32> -> vector<16x64xf32>
    %c21 = arith.constant 21 : index
    %c0_133 = arith.constant 0 : index
    %523 = vector.load %arg9[%c21, %c0_133] : memref<48x128xf32, #tpu.memory_space<vmem>>, vector<1x64xf32>
    %524 = vector.broadcast %523 : vector<1x64xf32> to vector<16x64xf32>
    %525 = arith.addf %522, %524 : vector<16x64xf32>
    %cst_134 = arith.constant 0.000000e+00 : f32
    %526 = vector.broadcast %cst_134 : f32 to vector<16x64xf32>
    %527 = arith.maximumf %525, %526 : vector<16x64xf32>
    %c512 = arith.constant 512 : index
    %c0_135 = arith.constant 0 : index
    %528 = vector.load %arg8[%c512, %c0_135] : memref<864x128xbf16, #tpu.memory_space<vmem>>, vector<64x32xbf16>
    %529 = arith.truncf %527 : vector<16x64xf32> to vector<16x64xbf16>
    %cst_136 = arith.constant dense<0.000000e+00> : vector<16x32xf32>
    %530 = tpu.matmul %529, %528, %cst_136 {dimension_numbers = #tpu.dot_dimension_numbers<[1], [0], [0], [1], [0, 0, 1, 1], [], []>} : vector<16x64xbf16>, vector<64x32xbf16>, vector<16x32xf32> -> vector<16x32xf32>
    %531 = arith.addf %495, %530 : vector<16x32xf32>
    %c22 = arith.constant 22 : index
    %c0_137 = arith.constant 0 : index
    %532 = vector.load %arg9[%c22, %c0_137] : memref<48x128xf32, #tpu.memory_space<vmem>>, vector<1x32xf32>
    %533 = vector.broadcast %532 : vector<1x32xf32> to vector<16x32xf32>
    %534 = arith.addf %531, %533 : vector<16x32xf32>
    %c36 = arith.constant 36 : index
    %c0_138 = arith.constant 0 : index
    %535 = vector.load %arg9[%c36, %c0_138] : memref<48x128xf32, #tpu.memory_space<vmem>>, vector<1x32xf32>
    %c37 = arith.constant 37 : index
    %c0_139 = arith.constant 0 : index
    %536 = vector.load %arg9[%c37, %c0_139] : memref<48x128xf32, #tpu.memory_space<vmem>>, vector<1x32xf32>
    %cst_140 = arith.constant dense<0.000000e+00> : vector<16xf32>
    %537 = vector.multi_reduction <add>, %534, %cst_140 [1] : vector<16x32xf32> to vector<16xf32>
    %538 = vector.shape_cast %537 : vector<16xf32> to vector<16x1xf32>
    %cst_141 = arith.constant 3.200000e+01 : f32
    %539 = vector.broadcast %cst_141 : f32 to vector<16x1xf32>
    %540 = arith.divf %538, %539 : vector<16x1xf32>
    %541 = vector.broadcast %540 : vector<16x1xf32> to vector<16x32xf32>
    %542 = arith.subf %534, %541 : vector<16x32xf32>
    %543 = arith.mulf %542, %542 : vector<16x32xf32>
    %cst_142 = arith.constant dense<0.000000e+00> : vector<16xf32>
    %544 = vector.multi_reduction <add>, %543, %cst_142 [1] : vector<16x32xf32> to vector<16xf32>
    %545 = vector.shape_cast %544 : vector<16xf32> to vector<16x1xf32>
    %cst_143 = arith.constant 3.200000e+01 : f32
    %546 = vector.broadcast %cst_143 : f32 to vector<16x1xf32>
    %547 = arith.divf %545, %546 : vector<16x1xf32>
    %548 = vector.broadcast %540 : vector<16x1xf32> to vector<16x32xf32>
    %549 = arith.subf %534, %548 : vector<16x32xf32>
    %cst_144 = arith.constant 9.99999997E-7 : f32
    %550 = vector.broadcast %cst_144 : f32 to vector<16x1xf32>
    %551 = arith.addf %547, %550 : vector<16x1xf32>
    %552 = math.rsqrt %551 : vector<16x1xf32>
    %553 = vector.broadcast %552 : vector<16x1xf32> to vector<16x32xf32>
    %554 = arith.mulf %549, %553 : vector<16x32xf32>
    %555 = vector.broadcast %535 : vector<1x32xf32> to vector<16x32xf32>
    %556 = arith.mulf %554, %555 : vector<16x32xf32>
    %557 = vector.broadcast %536 : vector<1x32xf32> to vector<16x32xf32>
    %558 = arith.addf %556, %557 : vector<16x32xf32>
    %c576 = arith.constant 576 : index
    %c0_145 = arith.constant 0 : index
    %559 = vector.load %arg8[%c576, %c0_145] : memref<864x128xbf16, #tpu.memory_space<vmem>>, vector<32x96xbf16>
    %560 = arith.truncf %558 : vector<16x32xf32> to vector<16x32xbf16>
    %cst_146 = arith.constant dense<0.000000e+00> : vector<16x96xf32>
    %561 = tpu.matmul %560, %559, %cst_146 {dimension_numbers = #tpu.dot_dimension_numbers<[1], [0], [0], [1], [0, 0, 1, 1], [], []>} : vector<16x32xbf16>, vector<32x96xbf16>, vector<16x96xf32> -> vector<16x96xf32>
    %c29 = arith.constant 29 : index
    %c0_147 = arith.constant 0 : index
    %562 = vector.load %arg9[%c29, %c0_147] : memref<48x128xf32, #tpu.memory_space<vmem>>, vector<1x96xf32>
    %563 = vector.broadcast %562 : vector<1x96xf32> to vector<16x96xf32>
    %564 = arith.addf %561, %563 : vector<16x96xf32>
    %565 = vector.extract_strided_slice %564 {offsets = [0, 0], sizes = [16, 32], strides = [1, 1]} : vector<16x96xf32> to vector<16x32xf32>
    %566 = vector.extract_strided_slice %564 {offsets = [0, 32], sizes = [16, 32], strides = [1, 1]} : vector<16x96xf32> to vector<16x32xf32>
    %567 = vector.extract_strided_slice %564 {offsets = [0, 64], sizes = [16, 32], strides = [1, 1]} : vector<16x96xf32> to vector<16x32xf32>
    %c608 = arith.constant 608 : index
    %c0_148 = arith.constant 0 : index
    %568 = vector.load %arg8[%c608, %c0_148] : memref<864x128xbf16, #tpu.memory_space<vmem>>, vector<32x32xbf16>
    %c30 = arith.constant 30 : index
    %c0_149 = arith.constant 0 : index
    %569 = vector.load %arg9[%c30, %c0_149] : memref<48x128xf32, #tpu.memory_space<vmem>>, vector<1x32xf32>
    %570 = vector.extract_strided_slice %565 {offsets = [0, 0], sizes = [16, 8], strides = [1, 1]} : vector<16x32xf32> to vector<16x8xf32>
    %571 = vector.extract_strided_slice %565 {offsets = [0, 8], sizes = [16, 8], strides = [1, 1]} : vector<16x32xf32> to vector<16x8xf32>
    %572 = vector.extract_strided_slice %565 {offsets = [0, 16], sizes = [16, 8], strides = [1, 1]} : vector<16x32xf32> to vector<16x8xf32>
    %573 = vector.extract_strided_slice %565 {offsets = [0, 24], sizes = [16, 8], strides = [1, 1]} : vector<16x32xf32> to vector<16x8xf32>
    %574 = vector.shape_cast %570 : vector<16x8xf32> to vector<1x16x8xf32>
    %575 = vector.shape_cast %571 : vector<16x8xf32> to vector<1x16x8xf32>
    %576 = vector.shape_cast %572 : vector<16x8xf32> to vector<1x16x8xf32>
    %577 = vector.shape_cast %573 : vector<16x8xf32> to vector<1x16x8xf32>
    %578 = tpu.concatenate %574, %575, %576, %577 in 0 : vector<1x16x8xf32>, vector<1x16x8xf32>, vector<1x16x8xf32>, vector<1x16x8xf32> -> vector<4x16x8xf32>
    %579 = vector.extract_strided_slice %566 {offsets = [0, 0], sizes = [16, 8], strides = [1, 1]} : vector<16x32xf32> to vector<16x8xf32>
    %580 = vector.extract_strided_slice %566 {offsets = [0, 8], sizes = [16, 8], strides = [1, 1]} : vector<16x32xf32> to vector<16x8xf32>
    %581 = vector.extract_strided_slice %566 {offsets = [0, 16], sizes = [16, 8], strides = [1, 1]} : vector<16x32xf32> to vector<16x8xf32>
    %582 = vector.extract_strided_slice %566 {offsets = [0, 24], sizes = [16, 8], strides = [1, 1]} : vector<16x32xf32> to vector<16x8xf32>
    %583 = vector.shape_cast %579 : vector<16x8xf32> to vector<1x16x8xf32>
    %584 = vector.shape_cast %580 : vector<16x8xf32> to vector<1x16x8xf32>
    %585 = vector.shape_cast %581 : vector<16x8xf32> to vector<1x16x8xf32>
    %586 = vector.shape_cast %582 : vector<16x8xf32> to vector<1x16x8xf32>
    %587 = tpu.concatenate %583, %584, %585, %586 in 0 : vector<1x16x8xf32>, vector<1x16x8xf32>, vector<1x16x8xf32>, vector<1x16x8xf32> -> vector<4x16x8xf32>
    %588 = vector.extract_strided_slice %567 {offsets = [0, 0], sizes = [16, 8], strides = [1, 1]} : vector<16x32xf32> to vector<16x8xf32>
    %589 = vector.extract_strided_slice %567 {offsets = [0, 8], sizes = [16, 8], strides = [1, 1]} : vector<16x32xf32> to vector<16x8xf32>
    %590 = vector.extract_strided_slice %567 {offsets = [0, 16], sizes = [16, 8], strides = [1, 1]} : vector<16x32xf32> to vector<16x8xf32>
    %591 = vector.extract_strided_slice %567 {offsets = [0, 24], sizes = [16, 8], strides = [1, 1]} : vector<16x32xf32> to vector<16x8xf32>
    %592 = vector.shape_cast %588 : vector<16x8xf32> to vector<1x16x8xf32>
    %593 = vector.shape_cast %589 : vector<16x8xf32> to vector<1x16x8xf32>
    %594 = vector.shape_cast %590 : vector<16x8xf32> to vector<1x16x8xf32>
    %595 = vector.shape_cast %591 : vector<16x8xf32> to vector<1x16x8xf32>
    %596 = tpu.concatenate %592, %593, %594, %595 in 0 : vector<1x16x8xf32>, vector<1x16x8xf32>, vector<1x16x8xf32>, vector<1x16x8xf32> -> vector<4x16x8xf32>
    "tpu.trace_start"() <{level = 10 : i32, message = "hqd,hkd->hqk"}> : () -> ()
    %cst_150 = arith.constant dense<0.000000e+00> : vector<4x16x16xf32>
    %597 = tpu.matmul %578, %587, %cst_150 {dimension_numbers = #tpu.dot_dimension_numbers<[2], [2], [1], [1], [0, 0, 0, 1, 1, 1], [0], [0]>} : vector<4x16x8xf32>, vector<4x16x8xf32>, vector<4x16x16xf32> -> vector<4x16x16xf32>
    "tpu.trace_stop"() : () -> ()
    %598 = vector.shape_cast %1 : vector<16x16xf32> to vector<1x16x16xf32>
    %599 = vector.broadcast %598 : vector<1x16x16xf32> to vector<4x16x16xf32>
    %600 = arith.addf %597, %599 : vector<4x16x16xf32>
    %cst_151 = arith.constant dense<0xFF800000> : vector<4x16xf32>
    %601 = vector.multi_reduction <maximumf>, %600, %cst_151 [2] : vector<4x16x16xf32> to vector<4x16xf32>
    %602 = vector.shape_cast %601 : vector<4x16xf32> to vector<4x16x1xf32>
    %603 = vector.broadcast %602 : vector<4x16x1xf32> to vector<4x16x16xf32>
    %604 = arith.subf %600, %603 : vector<4x16x16xf32>
    %605 = math.exp %604 : vector<4x16x16xf32>
    %cst_152 = arith.constant dense<0.000000e+00> : vector<4x16xf32>
    %606 = vector.multi_reduction <add>, %605, %cst_152 [2] : vector<4x16x16xf32> to vector<4x16xf32>
    %607 = vector.shape_cast %606 : vector<4x16xf32> to vector<4x16x1xf32>
    %608 = tpu.reciprocal %607 {approx = true} : vector<4x16x1xf32> -> vector<4x16x1xf32>
    %609 = vector.broadcast %608 : vector<4x16x1xf32> to vector<4x16x16xf32>
    %610 = arith.mulf %605, %609 : vector<4x16x16xf32>
    "tpu.trace_start"() <{level = 10 : i32, message = "hqk,hkd->hqd"}> : () -> ()
    %cst_153 = arith.constant dense<0.000000e+00> : vector<4x16x8xf32>
    %611 = tpu.matmul %610, %596, %cst_153 {dimension_numbers = #tpu.dot_dimension_numbers<[2], [1], [1], [2], [0, 0, 0, 1, 1, 2], [0], [0]>} : vector<4x16x16xf32>, vector<4x16x8xf32>, vector<4x16x8xf32> -> vector<4x16x8xf32>
    "tpu.trace_stop"() : () -> ()
    %612 = vector.extract_strided_slice %611 {offsets = [0, 0, 0], sizes = [1, 16, 8], strides = [1, 1, 1]} : vector<4x16x8xf32> to vector<1x16x8xf32>
    %613 = vector.shape_cast %612 : vector<1x16x8xf32> to vector<16x8xf32>
    %614 = vector.extract_strided_slice %611 {offsets = [1, 0, 0], sizes = [1, 16, 8], strides = [1, 1, 1]} : vector<4x16x8xf32> to vector<1x16x8xf32>
    %615 = vector.shape_cast %614 : vector<1x16x8xf32> to vector<16x8xf32>
    %616 = vector.extract_strided_slice %611 {offsets = [2, 0, 0], sizes = [1, 16, 8], strides = [1, 1, 1]} : vector<4x16x8xf32> to vector<1x16x8xf32>
    %617 = vector.shape_cast %616 : vector<1x16x8xf32> to vector<16x8xf32>
    %618 = vector.extract_strided_slice %611 {offsets = [3, 0, 0], sizes = [1, 16, 8], strides = [1, 1, 1]} : vector<4x16x8xf32> to vector<1x16x8xf32>
    %619 = vector.shape_cast %618 : vector<1x16x8xf32> to vector<16x8xf32>
    %620 = tpu.concatenate %613, %615, %617, %619 in 1 : vector<16x8xf32>, vector<16x8xf32>, vector<16x8xf32>, vector<16x8xf32> -> vector<16x32xf32>
    %621 = arith.truncf %620 : vector<16x32xf32> to vector<16x32xbf16>
    %cst_154 = arith.constant dense<0.000000e+00> : vector<16x32xf32>
    %622 = tpu.matmul %621, %568, %cst_154 {dimension_numbers = #tpu.dot_dimension_numbers<[1], [0], [0], [1], [0, 0, 1, 1], [], []>} : vector<16x32xbf16>, vector<32x32xbf16>, vector<16x32xf32> -> vector<16x32xf32>
    %623 = vector.broadcast %569 : vector<1x32xf32> to vector<16x32xf32>
    %624 = arith.addf %622, %623 : vector<16x32xf32>
    %625 = arith.addf %534, %624 : vector<16x32xf32>
    %c38 = arith.constant 38 : index
    %c0_155 = arith.constant 0 : index
    %626 = vector.load %arg9[%c38, %c0_155] : memref<48x128xf32, #tpu.memory_space<vmem>>, vector<1x32xf32>
    %c39 = arith.constant 39 : index
    %c0_156 = arith.constant 0 : index
    %627 = vector.load %arg9[%c39, %c0_156] : memref<48x128xf32, #tpu.memory_space<vmem>>, vector<1x32xf32>
    %cst_157 = arith.constant dense<0.000000e+00> : vector<16xf32>
    %628 = vector.multi_reduction <add>, %625, %cst_157 [1] : vector<16x32xf32> to vector<16xf32>
    %629 = vector.shape_cast %628 : vector<16xf32> to vector<16x1xf32>
    %cst_158 = arith.constant 3.200000e+01 : f32
    %630 = vector.broadcast %cst_158 : f32 to vector<16x1xf32>
    %631 = arith.divf %629, %630 : vector<16x1xf32>
    %632 = vector.broadcast %631 : vector<16x1xf32> to vector<16x32xf32>
    %633 = arith.subf %625, %632 : vector<16x32xf32>
    %634 = arith.mulf %633, %633 : vector<16x32xf32>
    %cst_159 = arith.constant dense<0.000000e+00> : vector<16xf32>
    %635 = vector.multi_reduction <add>, %634, %cst_159 [1] : vector<16x32xf32> to vector<16xf32>
    %636 = vector.shape_cast %635 : vector<16xf32> to vector<16x1xf32>
    %cst_160 = arith.constant 3.200000e+01 : f32
    %637 = vector.broadcast %cst_160 : f32 to vector<16x1xf32>
    %638 = arith.divf %636, %637 : vector<16x1xf32>
    %639 = vector.broadcast %631 : vector<16x1xf32> to vector<16x32xf32>
    %640 = arith.subf %625, %639 : vector<16x32xf32>
    %cst_161 = arith.constant 9.99999997E-7 : f32
    %641 = vector.broadcast %cst_161 : f32 to vector<16x1xf32>
    %642 = arith.addf %638, %641 : vector<16x1xf32>
    %643 = math.rsqrt %642 : vector<16x1xf32>
    %644 = vector.broadcast %643 : vector<16x1xf32> to vector<16x32xf32>
    %645 = arith.mulf %640, %644 : vector<16x32xf32>
    %646 = vector.broadcast %626 : vector<1x32xf32> to vector<16x32xf32>
    %647 = arith.mulf %645, %646 : vector<16x32xf32>
    %648 = vector.broadcast %627 : vector<1x32xf32> to vector<16x32xf32>
    %649 = arith.addf %647, %648 : vector<16x32xf32>
    %c640 = arith.constant 640 : index
    %c0_162 = arith.constant 0 : index
    %650 = vector.load %arg8[%c640, %c0_162] : memref<864x128xbf16, #tpu.memory_space<vmem>>, vector<32x32xbf16>
    %651 = arith.truncf %649 : vector<16x32xf32> to vector<16x32xbf16>
    %cst_163 = arith.constant dense<0.000000e+00> : vector<16x32xf32>
    %652 = tpu.matmul %651, %650, %cst_163 {dimension_numbers = #tpu.dot_dimension_numbers<[1], [0], [0], [1], [0, 0, 1, 1], [], []>} : vector<16x32xbf16>, vector<32x32xbf16>, vector<16x32xf32> -> vector<16x32xf32>
    %c31 = arith.constant 31 : index
    %c0_164 = arith.constant 0 : index
    %653 = vector.load %arg9[%c31, %c0_164] : memref<48x128xf32, #tpu.memory_space<vmem>>, vector<1x32xf32>
    %654 = vector.broadcast %653 : vector<1x32xf32> to vector<16x32xf32>
    %655 = arith.addf %652, %654 : vector<16x32xf32>
    %c672 = arith.constant 672 : index
    %c0_165 = arith.constant 0 : index
    %656 = vector.load %arg8[%c672, %c0_165] : memref<864x128xbf16, #tpu.memory_space<vmem>>, vector<32x64xbf16>
    %657 = arith.truncf %297 : vector<16x32xf32> to vector<16x32xbf16>
    %cst_166 = arith.constant dense<0.000000e+00> : vector<16x64xf32>
    %658 = tpu.matmul %657, %656, %cst_166 {dimension_numbers = #tpu.dot_dimension_numbers<[1], [0], [0], [1], [0, 0, 1, 1], [], []>} : vector<16x32xbf16>, vector<32x64xbf16>, vector<16x64xf32> -> vector<16x64xf32>
    %c32_167 = arith.constant 32 : index
    %c0_168 = arith.constant 0 : index
    %659 = vector.load %arg9[%c32_167, %c0_168] : memref<48x128xf32, #tpu.memory_space<vmem>>, vector<1x64xf32>
    %660 = vector.broadcast %659 : vector<1x64xf32> to vector<16x64xf32>
    %661 = arith.addf %658, %660 : vector<16x64xf32>
    %662 = vector.extract_strided_slice %661 {offsets = [0, 0], sizes = [16, 32], strides = [1, 1]} : vector<16x64xf32> to vector<16x32xf32>
    %663 = vector.extract_strided_slice %661 {offsets = [0, 32], sizes = [16, 32], strides = [1, 1]} : vector<16x64xf32> to vector<16x32xf32>
    %c704 = arith.constant 704 : index
    %c0_169 = arith.constant 0 : index
    %664 = vector.load %arg8[%c704, %c0_169] : memref<864x128xbf16, #tpu.memory_space<vmem>>, vector<32x32xbf16>
    %c33 = arith.constant 33 : index
    %c0_170 = arith.constant 0 : index
    %665 = vector.load %arg9[%c33, %c0_170] : memref<48x128xf32, #tpu.memory_space<vmem>>, vector<1x32xf32>
    %666 = vector.extract_strided_slice %655 {offsets = [0, 0], sizes = [16, 8], strides = [1, 1]} : vector<16x32xf32> to vector<16x8xf32>
    %667 = vector.extract_strided_slice %655 {offsets = [0, 8], sizes = [16, 8], strides = [1, 1]} : vector<16x32xf32> to vector<16x8xf32>
    %668 = vector.extract_strided_slice %655 {offsets = [0, 16], sizes = [16, 8], strides = [1, 1]} : vector<16x32xf32> to vector<16x8xf32>
    %669 = vector.extract_strided_slice %655 {offsets = [0, 24], sizes = [16, 8], strides = [1, 1]} : vector<16x32xf32> to vector<16x8xf32>
    %670 = vector.shape_cast %666 : vector<16x8xf32> to vector<1x16x8xf32>
    %671 = vector.shape_cast %667 : vector<16x8xf32> to vector<1x16x8xf32>
    %672 = vector.shape_cast %668 : vector<16x8xf32> to vector<1x16x8xf32>
    %673 = vector.shape_cast %669 : vector<16x8xf32> to vector<1x16x8xf32>
    %674 = tpu.concatenate %670, %671, %672, %673 in 0 : vector<1x16x8xf32>, vector<1x16x8xf32>, vector<1x16x8xf32>, vector<1x16x8xf32> -> vector<4x16x8xf32>
    %675 = vector.extract_strided_slice %662 {offsets = [0, 0], sizes = [16, 8], strides = [1, 1]} : vector<16x32xf32> to vector<16x8xf32>
    %676 = vector.extract_strided_slice %662 {offsets = [0, 8], sizes = [16, 8], strides = [1, 1]} : vector<16x32xf32> to vector<16x8xf32>
    %677 = vector.extract_strided_slice %662 {offsets = [0, 16], sizes = [16, 8], strides = [1, 1]} : vector<16x32xf32> to vector<16x8xf32>
    %678 = vector.extract_strided_slice %662 {offsets = [0, 24], sizes = [16, 8], strides = [1, 1]} : vector<16x32xf32> to vector<16x8xf32>
    %679 = vector.shape_cast %675 : vector<16x8xf32> to vector<1x16x8xf32>
    %680 = vector.shape_cast %676 : vector<16x8xf32> to vector<1x16x8xf32>
    %681 = vector.shape_cast %677 : vector<16x8xf32> to vector<1x16x8xf32>
    %682 = vector.shape_cast %678 : vector<16x8xf32> to vector<1x16x8xf32>
    %683 = tpu.concatenate %679, %680, %681, %682 in 0 : vector<1x16x8xf32>, vector<1x16x8xf32>, vector<1x16x8xf32>, vector<1x16x8xf32> -> vector<4x16x8xf32>
    %684 = vector.extract_strided_slice %663 {offsets = [0, 0], sizes = [16, 8], strides = [1, 1]} : vector<16x32xf32> to vector<16x8xf32>
    %685 = vector.extract_strided_slice %663 {offsets = [0, 8], sizes = [16, 8], strides = [1, 1]} : vector<16x32xf32> to vector<16x8xf32>
    %686 = vector.extract_strided_slice %663 {offsets = [0, 16], sizes = [16, 8], strides = [1, 1]} : vector<16x32xf32> to vector<16x8xf32>
    %687 = vector.extract_strided_slice %663 {offsets = [0, 24], sizes = [16, 8], strides = [1, 1]} : vector<16x32xf32> to vector<16x8xf32>
    %688 = vector.shape_cast %684 : vector<16x8xf32> to vector<1x16x8xf32>
    %689 = vector.shape_cast %685 : vector<16x8xf32> to vector<1x16x8xf32>
    %690 = vector.shape_cast %686 : vector<16x8xf32> to vector<1x16x8xf32>
    %691 = vector.shape_cast %687 : vector<16x8xf32> to vector<1x16x8xf32>
    %692 = tpu.concatenate %688, %689, %690, %691 in 0 : vector<1x16x8xf32>, vector<1x16x8xf32>, vector<1x16x8xf32>, vector<1x16x8xf32> -> vector<4x16x8xf32>
    "tpu.trace_start"() <{level = 10 : i32, message = "hqd,hkd->hqk"}> : () -> ()
    %cst_171 = arith.constant dense<0.000000e+00> : vector<4x16x16xf32>
    %693 = tpu.matmul %674, %683, %cst_171 {dimension_numbers = #tpu.dot_dimension_numbers<[2], [2], [1], [1], [0, 0, 0, 1, 1, 1], [0], [0]>} : vector<4x16x8xf32>, vector<4x16x8xf32>, vector<4x16x16xf32> -> vector<4x16x16xf32>
    "tpu.trace_stop"() : () -> ()
    %694 = vector.shape_cast %2 : vector<16x16xf32> to vector<1x16x16xf32>
    %695 = vector.broadcast %694 : vector<1x16x16xf32> to vector<4x16x16xf32>
    %696 = arith.addf %693, %695 : vector<4x16x16xf32>
    %cst_172 = arith.constant dense<0xFF800000> : vector<4x16xf32>
    %697 = vector.multi_reduction <maximumf>, %696, %cst_172 [2] : vector<4x16x16xf32> to vector<4x16xf32>
    %698 = vector.shape_cast %697 : vector<4x16xf32> to vector<4x16x1xf32>
    %699 = vector.broadcast %698 : vector<4x16x1xf32> to vector<4x16x16xf32>
    %700 = arith.subf %696, %699 : vector<4x16x16xf32>
    %701 = math.exp %700 : vector<4x16x16xf32>
    %cst_173 = arith.constant dense<0.000000e+00> : vector<4x16xf32>
    %702 = vector.multi_reduction <add>, %701, %cst_173 [2] : vector<4x16x16xf32> to vector<4x16xf32>
    %703 = vector.shape_cast %702 : vector<4x16xf32> to vector<4x16x1xf32>
    %704 = tpu.reciprocal %703 {approx = true} : vector<4x16x1xf32> -> vector<4x16x1xf32>
    %705 = vector.broadcast %704 : vector<4x16x1xf32> to vector<4x16x16xf32>
    %706 = arith.mulf %701, %705 : vector<4x16x16xf32>
    "tpu.trace_start"() <{level = 10 : i32, message = "hqk,hkd->hqd"}> : () -> ()
    %cst_174 = arith.constant dense<0.000000e+00> : vector<4x16x8xf32>
    %707 = tpu.matmul %706, %692, %cst_174 {dimension_numbers = #tpu.dot_dimension_numbers<[2], [1], [1], [2], [0, 0, 0, 1, 1, 2], [0], [0]>} : vector<4x16x16xf32>, vector<4x16x8xf32>, vector<4x16x8xf32> -> vector<4x16x8xf32>
    "tpu.trace_stop"() : () -> ()
    %708 = vector.extract_strided_slice %707 {offsets = [0, 0, 0], sizes = [1, 16, 8], strides = [1, 1, 1]} : vector<4x16x8xf32> to vector<1x16x8xf32>
    %709 = vector.shape_cast %708 : vector<1x16x8xf32> to vector<16x8xf32>
    %710 = vector.extract_strided_slice %707 {offsets = [1, 0, 0], sizes = [1, 16, 8], strides = [1, 1, 1]} : vector<4x16x8xf32> to vector<1x16x8xf32>
    %711 = vector.shape_cast %710 : vector<1x16x8xf32> to vector<16x8xf32>
    %712 = vector.extract_strided_slice %707 {offsets = [2, 0, 0], sizes = [1, 16, 8], strides = [1, 1, 1]} : vector<4x16x8xf32> to vector<1x16x8xf32>
    %713 = vector.shape_cast %712 : vector<1x16x8xf32> to vector<16x8xf32>
    %714 = vector.extract_strided_slice %707 {offsets = [3, 0, 0], sizes = [1, 16, 8], strides = [1, 1, 1]} : vector<4x16x8xf32> to vector<1x16x8xf32>
    %715 = vector.shape_cast %714 : vector<1x16x8xf32> to vector<16x8xf32>
    %716 = tpu.concatenate %709, %711, %713, %715 in 1 : vector<16x8xf32>, vector<16x8xf32>, vector<16x8xf32>, vector<16x8xf32> -> vector<16x32xf32>
    %717 = arith.truncf %716 : vector<16x32xf32> to vector<16x32xbf16>
    %cst_175 = arith.constant dense<0.000000e+00> : vector<16x32xf32>
    %718 = tpu.matmul %717, %664, %cst_175 {dimension_numbers = #tpu.dot_dimension_numbers<[1], [0], [0], [1], [0, 0, 1, 1], [], []>} : vector<16x32xbf16>, vector<32x32xbf16>, vector<16x32xf32> -> vector<16x32xf32>
    %719 = vector.broadcast %665 : vector<1x32xf32> to vector<16x32xf32>
    %720 = arith.addf %718, %719 : vector<16x32xf32>
    %721 = arith.addf %625, %720 : vector<16x32xf32>
    %c40 = arith.constant 40 : index
    %c0_176 = arith.constant 0 : index
    %722 = vector.load %arg9[%c40, %c0_176] : memref<48x128xf32, #tpu.memory_space<vmem>>, vector<1x32xf32>
    %c41 = arith.constant 41 : index
    %c0_177 = arith.constant 0 : index
    %723 = vector.load %arg9[%c41, %c0_177] : memref<48x128xf32, #tpu.memory_space<vmem>>, vector<1x32xf32>
    %cst_178 = arith.constant dense<0.000000e+00> : vector<16xf32>
    %724 = vector.multi_reduction <add>, %721, %cst_178 [1] : vector<16x32xf32> to vector<16xf32>
    %725 = vector.shape_cast %724 : vector<16xf32> to vector<16x1xf32>
    %cst_179 = arith.constant 3.200000e+01 : f32
    %726 = vector.broadcast %cst_179 : f32 to vector<16x1xf32>
    %727 = arith.divf %725, %726 : vector<16x1xf32>
    %728 = vector.broadcast %727 : vector<16x1xf32> to vector<16x32xf32>
    %729 = arith.subf %721, %728 : vector<16x32xf32>
    %730 = arith.mulf %729, %729 : vector<16x32xf32>
    %cst_180 = arith.constant dense<0.000000e+00> : vector<16xf32>
    %731 = vector.multi_reduction <add>, %730, %cst_180 [1] : vector<16x32xf32> to vector<16xf32>
    %732 = vector.shape_cast %731 : vector<16xf32> to vector<16x1xf32>
    %cst_181 = arith.constant 3.200000e+01 : f32
    %733 = vector.broadcast %cst_181 : f32 to vector<16x1xf32>
    %734 = arith.divf %732, %733 : vector<16x1xf32>
    %735 = vector.broadcast %727 : vector<16x1xf32> to vector<16x32xf32>
    %736 = arith.subf %721, %735 : vector<16x32xf32>
    %cst_182 = arith.constant 9.99999997E-7 : f32
    %737 = vector.broadcast %cst_182 : f32 to vector<16x1xf32>
    %738 = arith.addf %734, %737 : vector<16x1xf32>
    %739 = math.rsqrt %738 : vector<16x1xf32>
    %740 = vector.broadcast %739 : vector<16x1xf32> to vector<16x32xf32>
    %741 = arith.mulf %736, %740 : vector<16x32xf32>
    %742 = vector.broadcast %722 : vector<1x32xf32> to vector<16x32xf32>
    %743 = arith.mulf %741, %742 : vector<16x32xf32>
    %744 = vector.broadcast %723 : vector<1x32xf32> to vector<16x32xf32>
    %745 = arith.addf %743, %744 : vector<16x32xf32>
    %c736 = arith.constant 736 : index
    %c0_183 = arith.constant 0 : index
    %746 = vector.load %arg8[%c736, %c0_183] : memref<864x128xbf16, #tpu.memory_space<vmem>>, vector<32x64xbf16>
    %747 = arith.truncf %745 : vector<16x32xf32> to vector<16x32xbf16>
    %cst_184 = arith.constant dense<0.000000e+00> : vector<16x64xf32>
    %748 = tpu.matmul %747, %746, %cst_184 {dimension_numbers = #tpu.dot_dimension_numbers<[1], [0], [0], [1], [0, 0, 1, 1], [], []>} : vector<16x32xbf16>, vector<32x64xbf16>, vector<16x64xf32> -> vector<16x64xf32>
    %c34 = arith.constant 34 : index
    %c0_185 = arith.constant 0 : index
    %749 = vector.load %arg9[%c34, %c0_185] : memref<48x128xf32, #tpu.memory_space<vmem>>, vector<1x64xf32>
    %750 = vector.broadcast %749 : vector<1x64xf32> to vector<16x64xf32>
    %751 = arith.addf %748, %750 : vector<16x64xf32>
    %cst_186 = arith.constant 0.000000e+00 : f32
    %752 = vector.broadcast %cst_186 : f32 to vector<16x64xf32>
    %753 = arith.maximumf %751, %752 : vector<16x64xf32>
    %c768 = arith.constant 768 : index
    %c0_187 = arith.constant 0 : index
    %754 = vector.load %arg8[%c768, %c0_187] : memref<864x128xbf16, #tpu.memory_space<vmem>>, vector<64x32xbf16>
    %755 = arith.truncf %753 : vector<16x64xf32> to vector<16x64xbf16>
    %cst_188 = arith.constant dense<0.000000e+00> : vector<16x32xf32>
    %756 = tpu.matmul %755, %754, %cst_188 {dimension_numbers = #tpu.dot_dimension_numbers<[1], [0], [0], [1], [0, 0, 1, 1], [], []>} : vector<16x64xbf16>, vector<64x32xbf16>, vector<16x32xf32> -> vector<16x32xf32>
    %757 = arith.addf %721, %756 : vector<16x32xf32>
    %c35 = arith.constant 35 : index
    %c0_189 = arith.constant 0 : index
    %758 = vector.load %arg9[%c35, %c0_189] : memref<48x128xf32, #tpu.memory_space<vmem>>, vector<1x32xf32>
    %759 = vector.broadcast %758 : vector<1x32xf32> to vector<16x32xf32>
    %760 = arith.addf %757, %759 : vector<16x32xf32>
    %c44 = arith.constant 44 : index
    %c0_190 = arith.constant 0 : index
    %761 = vector.load %arg9[%c44, %c0_190] : memref<48x128xf32, #tpu.memory_space<vmem>>, vector<1x32xf32>
    %c45 = arith.constant 45 : index
    %c0_191 = arith.constant 0 : index
    %762 = vector.load %arg9[%c45, %c0_191] : memref<48x128xf32, #tpu.memory_space<vmem>>, vector<1x32xf32>
    %cst_192 = arith.constant dense<0.000000e+00> : vector<16xf32>
    %763 = vector.multi_reduction <add>, %760, %cst_192 [1] : vector<16x32xf32> to vector<16xf32>
    %764 = vector.shape_cast %763 : vector<16xf32> to vector<16x1xf32>
    %cst_193 = arith.constant 3.200000e+01 : f32
    %765 = vector.broadcast %cst_193 : f32 to vector<16x1xf32>
    %766 = arith.divf %764, %765 : vector<16x1xf32>
    %767 = vector.broadcast %766 : vector<16x1xf32> to vector<16x32xf32>
    %768 = arith.subf %760, %767 : vector<16x32xf32>
    %769 = arith.mulf %768, %768 : vector<16x32xf32>
    %cst_194 = arith.constant dense<0.000000e+00> : vector<16xf32>
    %770 = vector.multi_reduction <add>, %769, %cst_194 [1] : vector<16x32xf32> to vector<16xf32>
    %771 = vector.shape_cast %770 : vector<16xf32> to vector<16x1xf32>
    %cst_195 = arith.constant 3.200000e+01 : f32
    %772 = vector.broadcast %cst_195 : f32 to vector<16x1xf32>
    %773 = arith.divf %771, %772 : vector<16x1xf32>
    %774 = vector.broadcast %766 : vector<16x1xf32> to vector<16x32xf32>
    %775 = arith.subf %760, %774 : vector<16x32xf32>
    %cst_196 = arith.constant 9.99999997E-7 : f32
    %776 = vector.broadcast %cst_196 : f32 to vector<16x1xf32>
    %777 = arith.addf %773, %776 : vector<16x1xf32>
    %778 = math.rsqrt %777 : vector<16x1xf32>
    %779 = vector.broadcast %778 : vector<16x1xf32> to vector<16x32xf32>
    %780 = arith.mulf %775, %779 : vector<16x32xf32>
    %781 = vector.broadcast %761 : vector<1x32xf32> to vector<16x32xf32>
    %782 = arith.mulf %780, %781 : vector<16x32xf32>
    %783 = vector.broadcast %762 : vector<1x32xf32> to vector<16x32xf32>
    %784 = arith.addf %782, %783 : vector<16x32xf32>
    %c0_197 = arith.constant 0 : index
    %c0_198 = arith.constant 0 : index
    %785 = vector.load %arg10[%c0_197, %c0_198] : memref<16x32xf32, #tpu.memory_space<vmem>>, vector<16x32xf32>
    tpu.vector_store %arg10[%c0_197, %c0_198], %784 {strides = array<i32>} : memref<16x32xf32, #tpu.memory_space<vmem>>, vector<16x32xf32>,
    return
  }
  func.func @transform_0(%arg0: i32) -> (i32, i32) {
    %c0_i32 = arith.constant 0 : i32
    %c0_i32_0 = arith.constant 0 : i32
    %c0_i32_1 = arith.constant 0 : i32
    return %c0_i32, %c0_i32_0 : i32, i32
  }
  func.func @transform_1(%arg0: i32) -> (i32, i32) {
    %c0_i32 = arith.constant 0 : i32
    %c0_i32_0 = arith.constant 0 : i32
    %c0_i32_1 = arith.constant 0 : i32
    return %c0_i32, %c0_i32_0 : i32, i32
  }
  func.func @transform_2(%arg0: i32) -> (i32, i32) {
    %c0_i32 = arith.constant 0 : i32
    %c0_i32_0 = arith.constant 0 : i32
    %c0_i32_1 = arith.constant 0 : i32
    return %c0_i32, %c0_i32_0 : i32, i32
  }
  func.func @transform_3(%arg0: i32) -> (i32, i32) {
    %c0_i32 = arith.constant 0 : i32
    %c0_i32_0 = arith.constant 0 : i32
    %c0_i32_1 = arith.constant 0 : i32
    return %c0_i32, %c0_i32_0 : i32, i32
  }
  func.func @transform_4(%arg0: i32) -> (i32, i32) {
    %c0_i32 = arith.constant 0 : i32
    %c0_i32_0 = arith.constant 0 : i32
    %c0_i32_1 = arith.constant 0 : i32
    return %c0_i32, %c0_i32_0 : i32, i32
  }
  func.func @transform_5(%arg0: i32) -> (i32, i32) {
    %c0_i32 = arith.constant 0 : i32
    %c0_i32_0 = arith.constant 0 : i32
    %c0_i32_1 = arith.constant 0 : i32
    return %c0_i32, %c0_i32_0 : i32, i32
  }
  func.func @transform_6(%arg0: i32) -> (i32, i32) {
    %c0_i32 = arith.constant 0 : i32
    %c0_i32_0 = arith.constant 0 : i32
    %c0_i32_1 = arith.constant 0 : i32
    return %c0_i32, %c0_i32_0 : i32, i32
  }
  func.func @transform_7(%arg0: i32) -> (i32, i32) {
    %c0_i32 = arith.constant 0 : i32
    %c0_i32_0 = arith.constant 0 : i32
    %c0_i32_1 = arith.constant 0 : i32
    return %c0_i32, %c0_i32_0 : i32, i32
  }
  func.func @transform_8(%arg0: i32) -> (i32, i32) {
    %c0_i32 = arith.constant 0 : i32
    %c0_i32_0 = arith.constant 0 : i32
    %c0_i32_1 = arith.constant 0 : i32
    return %c0_i32, %c0_i32_0 : i32, i32
  }
  func.func @transform_9(%arg0: i32) -> (i32, i32) {
    %c0_i32 = arith.constant 0 : i32
    %c0_i32_0 = arith.constant 0 : i32
    %c0_i32_1 = arith.constant 0 : i32
    return %c0_i32, %c0_i32_0 : i32, i32
  }
}

</mosaic_0001>

<llo_original>
// kernel: encode_decode_forward.1
$region0: #{encode_decode_forward.1}
  #allocation0 [shape = 'u32[]', space=smem, size = 0x4, offset = 0x4, fixed_abs, tag = 'smem constant byte address 0x4 - core index']
  #allocation1 [shape = 'u32[72,128]{1,0:T(1,128)}', space=vmem, size = 0x9000, scoped, tag = 'internal scratch']
  %s0 = inlined_call_operand.vmem [shape: s32[16,1], index: 0, kind: input, shape index: {}]
  %s1 = inlined_call_operand.vmem [shape: s32[16,1], index: 1, kind: input, shape index: {}]
  %s2 = inlined_call_operand.vmem [shape: f32[16,32], index: 2, kind: input, shape index: {}, may-alias: {2,3}]
  %s3 = inlined_call_operand.vmem [shape: f32[16,32], index: 3, kind: input, shape index: {}, may-alias: {2,3}]
  %s4 = inlined_call_operand.vmem [shape: f32[16,16], index: 4, kind: input, shape index: {}, may-alias: {4,6}]
  %s5 = inlined_call_operand.vmem [shape: f32[16,16], index: 5, kind: input, shape index: {}]
  %s6 = inlined_call_operand.vmem [shape: f32[16,16], index: 6, kind: input, shape index: {}, may-alias: {4,6}]
  %s7 = inlined_call_operand.hbm [shape: bf16[864,128], index: 7, kind: input, shape index: {}]
  %s8 = inlined_call_operand.vmem [shape: f32[48,128], index: 8, kind: input, shape index: {}]
  %s9 = inlined_call_operand.hbm [shape: f32[16,32], index: 9, kind: output, shape index: {}]
  %s10 = sld [smem:[#allocation0]]
  $region50: #{encode_decode_forward.1} parent=0
    _
  %s12 = ssub.s32 1, %s10
  %s13 = scalar_select 0, %s12, %s10
  $region1: #{encode_decode_forward.1} parent=0
    #allocation2 [shape = 'u8[221184]{0}', space=vmem, size = 0x36000, scoped, tag = 'input window, operand 7, single buffered']
    #allocation3 [shape = 's32[1]{0}', space=sflag, size = 0x4, scoped, tag = 'scoped memory for encode_decode_forward.1']
    #allocation4 [shape = 's32[1]{0}', space=sflag, size = 0x4, scoped, tag = 'scoped memory for encode_decode_forward.1']
    #allocation5 [shape = 'u8[8192]{0}', space=vmem, size = 0x2000, scoped, tag = 'output window, operand 0, single buffered']
    %14 = vsyncpa [#allocation3], 0
    %15 = vsyncpa [#allocation4], 0
    // Predicated region
    $region2: #{encode_decode_forward.1} parent=1 // pred_check
      _
    $region3: #{encode_decode_forward.1} parent=1 // pred_check_branch
      %17 = sbr.rel (0) target = $region5
    $region4: #{encode_decode_forward.1} parent=1 // pred_region
      _
    $region5: #{encode_decode_forward.1} parent=1 // pred_fallthru
      _
    // Predicated region
    $region6: #{encode_decode_forward.1} parent=1 // pred_check
      _
    $region7: #{encode_decode_forward.1} parent=1 // pred_check_branch
      %19 = sbr.rel (0) target = $region9
    $region8: #{encode_decode_forward.1} parent=1 // pred_region
      _
    $region9: #{encode_decode_forward.1} parent=1 // pred_fallthru
      _
    // Predicated region
    $region10: #{encode_decode_forward.1} parent=1 // pred_check
      _
    $region11: #{encode_decode_forward.1} parent=1 // pred_check_branch
      %21 = sbr.rel (0) target = $region13
    $region12: #{encode_decode_forward.1} parent=1 // pred_region
      _
    $region13: #{encode_decode_forward.1} parent=1 // pred_fallthru
      _
    // Predicated region
    $region14: #{encode_decode_forward.1} parent=1 // pred_check
      _
    $region15: #{encode_decode_forward.1} parent=1 // pred_check_branch
      %23 = sbr.rel (0) target = $region17
    $region16: #{encode_decode_forward.1} parent=1 // pred_region
      _
    $region17: #{encode_decode_forward.1} parent=1 // pred_fallthru
      _
    // Predicated region
    $region18: #{encode_decode_forward.1} parent=1 // pred_check
      _
    $region19: #{encode_decode_forward.1} parent=1 // pred_check_branch
      %25 = sbr.rel (0) target = $region21
    $region20: #{encode_decode_forward.1} parent=1 // pred_region
      _
    $region21: #{encode_decode_forward.1} parent=1 // pred_fallthru
      _
    // Predicated region
    $region22: #{encode_decode_forward.1} parent=1 // pred_check
      _
    $region23: #{encode_decode_forward.1} parent=1 // pred_check_branch
      %27 = sbr.rel (0) target = $region25
    $region24: #{encode_decode_forward.1} parent=1 // pred_region
      _
    $region25: #{encode_decode_forward.1} parent=1 // pred_fallthru
      _
    // Predicated region
    $region26: #{encode_decode_forward.1} parent=1 // pred_check
      _
    $region27: #{encode_decode_forward.1} parent=1 // pred_check_branch
      %29 = sbr.rel (0) target = $region29
    $region28: #{encode_decode_forward.1} parent=1 // pred_region
      _
    $region29: #{encode_decode_forward.1} parent=1 // pred_fallthru
      _
    // Predicated region
    $region30: #{encode_decode_forward.1} parent=1 // pred_check
      _
    $region31: #{encode_decode_forward.1} parent=1 // pred_check_branch
      %31 = sbr.rel (0) target = $region33
    $region32: #{encode_decode_forward.1} parent=1 // pred_region
      %33 = vsyncadd [#allocation3], 0
      %s34 = sshll.u32 %s7, 4
      %s35 = int_to_ptr.hbm [resolvable:$true] %s34
      %s36 = sshll.u32 [#allocation2], 4
      %s37 = int_to_ptr.vmem [resolvable:$true] %s36
      %42 = dma.hbm_to_vmem [thread:$0]  %s35, 6912, %s37, [#allocation3], 64, 64, 4
    $region33: #{encode_decode_forward.1} parent=1 // pred_fallthru
      _
    // Predicated region
    $region34: #{encode_decode_forward.1} parent=1 // pred_check
      _
    $region35: #{encode_decode_forward.1} parent=1 // pred_check_branch
      %44 = sbr.rel (0) target = $region37
    $region36: #{encode_decode_forward.1} parent=1 // pred_region
      _
    $region37: #{encode_decode_forward.1} parent=1 // pred_fallthru
      _
    // Predicated region
    $region38: #{encode_decode_forward.1} parent=1 // pred_check
      _
    $region39: #{encode_decode_forward.1} parent=1 // pred_check_branch
      %46 = sbr.rel (0) target = $region41
    $region40: #{encode_decode_forward.1} parent=1 // pred_region
      %48 = dma.done [#allocation3], 6912
    $region41: #{encode_decode_forward.1} parent=1 // pred_fallthru
      _
    %v50 = vld [vmem:[%s4] sm:$0xff]
    %v51 = vld [vmem:[%s4 + $0x8] sm:$0xff]
    %v52 = vld [vmem:[%s5] sm:$0xff]
    %v53 = vld [vmem:[%s5 + $0x8] sm:$0xff]
    %v54 = vld [vmem:[%s6] sm:$0xff]
    %v55 = vld [vmem:[%s6 + $0x8] sm:$0xff]
    %v56 = vld [vmem:[%s0] sm:$0xff]
    %v57 = vld [vmem:[%s0 + $0x8] sm:$0xff]
    %v58 = vlaneseq
    %v59 = vand.u32 %v58, 127
    %60 = vset.pattern.permute.xlu0 0
    %61 = vperm.xlu0 %60, %v56
    %v62 = vpop.permute.xlu0 %61
    %63 = vset.pattern.permute.xlu0 0
    %64 = vperm.xlu0 %63, %v57
    %v65 = vpop.permute.xlu0 %64
    %vm66 = vcmp.eq.s32.totalorder %v59, %v62
    %vm67 = vcmp.eq.s32.totalorder %v59, %v65
    %v68 = vld [vmem:[#allocation2 + $0x1a0] sm:$0xf]
    %v69 = vld [vmem:[#allocation2 + $0x1a4] sm:$0xf]
    %v70 = vsel %vm66, 1, 0
    %v71 = vsel %vm67, 1, 0
    %v72 = vcvt.s32.f32 %v70
    %v73 = vcvt.s32.f32 %v71
    %v74 = vpack.c.bf16 %v73, %v72
    %v75 = vld [vmem:[%s2] sm:$0xff]
    %v76 = vld [vmem:[%s2 + $0x8] sm:$0xff]
    %v79 = vunpack.c.l.b16 %v68
    %v80 = vunpack.c.l.b16 %v69
    %v81 = vpack.c.b16 %v80, %v79
    %vm83 = vcmask 130048
    %v85 = vsel %vm83, %v74, 0
    %87 = vmatpush.bf16.msra.mxu0 0
    %88 = vmatpush.bf16.msra.mxu0 0
    %89 = vmatpush.bf16.msra.mxu0 0
    %90 = vmatpush.bf16.msra.mxu0 0
    %91 = vmatpush.bf16.msra.mxu0 0
    %92 = vmatpush.bf16.msra.mxu0 0
    %93 = vmatpush.bf16.msra.mxu0 0
    %94 = vmatpush.bf16.msra.mxu0 %v81
    %95 = vmatmul.bf16.gmra.mxu0 %v85
    %v96 = vpop.f32.mrf.mxu0
    %v97 = vadd.f32 %v75, %v96
    %v98 = vpop.f32.mrf.mxu0
    %v99 = vadd.f32 %v76, %v98
    %100 = vdwg.mxu0
    %v101 = vld [vmem:[%s8 + $0x4] sm:$0x1]
    %v102 = vld [vmem:[%s8 + $0x5] sm:$0x1]
    %vm103 = vcmask 261120
    %v104 = vsel %vm103, %v97, 0.0
    %105 = vadd.xlane.f32.xlu0 %v104
    %v106 = vpop.xlane.xlu0 %105
    %v107 = vsel %vm103, %v99, 0.0
    %108 = vadd.xlane.f32.xlu0 %v107
    %v109 = vpop.xlane.xlu0 %108
    %v110 = vrcp.pop 32.0
    %v111 = vmul.f32 32.0, %v110
    %v112 = vsub.f32 1.0, %v111
    %v113 = vmul.f32 %v110, %v112
    %v114 = vadd.f32 %v110, %v113
    %vm115 = vweird.f32 %v110
    %v116 = vsel %vm115, %v110, %v114
    %v117 = vmul.f32 %v106, %v116
    %v118 = vmul.f32 %v109, %v116
    %v119 = vsub.f32 %v97, %v117
    %v120 = vsub.f32 %v99, %v118
    %v121 = vmul.f32 %v119, %v119
    %v122 = vmul.f32 %v120, %v120
    %v123 = vsel %vm103, %v121, 0.0
    %124 = vadd.xlane.f32.xlu0 %v123
    %v125 = vpop.xlane.xlu0 %124
    %v126 = vsel %vm103, %v122, 0.0
    %127 = vadd.xlane.f32.xlu0 %v126
    %v128 = vpop.xlane.xlu0 %127
    %v129 = vmul.f32 %v125, %v116
    %v130 = vmul.f32 %v128, %v116
    %v131 = vadd.f32 %v129, 1e-06
    %v132 = vadd.f32 %v130, 1e-06
    %v133 = vrsqrt.pop %v131
    %v134 = vmul.f32 %v133, %v131
    %v135 = vmul.f32 %v134, %v133
    %v136 = vmul.f32 0.5, %v135
    %v137 = vsub.f32 1.5, %v136
    %v138 = vmul.f32 %v133, %v137
    %vm139 = vweird.f32 %v131
    %vm140 = vweird.f32 %v133
    %vm141 = vmor %vm139, %vm140
    %v142 = vsel %vm141, %v133, %v138
    %v143 = vrsqrt.pop %v132
    %v144 = vmul.f32 %v143, %v132
    %v145 = vmul.f32 %v144, %v143
    %v146 = vmul.f32 0.5, %v145
    %v147 = vsub.f32 1.5, %v146
    %v148 = vmul.f32 %v143, %v147
    %vm149 = vweird.f32 %v132
    %vm150 = vweird.f32 %v143
    %vm151 = vmor %vm149, %vm150
    %v152 = vsel %vm151, %v143, %v148
    %v153 = vmul.f32 %v119, %v142
    %v154 = vmul.f32 %v120, %v152
    %v155 = vperm.slane %v101, 0
    %v156 = vmul.f32 %v153, %v155
    %v157 = vmul.f32 %v154, %v155
    %v158 = vperm.slane %v102, 0
    %v159 = vadd.f32 %v156, %v158
    %v160 = vadd.f32 %v157, %v158
    %v161 = vld [vmem:[#allocation2] sm:$0xf]
    %v162 = vld [vmem:[#allocation2 + $0x4] sm:$0xf]
    %v163 = vld [vmem:[#allocation2 + $0x8] sm:$0xf]
    %v164 = vld [vmem:[#allocation2 + $0xc] sm:$0xf]
    %v165 = vpack.c.bf16 %v160, %v159
    %v166 = vld [vmem:[%s8] sm:$0x1]
    %v167 = vperm.slane %v166, 0
    %v172 = vunpack.c.l.b16 %v161
    %v173 = vunpack.c.l.b16 %v162
    %v174 = vunpack.c.l.b16 %v163
    %v175 = vunpack.c.l.b16 %v164
    %v176 = vpack.c.b16 %v173, %v172
    %v177 = vpack.c.b16 %v175, %v174
    %v181 = vsel %vm103, %v165, 0
    %183 = vmatpush.bf16.msra.mxu0 0
    %184 = vmatpush.bf16.msra.mxu0 0
    %185 = vmatpush.bf16.msra.mxu0 0
    %186 = vmatpush.bf16.msra.mxu0 0
    %187 = vmatpush.bf16.msra.mxu0 0
    %188 = vmatpush.bf16.msra.mxu0 0
    %189 = vmatpush.bf16.msra.mxu0 %v177
    %190 = vmatpush.bf16.msra.mxu0 %v176
    %191 = vmatmul.bf16.gmra.mxu0 %v181
    %v192 = vpop.f32.mrf.mxu0
    %v193 = vadd.f32 %v167, %v192
    %v194 = vpop.f32.mrf.mxu0
    %v195 = vadd.f32 %v167, %v194
    %196 = vdwg.mxu0
    %v197 = vld [vmem:[#allocation2 + $0x10] sm:$0xf]
    %v198 = vld [vmem:[#allocation2 + $0x14] sm:$0xf]
    %v199 = vld [vmem:[#allocation2 + $0x18] sm:$0xf]
    %v200 = vld [vmem:[#allocation2 + $0x1c] sm:$0xf]
    %v201 = vld [vmem:[%s8 + $0x1] sm:$0x1]
    %204 = vrot.lane.b32.xlu0 %v193, 120
    %v205 = vpop.permute.xlu0 %204
    %206 = vrot.lane.b32.xlu0 %v195, 120
    %v207 = vpop.permute.xlu0 %206
    %208 = vrot.lane.b32.xlu0 %v193, 112
    %v209 = vpop.permute.xlu0 %208
    %210 = vrot.lane.b32.xlu0 %v195, 112
    %v211 = vpop.permute.xlu0 %210
    %212 = vrot.lane.b32.xlu0 %v193, 104
    %v213 = vpop.permute.xlu0 %212
    %214 = vrot.lane.b32.xlu0 %v195, 104
    %v215 = vpop.permute.xlu0 %214
    %216 = vrot.lane.b32.xlu0 %v193, 96
    %v217 = vpop.permute.xlu0 %216
    %218 = vrot.lane.b32.xlu0 %v195, 96
    %v219 = vpop.permute.xlu0 %218
    %vm220 = vcmask 64512
    %v221 = vsel %vm220, %v193, 0
    %v223 = vsel %vm220, %v195, 0
    %v225 = vsel %vm220, %v217, 0
    %v227 = vsel %vm220, %v219, 0
    %229 = vmatpush.xpose.msra.mxu0 0.0
    %230 = vmatpush.xpose.msra.mxu0 0.0
    %231 = vmatpush.xpose.msra.mxu0 0.0
    %232 = vmatpush.xpose.msra.mxu0 0.0
    %233 = vmatpush.xpose.msra.mxu0 0.0
    %234 = vmatpush.xpose.msra.mxu0 0.0
    %235 = vmatpush.xpose.msra.mxu0 0.0
    %236 = vmatpush.xpose.msra.mxu0 0.0
    %237 = vmatpush.xpose.msra.mxu0 0.0
    %238 = vmatpush.xpose.msra.mxu0 0.0
    %239 = vmatpush.xpose.msra.mxu0 0.0
    %240 = vmatpush.xpose.msra.mxu0 0.0
    %241 = vmatpush.xpose.msra.mxu0 0.0
    %242 = vmatpush.xpose.msra.mxu0 0.0
    %243 = vmatpush.xpose.msra.mxu0 %v227
    %244 = vmatpush.xpose.msra.mxu0 %v225
    %245 = vmatmul.f32.gmra.mxu0 %v221
    %v246 = vpop.f32.mrf.mxu0
    %v247 = vadd.f32 %v50, %v246
    %248 = vmatmul.f32.gmra.mxu0 %v223
    %v249 = vpop.f32.mrf.mxu0
    %v250 = vadd.f32 %v51, %v249
    %251 = vdwg.mxu0
    %252 = vrot.lane.b32.xlu0 %v205, 96
    %v253 = vpop.permute.xlu0 %252
    %254 = vrot.lane.b32.xlu0 %v207, 96
    %v255 = vpop.permute.xlu0 %254
    %v256 = vsel %vm220, %v205, 0
    %v258 = vsel %vm220, %v207, 0
    %v260 = vsel %vm220, %v253, 0
    %v262 = vsel %vm220, %v255, 0
    %264 = vmatpush.xpose.msra.mxu0 0.0
    %265 = vmatpush.xpose.msra.mxu0 0.0
    %266 = vmatpush.xpose.msra.mxu0 0.0
    %267 = vmatpush.xpose.msra.mxu0 0.0
    %268 = vmatpush.xpose.msra.mxu0 0.0
    %269 = vmatpush.xpose.msra.mxu0 0.0
    %270 = vmatpush.xpose.msra.mxu0 0.0
    %271 = vmatpush.xpose.msra.mxu0 0.0
    %272 = vmatpush.xpose.msra.mxu0 0.0
    %273 = vmatpush.xpose.msra.mxu0 0.0
    %274 = vmatpush.xpose.msra.mxu0 0.0
    %275 = vmatpush.xpose.msra.mxu0 0.0
    %276 = vmatpush.xpose.msra.mxu0 0.0
    %277 = vmatpush.xpose.msra.mxu0 0.0
    %278 = vmatpush.xpose.msra.mxu0 %v262
    %279 = vmatpush.xpose.msra.mxu0 %v260
    %280 = vmatmul.f32.gmra.mxu0 %v256
    %v281 = vpop.f32.mrf.mxu0
    %v282 = vadd.f32 %v50, %v281
    %283 = vmatmul.f32.gmra.mxu0 %v258
    %v284 = vpop.f32.mrf.mxu0
    %v285 = vadd.f32 %v51, %v284
    %286 = vdwg.mxu0
    %287 = vrot.lane.b32.xlu0 %v209, 96
    %v288 = vpop.permute.xlu0 %287
    %289 = vrot.lane.b32.xlu0 %v211, 96
    %v290 = vpop.permute.xlu0 %289
    %v291 = vsel %vm220, %v209, 0
    %v293 = vsel %vm220, %v211, 0
    %v295 = vsel %vm220, %v288, 0
    %v297 = vsel %vm220, %v290, 0
    %299 = vmatpush.xpose.msra.mxu0 0.0
    %300 = vmatpush.xpose.msra.mxu0 0.0
    %301 = vmatpush.xpose.msra.mxu0 0.0
    %302 = vmatpush.xpose.msra.mxu0 0.0
    %303 = vmatpush.xpose.msra.mxu0 0.0
    %304 = vmatpush.xpose.msra.mxu0 0.0
    %305 = vmatpush.xpose.msra.mxu0 0.0
    %306 = vmatpush.xpose.msra.mxu0 0.0
    %307 = vmatpush.xpose.msra.mxu0 0.0
    %308 = vmatpush.xpose.msra.mxu0 0.0
    %309 = vmatpush.xpose.msra.mxu0 0.0
    %310 = vmatpush.xpose.msra.mxu0 0.0
    %311 = vmatpush.xpose.msra.mxu0 0.0
    %312 = vmatpush.xpose.msra.mxu0 0.0
    %313 = vmatpush.xpose.msra.mxu0 %v297
    %314 = vmatpush.xpose.msra.mxu0 %v295
    %315 = vmatmul.f32.gmra.mxu0 %v291
    %v316 = vpop.f32.mrf.mxu0
    %v317 = vadd.f32 %v50, %v316
    %318 = vmatmul.f32.gmra.mxu0 %v293
    %v319 = vpop.f32.mrf.mxu0
    %v320 = vadd.f32 %v51, %v319
    %321 = vdwg.mxu0
    %322 = vrot.lane.b32.xlu0 %v213, 96
    %v323 = vpop.permute.xlu0 %322
    %324 = vrot.lane.b32.xlu0 %v215, 96
    %v325 = vpop.permute.xlu0 %324
    %v326 = vsel %vm220, %v213, 0
    %v328 = vsel %vm220, %v215, 0
    %v330 = vsel %vm220, %v323, 0
    %v332 = vsel %vm220, %v325, 0
    %334 = vmatpush.xpose.msra.mxu0 0.0
    %335 = vmatpush.xpose.msra.mxu0 0.0
    %336 = vmatpush.xpose.msra.mxu0 0.0
    %337 = vmatpush.xpose.msra.mxu0 0.0
    %338 = vmatpush.xpose.msra.mxu0 0.0
    %339 = vmatpush.xpose.msra.mxu0 0.0
    %340 = vmatpush.xpose.msra.mxu0 0.0
    %341 = vmatpush.xpose.msra.mxu0 0.0
    %342 = vmatpush.xpose.msra.mxu0 0.0
    %343 = vmatpush.xpose.msra.mxu0 0.0
    %344 = vmatpush.xpose.msra.mxu0 0.0
    %345 = vmatpush.xpose.msra.mxu0 0.0
    %346 = vmatpush.xpose.msra.mxu0 0.0
    %347 = vmatpush.xpose.msra.mxu0 0.0
    %348 = vmatpush.xpose.msra.mxu0 %v332
    %349 = vmatpush.xpose.msra.mxu0 %v330
    %350 = vmatmul.f32.gmra.mxu0 %v326
    %v351 = vpop.f32.mrf.mxu0
    %v352 = vadd.f32 %v50, %v351
    %353 = vmatmul.f32.gmra.mxu0 %v328
    %v354 = vpop.f32.mrf.mxu0
    %v355 = vadd.f32 %v51, %v354
    %356 = vdwg.mxu0
    %v357 = vsel %vm83, %v247, -inf
    %358 = vmax.xlane.f32.xlu0 %v357
    %v359 = vpop.xlane.xlu0 %358
    %v360 = vsel %vm83, %v250, -inf
    %361 = vmax.xlane.f32.xlu0 %v360
    %v362 = vpop.xlane.xlu0 %361
    %v363 = vsel %vm83, %v282, -inf
    %364 = vmax.xlane.f32.xlu0 %v363
    %v365 = vpop.xlane.xlu0 %364
    %v366 = vsel %vm83, %v285, -inf
    %367 = vmax.xlane.f32.xlu0 %v366
    %v368 = vpop.xlane.xlu0 %367
    %v369 = vsel %vm83, %v317, -inf
    %370 = vmax.xlane.f32.xlu0 %v369
    %v371 = vpop.xlane.xlu0 %370
    %v372 = vsel %vm83, %v320, -inf
    %373 = vmax.xlane.f32.xlu0 %v372
    %v374 = vpop.xlane.xlu0 %373
    %v375 = vsel %vm83, %v352, -inf
    %376 = vmax.xlane.f32.xlu0 %v375
    %v377 = vpop.xlane.xlu0 %376
    %v378 = vsel %vm83, %v355, -inf
    %379 = vmax.xlane.f32.xlu0 %v378
    %v380 = vpop.xlane.xlu0 %379
    %v381 = vsub.f32 %v247, %v359
    %v382 = vsub.f32 %v250, %v362
    %v383 = vsub.f32 %v282, %v365
    %v384 = vsub.f32 %v285, %v368
    %v385 = vsub.f32 %v317, %v371
    %v386 = vsub.f32 %v320, %v374
    %v387 = vsub.f32 %v352, %v377
    %v388 = vsub.f32 %v355, %v380
    %v389 = vmul.f32 %v381, 1.442695
    %v390 = vpow.pop %v389
    %v391 = vmul.f32 %v382, 1.442695
    %v392 = vpow.pop %v391
    %v393 = vmul.f32 %v383, 1.442695
    %v394 = vpow.pop %v393
    %v395 = vmul.f32 %v384, 1.442695
    %v396 = vpow.pop %v395
    %v397 = vmul.f32 %v385, 1.442695
    %v398 = vpow.pop %v397
    %v399 = vmul.f32 %v386, 1.442695
    %v400 = vpow.pop %v399
    %v401 = vmul.f32 %v387, 1.442695
    %v402 = vpow.pop %v401
    %v403 = vmul.f32 %v388, 1.442695
    %v404 = vpow.pop %v403
    %v405 = vsel %vm83, %v390, 0.0
    %406 = vadd.xlane.f32.xlu0 %v405
    %v407 = vpop.xlane.xlu0 %406
    %v408 = vsel %vm83, %v392, 0.0
    %409 = vadd.xlane.f32.xlu0 %v408
    %v410 = vpop.xlane.xlu0 %409
    %v411 = vsel %vm83, %v394, 0.0
    %412 = vadd.xlane.f32.xlu0 %v411
    %v413 = vpop.xlane.xlu0 %412
    %v414 = vsel %vm83, %v396, 0.0
    %415 = vadd.xlane.f32.xlu0 %v414
    %v416 = vpop.xlane.xlu0 %415
    %v417 = vsel %vm83, %v398, 0.0
    %418 = vadd.xlane.f32.xlu0 %v417
    %v419 = vpop.xlane.xlu0 %418
    %v420 = vsel %vm83, %v400, 0.0
    %421 = vadd.xlane.f32.xlu0 %v420
    %v422 = vpop.xlane.xlu0 %421
    %v423 = vsel %vm83, %v402, 0.0
    %424 = vadd.xlane.f32.xlu0 %v423
    %v425 = vpop.xlane.xlu0 %424
    %v426 = vsel %vm83, %v404, 0.0
    %427 = vadd.xlane.f32.xlu0 %v426
    %v428 = vpop.xlane.xlu0 %427
    %v429 = vrcp.pop %v407
    %v430 = vrcp.pop %v410
    %v431 = vrcp.pop %v413
    %v432 = vrcp.pop %v416
    %v433 = vrcp.pop %v419
    %v434 = vrcp.pop %v422
    %v435 = vrcp.pop %v425
    %v436 = vrcp.pop %v428
    %v437 = vmul.f32 %v390, %v429
    %v438 = vmul.f32 %v392, %v430
    %v439 = vmul.f32 %v394, %v431
    %v440 = vmul.f32 %v396, %v432
    %v441 = vmul.f32 %v398, %v433
    %v442 = vmul.f32 %v400, %v434
    %v443 = vmul.f32 %v402, %v435
    %v444 = vmul.f32 %v404, %v436
    %445 = vrot.lane.b32.xlu0 %v193, 64
    %v446 = vpop.permute.xlu0 %445
    %447 = vrot.lane.b32.xlu0 %v195, 64
    %v448 = vpop.permute.xlu0 %447
    %v452 = vsel %vm83, %v437, 0
    %v455 = vsel %vm83, %v438, 0
    %457 = vmatpush.msra.mxu0 0.0
    %458 = vmatpush.msra.mxu0 0.0
    %459 = vmatpush.msra.mxu0 0.0
    %460 = vmatpush.msra.mxu0 0.0
    %461 = vmatpush.msra.mxu0 0.0
    %462 = vmatpush.msra.mxu0 0.0
    %463 = vmatpush.msra.mxu0 0.0
    %464 = vmatpush.msra.mxu0 0.0
    %465 = vmatpush.msra.mxu0 0.0
    %466 = vmatpush.msra.mxu0 0.0
    %467 = vmatpush.msra.mxu0 0.0
    %468 = vmatpush.msra.mxu0 0.0
    %469 = vmatpush.msra.mxu0 0.0
    %470 = vmatpush.msra.mxu0 0.0
    %471 = vmatpush.msra.mxu0 %v448
    %472 = vmatpush.msra.mxu0 %v446
    %473 = vmatmul.f32.gmra.mxu0 %v452
    %v474 = vpop.f32.mrf.mxu0
    %v475 = vadd.f32 0.0, %v474
    %476 = vmatmul.f32.gmra.mxu0 %v455
    %v477 = vpop.f32.mrf.mxu0
    %v478 = vadd.f32 0.0, %v477
    %479 = vdwg.mxu0
    %480 = vrot.lane.b32.xlu0 %v205, 64
    %v481 = vpop.permute.xlu0 %480
    %482 = vrot.lane.b32.xlu0 %v207, 64
    %v483 = vpop.permute.xlu0 %482
    %v487 = vsel %vm83, %v439, 0
    %v490 = vsel %vm83, %v440, 0
    %492 = vmatpush.msra.mxu0 0.0
    %493 = vmatpush.msra.mxu0 0.0
    %494 = vmatpush.msra.mxu0 0.0
    %495 = vmatpush.msra.mxu0 0.0
    %496 = vmatpush.msra.mxu0 0.0
    %497 = vmatpush.msra.mxu0 0.0
    %498 = vmatpush.msra.mxu0 0.0
    %499 = vmatpush.msra.mxu0 0.0
    %500 = vmatpush.msra.mxu0 0.0
    %501 = vmatpush.msra.mxu0 0.0
    %502 = vmatpush.msra.mxu0 0.0
    %503 = vmatpush.msra.mxu0 0.0
    %504 = vmatpush.msra.mxu0 0.0
    %505 = vmatpush.msra.mxu0 0.0
    %506 = vmatpush.msra.mxu0 %v483
    %507 = vmatpush.msra.mxu0 %v481
    %508 = vmatmul.f32.gmra.mxu0 %v487
    %v509 = vpop.f32.mrf.mxu0
    %v510 = vadd.f32 0.0, %v509
    %511 = vmatmul.f32.gmra.mxu0 %v490
    %v512 = vpop.f32.mrf.mxu0
    %v513 = vadd.f32 0.0, %v512
    %514 = vdwg.mxu0
    %515 = vrot.lane.b32.xlu0 %v209, 64
    %v516 = vpop.permute.xlu0 %515
    %517 = vrot.lane.b32.xlu0 %v211, 64
    %v518 = vpop.permute.xlu0 %517
    %v522 = vsel %vm83, %v441, 0
    %v525 = vsel %vm83, %v442, 0
    %527 = vmatpush.msra.mxu0 0.0
    %528 = vmatpush.msra.mxu0 0.0
    %529 = vmatpush.msra.mxu0 0.0
    %530 = vmatpush.msra.mxu0 0.0
    %531 = vmatpush.msra.mxu0 0.0
    %532 = vmatpush.msra.mxu0 0.0
    %533 = vmatpush.msra.mxu0 0.0
    %534 = vmatpush.msra.mxu0 0.0
    %535 = vmatpush.msra.mxu0 0.0
    %536 = vmatpush.msra.mxu0 0.0
    %537 = vmatpush.msra.mxu0 0.0
    %538 = vmatpush.msra.mxu0 0.0
    %539 = vmatpush.msra.mxu0 0.0
    %540 = vmatpush.msra.mxu0 0.0
    %541 = vmatpush.msra.mxu0 %v518
    %542 = vmatpush.msra.mxu0 %v516
    %543 = vmatmul.f32.gmra.mxu0 %v522
    %v544 = vpop.f32.mrf.mxu0
    %v545 = vadd.f32 0.0, %v544
    %546 = vmatmul.f32.gmra.mxu0 %v525
    %v547 = vpop.f32.mrf.mxu0
    %v548 = vadd.f32 0.0, %v547
    %549 = vdwg.mxu0
    %550 = vrot.lane.b32.xlu0 %v213, 64
    %v551 = vpop.permute.xlu0 %550
    %552 = vrot.lane.b32.xlu0 %v215, 64
    %v553 = vpop.permute.xlu0 %552
    %v557 = vsel %vm83, %v443, 0
    %v560 = vsel %vm83, %v444, 0
    %562 = vmatpush.msra.mxu0 0.0
    %563 = vmatpush.msra.mxu0 0.0
    %564 = vmatpush.msra.mxu0 0.0
    %565 = vmatpush.msra.mxu0 0.0
    %566 = vmatpush.msra.mxu0 0.0
    %567 = vmatpush.msra.mxu0 0.0
    %568 = vmatpush.msra.mxu0 0.0
    %569 = vmatpush.msra.mxu0 0.0
    %570 = vmatpush.msra.mxu0 0.0
    %571 = vmatpush.msra.mxu0 0.0
    %572 = vmatpush.msra.mxu0 0.0
    %573 = vmatpush.msra.mxu0 0.0
    %574 = vmatpush.msra.mxu0 0.0
    %575 = vmatpush.msra.mxu0 0.0
    %576 = vmatpush.msra.mxu0 %v553
    %577 = vmatpush.msra.mxu0 %v551
    %578 = vmatmul.f32.gmra.mxu0 %v557
    %v579 = vpop.f32.mrf.mxu0
    %v580 = vadd.f32 0.0, %v579
    %581 = vmatmul.f32.gmra.mxu0 %v560
    %v582 = vpop.f32.mrf.mxu0
    %v583 = vadd.f32 0.0, %v582
    %584 = vdwg.mxu0
    %587 = vrot.lane.b32.xlu0 %v510, 8
    %v588 = vpop.permute.xlu0 %587
    %589 = vrot.lane.b32.xlu0 %v513, 8
    %v590 = vpop.permute.xlu0 %589
    %595 = vrot.lane.b32.xlu0 %v545, 16
    %v596 = vpop.permute.xlu0 %595
    %597 = vrot.lane.b32.xlu0 %v548, 16
    %v598 = vpop.permute.xlu0 %597
    %603 = vrot.lane.b32.xlu0 %v580, 24
    %v604 = vpop.permute.xlu0 %603
    %605 = vrot.lane.b32.xlu0 %v583, 24
    %v606 = vpop.permute.xlu0 %605
    %v609 = vsel %vm220, %v475, %v588
    %v610 = vsel %vm220, %v478, %v590
    %v611 = vsel %vm83, %v609, %v596
    %v612 = vsel %vm83, %v610, %v598
    %vm613 = vcmask 195584
    %v614 = vsel %vm613, %v611, %v604
    %v615 = vsel %vm613, %v612, %v606
    %v616 = vpack.c.bf16 %v615, %v614
    %v617 = vperm.slane %v201, 0
    %v622 = vunpack.c.l.b16 %v197
    %v623 = vunpack.c.l.b16 %v198
    %v624 = vunpack.c.l.b16 %v199
    %v625 = vunpack.c.l.b16 %v200
    %v626 = vpack.c.b16 %v623, %v622
    %v627 = vpack.c.b16 %v625, %v624
    %v631 = vsel %vm103, %v616, 0
    %633 = vmatpush.bf16.msra.mxu0 0
    %634 = vmatpush.bf16.msra.mxu0 0
    %635 = vmatpush.bf16.msra.mxu0 0
    %636 = vmatpush.bf16.msra.mxu0 0
    %637 = vmatpush.bf16.msra.mxu0 0
    %638 = vmatpush.bf16.msra.mxu0 0
    %639 = vmatpush.bf16.msra.mxu0 %v627
    %640 = vmatpush.bf16.msra.mxu0 %v626
    %641 = vmatmul.bf16.gmra.mxu0 %v631
    %v642 = vpop.f32.mrf.mxu0
    %v643 = vadd.f32 %v617, %v642
    %v644 = vpop.f32.mrf.mxu0
    %v645 = vadd.f32 %v617, %v644
    %646 = vdwg.mxu0
    %v647 = vadd.f32 %v97, %v643
    %v648 = vadd.f32 %v99, %v645
    %v649 = vld [vmem:[%s8 + $0x6] sm:$0x1]
    %v650 = vld [vmem:[%s8 + $0x7] sm:$0x1]
    %v651 = vsel %vm103, %v647, 0.0
    %652 = vadd.xlane.f32.xlu0 %v651
    %v653 = vpop.xlane.xlu0 %652
    %v654 = vsel %vm103, %v648, 0.0
    %655 = vadd.xlane.f32.xlu0 %v654
    %v656 = vpop.xlane.xlu0 %655
    %v657 = vmul.f32 %v653, %v116
    %v658 = vmul.f32 %v656, %v116
    %v659 = vsub.f32 %v647, %v657
    %v660 = vsub.f32 %v648, %v658
    %v661 = vmul.f32 %v659, %v659
    %v662 = vmul.f32 %v660, %v660
    %v663 = vsel %vm103, %v661, 0.0
    %664 = vadd.xlane.f32.xlu0 %v663
    %v665 = vpop.xlane.xlu0 %664
    %v666 = vsel %vm103, %v662, 0.0
    %667 = vadd.xlane.f32.xlu0 %v666
    %v668 = vpop.xlane.xlu0 %667
    %v669 = vmul.f32 %v665, %v116
    %v670 = vmul.f32 %v668, %v116
    %v671 = vadd.f32 %v669, 1e-06
    %v672 = vadd.f32 %v670, 1e-06
    %v673 = vrsqrt.pop %v671
    %v674 = vmul.f32 %v673, %v671
    %v675 = vmul.f32 %v674, %v673
    %v676 = vmul.f32 0.5, %v675
    %v677 = vsub.f32 1.5, %v676
    %v678 = vmul.f32 %v673, %v677
    %vm679 = vweird.f32 %v671
    %vm680 = vweird.f32 %v673
    %vm681 = vmor %vm679, %vm680
    %v682 = vsel %vm681, %v673, %v678
    %v683 = vrsqrt.pop %v672
    %v684 = vmul.f32 %v683, %v672
    %v685 = vmul.f32 %v684, %v683
    %v686 = vmul.f32 0.5, %v685
    %v687 = vsub.f32 1.5, %v686
    %v688 = vmul.f32 %v683, %v687
    %vm689 = vweird.f32 %v672
    %vm690 = vweird.f32 %v683
    %vm691 = vmor %vm689, %vm690
    %v692 = vsel %vm691, %v683, %v688
    %v693 = vmul.f32 %v659, %v682
    %v694 = vmul.f32 %v660, %v692
    %v695 = vperm.slane %v649, 0
    %v696 = vmul.f32 %v693, %v695
    %v697 = vmul.f32 %v694, %v695
    %v698 = vperm.slane %v650, 0
    %v699 = vadd.f32 %v696, %v698
    %v700 = vadd.f32 %v697, %v698
    %v701 = vld [vmem:[#allocation2 + $0x20] sm:$0xf]
    %v702 = vld [vmem:[#allocation2 + $0x24] sm:$0xf]
    %v703 = vld [vmem:[#allocation2 + $0x28] sm:$0xf]
    %v704 = vld [vmem:[#allocation2 + $0x2c] sm:$0xf]
    %v705 = vpack.c.bf16 %v700, %v699
    %v706 = vld [vmem:[%s8 + $0x2] sm:$0x1]
    %v707 = vperm.slane %v706, 0
    %v712 = vunpack.c.l.b16 %v701
    %v713 = vunpack.c.l.b16 %v702
    %v714 = vunpack.c.l.b16 %v703
    %v715 = vunpack.c.l.b16 %v704
    %v716 = vpack.c.b16 %v713, %v712
    %v717 = vpack.c.b16 %v715, %v714
    %v721 = vsel %vm103, %v705, 0
    %723 = vmatpush.bf16.msra.mxu0 0
    %724 = vmatpush.bf16.msra.mxu0 0
    %725 = vmatpush.bf16.msra.mxu0 0
    %726 = vmatpush.bf16.msra.mxu0 0
    %727 = vmatpush.bf16.msra.mxu0 0
    %728 = vmatpush.bf16.msra.mxu0 0
    %729 = vmatpush.bf16.msra.mxu0 %v717
    %730 = vmatpush.bf16.msra.mxu0 %v716
    %731 = vmatmul.bf16.gmra.mxu0 %v721
    %v732 = vpop.f32.mrf.mxu0
    %v733 = vadd.f32 %v707, %v732
    %v734 = vpop.f32.mrf.mxu0
    %v735 = vadd.f32 %v707, %v734
    %736 = vdwg.mxu0
    %v737 = vmax.f32 %v733, 0.0
    %v738 = vmax.f32 %v735, 0.0
    %v739 = vld [vmem:[#allocation2 + $0x30] sm:$0xf]
    %v740 = vld [vmem:[#allocation2 + $0x34] sm:$0xf]
    %v741 = vld [vmem:[#allocation2 + $0x38] sm:$0xf]
    %v742 = vld [vmem:[#allocation2 + $0x3c] sm:$0xf]
    %v743 = vld [vmem:[#allocation2 + $0x40] sm:$0xf]
    %v744 = vld [vmem:[#allocation2 + $0x44] sm:$0xf]
    %v745 = vld [vmem:[#allocation2 + $0x48] sm:$0xf]
    %v746 = vld [vmem:[#allocation2 + $0x4c] sm:$0xf]
    %v747 = vpack.c.bf16 %v738, %v737
    %v756 = vunpack.c.l.b16 %v739
    %v757 = vunpack.c.l.b16 %v740
    %v758 = vunpack.c.l.b16 %v741
    %v759 = vunpack.c.l.b16 %v742
    %v760 = vunpack.c.l.b16 %v743
    %v761 = vunpack.c.l.b16 %v744
    %v762 = vunpack.c.l.b16 %v745
    %v763 = vunpack.c.l.b16 %v746
    %v764 = vpack.c.b16 %v757, %v756
    %v765 = vpack.c.b16 %v759, %v758
    %v766 = vpack.c.b16 %v761, %v760
    %v767 = vpack.c.b16 %v763, %v762
    %vm772 = vcmask 523264
    %v774 = vsel %vm772, %v747, 0
    %776 = vmatpush.bf16.msra.mxu0 0
    %777 = vmatpush.bf16.msra.mxu0 0
    %778 = vmatpush.bf16.msra.mxu0 0
    %779 = vmatpush.bf16.msra.mxu0 0
    %780 = vmatpush.bf16.msra.mxu0 %v767
    %781 = vmatpush.bf16.msra.mxu0 %v766
    %782 = vmatpush.bf16.msra.mxu0 %v765
    %783 = vmatpush.bf16.msra.mxu0 %v764
    %784 = vmatmul.bf16.gmra.mxu0 %v774
    %v785 = vpop.f32.mrf.mxu0
    %v786 = vadd.f32 0.0, %v785
    %v787 = vpop.f32.mrf.mxu0
    %v788 = vadd.f32 0.0, %v787
    %789 = vdwg.mxu0
    %v790 = vadd.f32 %v647, %v786
    %v791 = vadd.f32 %v648, %v788
    %v792 = vld [vmem:[%s8 + $0x3] sm:$0x1]
    %v793 = vperm.slane %v792, 0
    %v794 = vadd.f32 %v790, %v793
    %v795 = vadd.f32 %v791, %v793
    %v796 = vld [vmem:[%s8 + $0xc] sm:$0x1]
    %v797 = vld [vmem:[%s8 + $0xd] sm:$0x1]
    %v798 = vsel %vm103, %v794, 0.0
    %799 = vadd.xlane.f32.xlu0 %v798
    %v800 = vpop.xlane.xlu0 %799
    %v801 = vsel %vm103, %v795, 0.0
    %802 = vadd.xlane.f32.xlu0 %v801
    %v803 = vpop.xlane.xlu0 %802
    %v804 = vmul.f32 %v800, %v116
    %v805 = vmul.f32 %v803, %v116
    %v806 = vsub.f32 %v794, %v804
    %v807 = vsub.f32 %v795, %v805
    %v808 = vmul.f32 %v806, %v806
    %v809 = vmul.f32 %v807, %v807
    %v810 = vsel %vm103, %v808, 0.0
    %811 = vadd.xlane.f32.xlu0 %v810
    %v812 = vpop.xlane.xlu0 %811
    %v813 = vsel %vm103, %v809, 0.0
    %814 = vadd.xlane.f32.xlu0 %v813
    %v815 = vpop.xlane.xlu0 %814
    %v816 = vmul.f32 %v812, %v116
    %v817 = vmul.f32 %v815, %v116
    %v818 = vadd.f32 %v816, 1e-06
    %v819 = vadd.f32 %v817, 1e-06
    %v820 = vrsqrt.pop %v818
    %v821 = vmul.f32 %v820, %v818
    %v822 = vmul.f32 %v821, %v820
    %v823 = vmul.f32 0.5, %v822
    %v824 = vsub.f32 1.5, %v823
    %v825 = vmul.f32 %v820, %v824
    %vm826 = vweird.f32 %v818
    %vm827 = vweird.f32 %v820
    %vm828 = vmor %vm826, %vm827
    %v829 = vsel %vm828, %v820, %v825
    %v830 = vrsqrt.pop %v819
    %v831 = vmul.f32 %v830, %v819
    %v832 = vmul.f32 %v831, %v830
    %v833 = vmul.f32 0.5, %v832
    %v834 = vsub.f32 1.5, %v833
    %v835 = vmul.f32 %v830, %v834
    %vm836 = vweird.f32 %v819
    %vm837 = vweird.f32 %v830
    %vm838 = vmor %vm836, %vm837
    %v839 = vsel %vm838, %v830, %v835
    %v840 = vmul.f32 %v806, %v829
    %v841 = vmul.f32 %v807, %v839
    %v842 = vperm.slane %v796, 0
    %v843 = vmul.f32 %v840, %v842
    %v844 = vmul.f32 %v841, %v842
    %v845 = vperm.slane %v797, 0
    %v846 = vadd.f32 %v843, %v845
    %v847 = vadd.f32 %v844, %v845
    %v848 = vld [vmem:[#allocation2 + $0x50] sm:$0xf]
    %v849 = vld [vmem:[#allocation2 + $0x54] sm:$0xf]
    %v850 = vld [vmem:[#allocation2 + $0x58] sm:$0xf]
    %v851 = vld [vmem:[#allocation2 + $0x5c] sm:$0xf]
    %v852 = vpack.c.bf16 %v847, %v846
    %v853 = vld [vmem:[%s8 + $0x8] sm:$0x1]
    %v854 = vperm.slane %v853, 0
    %v859 = vunpack.c.l.b16 %v848
    %v860 = vunpack.c.l.b16 %v849
    %v861 = vunpack.c.l.b16 %v850
    %v862 = vunpack.c.l.b16 %v851
    %v863 = vpack.c.b16 %v860, %v859
    %v864 = vpack.c.b16 %v862, %v861
    %v868 = vsel %vm103, %v852, 0
    %870 = vmatpush.bf16.msra.mxu0 0
    %871 = vmatpush.bf16.msra.mxu0 0
    %872 = vmatpush.bf16.msra.mxu0 0
    %873 = vmatpush.bf16.msra.mxu0 0
    %874 = vmatpush.bf16.msra.mxu0 0
    %875 = vmatpush.bf16.msra.mxu0 0
    %876 = vmatpush.bf16.msra.mxu0 %v864
    %877 = vmatpush.bf16.msra.mxu0 %v863
    %878 = vmatmul.bf16.gmra.mxu0 %v868
    %v879 = vpop.f32.mrf.mxu0
    %v880 = vadd.f32 %v854, %v879
    %v881 = vpop.f32.mrf.mxu0
    %v882 = vadd.f32 %v854, %v881
    %883 = vdwg.mxu0
    %v884 = vld [vmem:[#allocation2 + $0x60] sm:$0xf]
    %v885 = vld [vmem:[#allocation2 + $0x64] sm:$0xf]
    %v886 = vld [vmem:[#allocation2 + $0x68] sm:$0xf]
    %v887 = vld [vmem:[#allocation2 + $0x6c] sm:$0xf]
    %v888 = vld [vmem:[%s8 + $0x9] sm:$0x1]
    %891 = vrot.lane.b32.xlu0 %v880, 120
    %v892 = vpop.permute.xlu0 %891
    %893 = vrot.lane.b32.xlu0 %v882, 120
    %v894 = vpop.permute.xlu0 %893
    %895 = vrot.lane.b32.xlu0 %v880, 112
    %v896 = vpop.permute.xlu0 %895
    %897 = vrot.lane.b32.xlu0 %v882, 112
    %v898 = vpop.permute.xlu0 %897
    %899 = vrot.lane.b32.xlu0 %v880, 104
    %v900 = vpop.permute.xlu0 %899
    %901 = vrot.lane.b32.xlu0 %v882, 104
    %v902 = vpop.permute.xlu0 %901
    %903 = vrot.lane.b32.xlu0 %v880, 96
    %v904 = vpop.permute.xlu0 %903
    %905 = vrot.lane.b32.xlu0 %v882, 96
    %v906 = vpop.permute.xlu0 %905
    %v907 = vsel %vm220, %v880, 0
    %v909 = vsel %vm220, %v882, 0
    %v911 = vsel %vm220, %v904, 0
    %v913 = vsel %vm220, %v906, 0
    %915 = vmatpush.xpose.msra.mxu0 0.0
    %916 = vmatpush.xpose.msra.mxu0 0.0
    %917 = vmatpush.xpose.msra.mxu0 0.0
    %918 = vmatpush.xpose.msra.mxu0 0.0
    %919 = vmatpush.xpose.msra.mxu0 0.0
    %920 = vmatpush.xpose.msra.mxu0 0.0
    %921 = vmatpush.xpose.msra.mxu0 0.0
    %922 = vmatpush.xpose.msra.mxu0 0.0
    %923 = vmatpush.xpose.msra.mxu0 0.0
    %924 = vmatpush.xpose.msra.mxu0 0.0
    %925 = vmatpush.xpose.msra.mxu0 0.0
    %926 = vmatpush.xpose.msra.mxu0 0.0
    %927 = vmatpush.xpose.msra.mxu0 0.0
    %928 = vmatpush.xpose.msra.mxu0 0.0
    %929 = vmatpush.xpose.msra.mxu0 %v913
    %930 = vmatpush.xpose.msra.mxu0 %v911
    %931 = vmatmul.f32.gmra.mxu0 %v907
    %v932 = vpop.f32.mrf.mxu0
    %v933 = vadd.f32 %v50, %v932
    %934 = vmatmul.f32.gmra.mxu0 %v909
    %v935 = vpop.f32.mrf.mxu0
    %v936 = vadd.f32 %v51, %v935
    %937 = vdwg.mxu0
    %938 = vrot.lane.b32.xlu0 %v892, 96
    %v939 = vpop.permute.xlu0 %938
    %940 = vrot.lane.b32.xlu0 %v894, 96
    %v941 = vpop.permute.xlu0 %940
    %v942 = vsel %vm220, %v892, 0
    %v944 = vsel %vm220, %v894, 0
    %v946 = vsel %vm220, %v939, 0
    %v948 = vsel %vm220, %v941, 0
    %950 = vmatpush.xpose.msra.mxu0 0.0
    %951 = vmatpush.xpose.msra.mxu0 0.0
    %952 = vmatpush.xpose.msra.mxu0 0.0
    %953 = vmatpush.xpose.msra.mxu0 0.0
    %954 = vmatpush.xpose.msra.mxu0 0.0
    %955 = vmatpush.xpose.msra.mxu0 0.0
    %956 = vmatpush.xpose.msra.mxu0 0.0
    %957 = vmatpush.xpose.msra.mxu0 0.0
    %958 = vmatpush.xpose.msra.mxu0 0.0
    %959 = vmatpush.xpose.msra.mxu0 0.0
    %960 = vmatpush.xpose.msra.mxu0 0.0
    %961 = vmatpush.xpose.msra.mxu0 0.0
    %962 = vmatpush.xpose.msra.mxu0 0.0
    %963 = vmatpush.xpose.msra.mxu0 0.0
    %964 = vmatpush.xpose.msra.mxu0 %v948
    %965 = vmatpush.xpose.msra.mxu0 %v946
    %966 = vmatmul.f32.gmra.mxu0 %v942
    %v967 = vpop.f32.mrf.mxu0
    %v968 = vadd.f32 %v50, %v967
    %969 = vmatmul.f32.gmra.mxu0 %v944
    %v970 = vpop.f32.mrf.mxu0
    %v971 = vadd.f32 %v51, %v970
    %972 = vdwg.mxu0
    %973 = vrot.lane.b32.xlu0 %v896, 96
    %v974 = vpop.permute.xlu0 %973
    %975 = vrot.lane.b32.xlu0 %v898, 96
    %v976 = vpop.permute.xlu0 %975
    %v977 = vsel %vm220, %v896, 0
    %v979 = vsel %vm220, %v898, 0
    %v981 = vsel %vm220, %v974, 0
    %v983 = vsel %vm220, %v976, 0
    %985 = vmatpush.xpose.msra.mxu0 0.0
    %986 = vmatpush.xpose.msra.mxu0 0.0
    %987 = vmatpush.xpose.msra.mxu0 0.0
    %988 = vmatpush.xpose.msra.mxu0 0.0
    %989 = vmatpush.xpose.msra.mxu0 0.0
    %990 = vmatpush.xpose.msra.mxu0 0.0
    %991 = vmatpush.xpose.msra.mxu0 0.0
    %992 = vmatpush.xpose.msra.mxu0 0.0
    %993 = vmatpush.xpose.msra.mxu0 0.0
    %994 = vmatpush.xpose.msra.mxu0 0.0
    %995 = vmatpush.xpose.msra.mxu0 0.0
    %996 = vmatpush.xpose.msra.mxu0 0.0
    %997 = vmatpush.xpose.msra.mxu0 0.0
    %998 = vmatpush.xpose.msra.mxu0 0.0
    %999 = vmatpush.xpose.msra.mxu0 %v983
    %1000 = vmatpush.xpose.msra.mxu0 %v981
    %1001 = vmatmul.f32.gmra.mxu0 %v977
    %v1002 = vpop.f32.mrf.mxu0
    %v1003 = vadd.f32 %v50, %v1002
    %1004 = vmatmul.f32.gmra.mxu0 %v979
    %v1005 = vpop.f32.mrf.mxu0
    %v1006 = vadd.f32 %v51, %v1005
    %1007 = vdwg.mxu0
    %1008 = vrot.lane.b32.xlu0 %v900, 96
    %v1009 = vpop.permute.xlu0 %1008
    %1010 = vrot.lane.b32.xlu0 %v902, 96
    %v1011 = vpop.permute.xlu0 %1010
    %v1012 = vsel %vm220, %v900, 0
    %v1014 = vsel %vm220, %v902, 0
    %v1016 = vsel %vm220, %v1009, 0
    %v1018 = vsel %vm220, %v1011, 0
    %1020 = vmatpush.xpose.msra.mxu0 0.0
    %1021 = vmatpush.xpose.msra.mxu0 0.0
    %1022 = vmatpush.xpose.msra.mxu0 0.0
    %1023 = vmatpush.xpose.msra.mxu0 0.0
    %1024 = vmatpush.xpose.msra.mxu0 0.0
    %1025 = vmatpush.xpose.msra.mxu0 0.0
    %1026 = vmatpush.xpose.msra.mxu0 0.0
    %1027 = vmatpush.xpose.msra.mxu0 0.0
    %1028 = vmatpush.xpose.msra.mxu0 0.0
    %1029 = vmatpush.xpose.msra.mxu0 0.0
    %1030 = vmatpush.xpose.msra.mxu0 0.0
    %1031 = vmatpush.xpose.msra.mxu0 0.0
    %1032 = vmatpush.xpose.msra.mxu0 0.0
    %1033 = vmatpush.xpose.msra.mxu0 0.0
    %1034 = vmatpush.xpose.msra.mxu0 %v1018
    %1035 = vmatpush.xpose.msra.mxu0 %v1016
    %1036 = vmatmul.f32.gmra.mxu0 %v1012
    %v1037 = vpop.f32.mrf.mxu0
    %v1038 = vadd.f32 %v50, %v1037
    %1039 = vmatmul.f32.gmra.mxu0 %v1014
    %v1040 = vpop.f32.mrf.mxu0
    %v1041 = vadd.f32 %v51, %v1040
    %1042 = vdwg.mxu0
    %v1043 = vsel %vm83, %v933, -inf
    %1044 = vmax.xlane.f32.xlu0 %v1043
    %v1045 = vpop.xlane.xlu0 %1044
    %v1046 = vsel %vm83, %v936, -inf
    %1047 = vmax.xlane.f32.xlu0 %v1046
    %v1048 = vpop.xlane.xlu0 %1047
    %v1049 = vsel %vm83, %v968, -inf
    %1050 = vmax.xlane.f32.xlu0 %v1049
    %v1051 = vpop.xlane.xlu0 %1050
    %v1052 = vsel %vm83, %v971, -inf
    %1053 = vmax.xlane.f32.xlu0 %v1052
    %v1054 = vpop.xlane.xlu0 %1053
    %v1055 = vsel %vm83, %v1003, -inf
    %1056 = vmax.xlane.f32.xlu0 %v1055
    %v1057 = vpop.xlane.xlu0 %1056
    %v1058 = vsel %vm83, %v1006, -inf
    %1059 = vmax.xlane.f32.xlu0 %v1058
    %v1060 = vpop.xlane.xlu0 %1059
    %v1061 = vsel %vm83, %v1038, -inf
    %1062 = vmax.xlane.f32.xlu0 %v1061
    %v1063 = vpop.xlane.xlu0 %1062
    %v1064 = vsel %vm83, %v1041, -inf
    %1065 = vmax.xlane.f32.xlu0 %v1064
    %v1066 = vpop.xlane.xlu0 %1065
    %v1067 = vsub.f32 %v933, %v1045
    %v1068 = vsub.f32 %v936, %v1048
    %v1069 = vsub.f32 %v968, %v1051
    %v1070 = vsub.f32 %v971, %v1054
    %v1071 = vsub.f32 %v1003, %v1057
    %v1072 = vsub.f32 %v1006, %v1060
    %v1073 = vsub.f32 %v1038, %v1063
    %v1074 = vsub.f32 %v1041, %v1066
    %v1075 = vmul.f32 %v1067, 1.442695
    %v1076 = vpow.pop %v1075
    %v1077 = vmul.f32 %v1068, 1.442695
    %v1078 = vpow.pop %v1077
    %v1079 = vmul.f32 %v1069, 1.442695
    %v1080 = vpow.pop %v1079
    %v1081 = vmul.f32 %v1070, 1.442695
    %v1082 = vpow.pop %v1081
    %v1083 = vmul.f32 %v1071, 1.442695
    %v1084 = vpow.pop %v1083
    %v1085 = vmul.f32 %v1072, 1.442695
    %v1086 = vpow.pop %v1085
    %v1087 = vmul.f32 %v1073, 1.442695
    %v1088 = vpow.pop %v1087
    %v1089 = vmul.f32 %v1074, 1.442695
    %v1090 = vpow.pop %v1089
    %v1091 = vsel %vm83, %v1076, 0.0
    %1092 = vadd.xlane.f32.xlu0 %v1091
    %v1093 = vpop.xlane.xlu0 %1092
    %v1094 = vsel %vm83, %v1078, 0.0
    %1095 = vadd.xlane.f32.xlu0 %v1094
    %v1096 = vpop.xlane.xlu0 %1095
    %v1097 = vsel %vm83, %v1080, 0.0
    %1098 = vadd.xlane.f32.xlu0 %v1097
    %v1099 = vpop.xlane.xlu0 %1098
    %v1100 = vsel %vm83, %v1082, 0.0
    %1101 = vadd.xlane.f32.xlu0 %v1100
    %v1102 = vpop.xlane.xlu0 %1101
    %v1103 = vsel %vm83, %v1084, 0.0
    %1104 = vadd.xlane.f32.xlu0 %v1103
    %v1105 = vpop.xlane.xlu0 %1104
    %v1106 = vsel %vm83, %v1086, 0.0
    %1107 = vadd.xlane.f32.xlu0 %v1106
    %v1108 = vpop.xlane.xlu0 %1107
    %v1109 = vsel %vm83, %v1088, 0.0
    %1110 = vadd.xlane.f32.xlu0 %v1109
    %v1111 = vpop.xlane.xlu0 %1110
    %v1112 = vsel %vm83, %v1090, 0.0
    %1113 = vadd.xlane.f32.xlu0 %v1112
    %v1114 = vpop.xlane.xlu0 %1113
    %v1115 = vrcp.pop %v1093
    %v1116 = vrcp.pop %v1096
    %v1117 = vrcp.pop %v1099
    %v1118 = vrcp.pop %v1102
    %v1119 = vrcp.pop %v1105
    %v1120 = vrcp.pop %v1108
    %v1121 = vrcp.pop %v1111
    %v1122 = vrcp.pop %v1114
    %v1123 = vmul.f32 %v1076, %v1115
    %v1124 = vmul.f32 %v1078, %v1116
    %v1125 = vmul.f32 %v1080, %v1117
    %v1126 = vmul.f32 %v1082, %v1118
    %v1127 = vmul.f32 %v1084, %v1119
    %v1128 = vmul.f32 %v1086, %v1120
    %v1129 = vmul.f32 %v1088, %v1121
    %v1130 = vmul.f32 %v1090, %v1122
    %1131 = vrot.lane.b32.xlu0 %v880, 64
    %v1132 = vpop.permute.xlu0 %1131
    %1133 = vrot.lane.b32.xlu0 %v882, 64
    %v1134 = vpop.permute.xlu0 %1133
    %v1138 = vsel %vm83, %v1123, 0
    %v1141 = vsel %vm83, %v1124, 0
    %1143 = vmatpush.msra.mxu0 0.0
    %1144 = vmatpush.msra.mxu0 0.0
    %1145 = vmatpush.msra.mxu0 0.0
    %1146 = vmatpush.msra.mxu0 0.0
    %1147 = vmatpush.msra.mxu0 0.0
    %1148 = vmatpush.msra.mxu0 0.0
    %1149 = vmatpush.msra.mxu0 0.0
    %1150 = vmatpush.msra.mxu0 0.0
    %1151 = vmatpush.msra.mxu0 0.0
    %1152 = vmatpush.msra.mxu0 0.0
    %1153 = vmatpush.msra.mxu0 0.0
    %1154 = vmatpush.msra.mxu0 0.0
    %1155 = vmatpush.msra.mxu0 0.0
    %1156 = vmatpush.msra.mxu0 0.0
    %1157 = vmatpush.msra.mxu0 %v1134
    %1158 = vmatpush.msra.mxu0 %v1132
    %1159 = vmatmul.f32.gmra.mxu0 %v1138
    %v1160 = vpop.f32.mrf.mxu0
    %v1161 = vadd.f32 0.0, %v1160
    %1162 = vmatmul.f32.gmra.mxu0 %v1141
    %v1163 = vpop.f32.mrf.mxu0
    %v1164 = vadd.f32 0.0, %v1163
    %1165 = vdwg.mxu0
    %1166 = vrot.lane.b32.xlu0 %v892, 64
    %v1167 = vpop.permute.xlu0 %1166
    %1168 = vrot.lane.b32.xlu0 %v894, 64
    %v1169 = vpop.permute.xlu0 %1168
    %v1173 = vsel %vm83, %v1125, 0
    %v1176 = vsel %vm83, %v1126, 0
    %1178 = vmatpush.msra.mxu0 0.0
    %1179 = vmatpush.msra.mxu0 0.0
    %1180 = vmatpush.msra.mxu0 0.0
    %1181 = vmatpush.msra.mxu0 0.0
    %1182 = vmatpush.msra.mxu0 0.0
    %1183 = vmatpush.msra.mxu0 0.0
    %1184 = vmatpush.msra.mxu0 0.0
    %1185 = vmatpush.msra.mxu0 0.0
    %1186 = vmatpush.msra.mxu0 0.0
    %1187 = vmatpush.msra.mxu0 0.0
    %1188 = vmatpush.msra.mxu0 0.0
    %1189 = vmatpush.msra.mxu0 0.0
    %1190 = vmatpush.msra.mxu0 0.0
    %1191 = vmatpush.msra.mxu0 0.0
    %1192 = vmatpush.msra.mxu0 %v1169
    %1193 = vmatpush.msra.mxu0 %v1167
    %1194 = vmatmul.f32.gmra.mxu0 %v1173
    %v1195 = vpop.f32.mrf.mxu0
    %v1196 = vadd.f32 0.0, %v1195
    %1197 = vmatmul.f32.gmra.mxu0 %v1176
    %v1198 = vpop.f32.mrf.mxu0
    %v1199 = vadd.f32 0.0, %v1198
    %1200 = vdwg.mxu0
    %1201 = vrot.lane.b32.xlu0 %v896, 64
    %v1202 = vpop.permute.xlu0 %1201
    %1203 = vrot.lane.b32.xlu0 %v898, 64
    %v1204 = vpop.permute.xlu0 %1203
    %v1208 = vsel %vm83, %v1127, 0
    %v1211 = vsel %vm83, %v1128, 0
    %1213 = vmatpush.msra.mxu0 0.0
    %1214 = vmatpush.msra.mxu0 0.0
    %1215 = vmatpush.msra.mxu0 0.0
    %1216 = vmatpush.msra.mxu0 0.0
    %1217 = vmatpush.msra.mxu0 0.0
    %1218 = vmatpush.msra.mxu0 0.0
    %1219 = vmatpush.msra.mxu0 0.0
    %1220 = vmatpush.msra.mxu0 0.0
    %1221 = vmatpush.msra.mxu0 0.0
    %1222 = vmatpush.msra.mxu0 0.0
    %1223 = vmatpush.msra.mxu0 0.0
    %1224 = vmatpush.msra.mxu0 0.0
    %1225 = vmatpush.msra.mxu0 0.0
    %1226 = vmatpush.msra.mxu0 0.0
    %1227 = vmatpush.msra.mxu0 %v1204
    %1228 = vmatpush.msra.mxu0 %v1202
    %1229 = vmatmul.f32.gmra.mxu0 %v1208
    %v1230 = vpop.f32.mrf.mxu0
    %v1231 = vadd.f32 0.0, %v1230
    %1232 = vmatmul.f32.gmra.mxu0 %v1211
    %v1233 = vpop.f32.mrf.mxu0
    %v1234 = vadd.f32 0.0, %v1233
    %1235 = vdwg.mxu0
    %1236 = vrot.lane.b32.xlu0 %v900, 64
    %v1237 = vpop.permute.xlu0 %1236
    %1238 = vrot.lane.b32.xlu0 %v902, 64
    %v1239 = vpop.permute.xlu0 %1238
    %v1243 = vsel %vm83, %v1129, 0
    %v1246 = vsel %vm83, %v1130, 0
    %1248 = vmatpush.msra.mxu0 0.0
    %1249 = vmatpush.msra.mxu0 0.0
    %1250 = vmatpush.msra.mxu0 0.0
    %1251 = vmatpush.msra.mxu0 0.0
    %1252 = vmatpush.msra.mxu0 0.0
    %1253 = vmatpush.msra.mxu0 0.0
    %1254 = vmatpush.msra.mxu0 0.0
    %1255 = vmatpush.msra.mxu0 0.0
    %1256 = vmatpush.msra.mxu0 0.0
    %1257 = vmatpush.msra.mxu0 0.0
    %1258 = vmatpush.msra.mxu0 0.0
    %1259 = vmatpush.msra.mxu0 0.0
    %1260 = vmatpush.msra.mxu0 0.0
    %1261 = vmatpush.msra.mxu0 0.0
    %1262 = vmatpush.msra.mxu0 %v1239
    %1263 = vmatpush.msra.mxu0 %v1237
    %1264 = vmatmul.f32.gmra.mxu0 %v1243
    %v1265 = vpop.f32.mrf.mxu0
    %v1266 = vadd.f32 0.0, %v1265
    %1267 = vmatmul.f32.gmra.mxu0 %v1246
    %v1268 = vpop.f32.mrf.mxu0
    %v1269 = vadd.f32 0.0, %v1268
    %1270 = vdwg.mxu0
    %1273 = vrot.lane.b32.xlu0 %v1196, 8
    %v1274 = vpop.permute.xlu0 %1273
    %1275 = vrot.lane.b32.xlu0 %v1199, 8
    %v1276 = vpop.permute.xlu0 %1275
    %1281 = vrot.lane.b32.xlu0 %v1231, 16
    %v1282 = vpop.permute.xlu0 %1281
    %1283 = vrot.lane.b32.xlu0 %v1234, 16
    %v1284 = vpop.permute.xlu0 %1283
    %1289 = vrot.lane.b32.xlu0 %v1266, 24
    %v1290 = vpop.permute.xlu0 %1289
    %1291 = vrot.lane.b32.xlu0 %v1269, 24
    %v1292 = vpop.permute.xlu0 %1291
    %v1295 = vsel %vm220, %v1161, %v1274
    %v1296 = vsel %vm220, %v1164, %v1276
    %v1297 = vsel %vm83, %v1295, %v1282
    %v1298 = vsel %vm83, %v1296, %v1284
    %v1299 = vsel %vm613, %v1297, %v1290
    %v1300 = vsel %vm613, %v1298, %v1292
    %v1301 = vpack.c.bf16 %v1300, %v1299
    %v1302 = vperm.slane %v888, 0
    %v1307 = vunpack.c.l.b16 %v884
    %v1308 = vunpack.c.l.b16 %v885
    %v1309 = vunpack.c.l.b16 %v886
    %v1310 = vunpack.c.l.b16 %v887
    %v1311 = vpack.c.b16 %v1308, %v1307
    %v1312 = vpack.c.b16 %v1310, %v1309
    %v1316 = vsel %vm103, %v1301, 0
    %1318 = vmatpush.bf16.msra.mxu0 0
    %1319 = vmatpush.bf16.msra.mxu0 0
    %1320 = vmatpush.bf16.msra.mxu0 0
    %1321 = vmatpush.bf16.msra.mxu0 0
    %1322 = vmatpush.bf16.msra.mxu0 0
    %1323 = vmatpush.bf16.msra.mxu0 0
    %1324 = vmatpush.bf16.msra.mxu0 %v1312
    %1325 = vmatpush.bf16.msra.mxu0 %v1311
    %1326 = vmatmul.bf16.gmra.mxu0 %v1316
    %v1327 = vpop.f32.mrf.mxu0
    %v1328 = vadd.f32 %v1302, %v1327
    %v1329 = vpop.f32.mrf.mxu0
    %v1330 = vadd.f32 %v1302, %v1329
    %1331 = vdwg.mxu0
    %v1332 = vadd.f32 %v794, %v1328
    %v1333 = vadd.f32 %v795, %v1330
    %v1334 = vld [vmem:[%s8 + $0xe] sm:$0x1]
    %v1335 = vld [vmem:[%s8 + $0xf] sm:$0x1]
    %v1336 = vsel %vm103, %v1332, 0.0
    %1337 = vadd.xlane.f32.xlu0 %v1336
    %v1338 = vpop.xlane.xlu0 %1337
    %v1339 = vsel %vm103, %v1333, 0.0
    %1340 = vadd.xlane.f32.xlu0 %v1339
    %v1341 = vpop.xlane.xlu0 %1340
    %v1342 = vmul.f32 %v1338, %v116
    %v1343 = vmul.f32 %v1341, %v116
    %v1344 = vsub.f32 %v1332, %v1342
    %v1345 = vsub.f32 %v1333, %v1343
    %v1346 = vmul.f32 %v1344, %v1344
    %v1347 = vmul.f32 %v1345, %v1345
    %v1348 = vsel %vm103, %v1346, 0.0
    %1349 = vadd.xlane.f32.xlu0 %v1348
    %v1350 = vpop.xlane.xlu0 %1349
    %v1351 = vsel %vm103, %v1347, 0.0
    %1352 = vadd.xlane.f32.xlu0 %v1351
    %v1353 = vpop.xlane.xlu0 %1352
    %v1354 = vmul.f32 %v1350, %v116
    %v1355 = vmul.f32 %v1353, %v116
    %v1356 = vadd.f32 %v1354, 1e-06
    %v1357 = vadd.f32 %v1355, 1e-06
    %v1358 = vrsqrt.pop %v1356
    %v1359 = vmul.f32 %v1358, %v1356
    %v1360 = vmul.f32 %v1359, %v1358
    %v1361 = vmul.f32 0.5, %v1360
    %v1362 = vsub.f32 1.5, %v1361
    %v1363 = vmul.f32 %v1358, %v1362
    %vm1364 = vweird.f32 %v1356
    %vm1365 = vweird.f32 %v1358
    %vm1366 = vmor %vm1364, %vm1365
    %v1367 = vsel %vm1366, %v1358, %v1363
    %v1368 = vrsqrt.pop %v1357
    %v1369 = vmul.f32 %v1368, %v1357
    %v1370 = vmul.f32 %v1369, %v1368
    %v1371 = vmul.f32 0.5, %v1370
    %v1372 = vsub.f32 1.5, %v1371
    %v1373 = vmul.f32 %v1368, %v1372
    %vm1374 = vweird.f32 %v1357
    %vm1375 = vweird.f32 %v1368
    %vm1376 = vmor %vm1374, %vm1375
    %v1377 = vsel %vm1376, %v1368, %v1373
    %v1378 = vmul.f32 %v1344, %v1367
    %v1379 = vmul.f32 %v1345, %v1377
    %v1380 = vperm.slane %v1334, 0
    %v1381 = vmul.f32 %v1378, %v1380
    %v1382 = vmul.f32 %v1379, %v1380
    %v1383 = vperm.slane %v1335, 0
    %v1384 = vadd.f32 %v1381, %v1383
    %v1385 = vadd.f32 %v1382, %v1383
    %v1386 = vld [vmem:[#allocation2 + $0x70] sm:$0xf]
    %v1387 = vld [vmem:[#allocation2 + $0x74] sm:$0xf]
    %v1388 = vld [vmem:[#allocation2 + $0x78] sm:$0xf]
    %v1389 = vld [vmem:[#allocation2 + $0x7c] sm:$0xf]
    %v1390 = vpack.c.bf16 %v1385, %v1384
    %v1391 = vld [vmem:[%s8 + $0xa] sm:$0x1]
    %v1392 = vperm.slane %v1391, 0
    %v1397 = vunpack.c.l.b16 %v1386
    %v1398 = vunpack.c.l.b16 %v1387
    %v1399 = vunpack.c.l.b16 %v1388
    %v1400 = vunpack.c.l.b16 %v1389
    %v1401 = vpack.c.b16 %v1398, %v1397
    %v1402 = vpack.c.b16 %v1400, %v1399
    %v1406 = vsel %vm103, %v1390, 0
    %1408 = vmatpush.bf16.msra.mxu0 0
    %1409 = vmatpush.bf16.msra.mxu0 0
    %1410 = vmatpush.bf16.msra.mxu0 0
    %1411 = vmatpush.bf16.msra.mxu0 0
    %1412 = vmatpush.bf16.msra.mxu0 0
    %1413 = vmatpush.bf16.msra.mxu0 0
    %1414 = vmatpush.bf16.msra.mxu0 %v1402
    %1415 = vmatpush.bf16.msra.mxu0 %v1401
    %1416 = vmatmul.bf16.gmra.mxu0 %v1406
    %v1417 = vpop.f32.mrf.mxu0
    %v1418 = vadd.f32 %v1392, %v1417
    %v1419 = vpop.f32.mrf.mxu0
    %v1420 = vadd.f32 %v1392, %v1419
    %1421 = vdwg.mxu0
    %v1422 = vmax.f32 %v1418, 0.0
    %v1423 = vmax.f32 %v1420, 0.0
    %v1424 = vld [vmem:[#allocation2 + $0x80] sm:$0xf]
    %v1425 = vld [vmem:[#allocation2 + $0x84] sm:$0xf]
    %v1426 = vld [vmem:[#allocation2 + $0x88] sm:$0xf]
    %v1427 = vld [vmem:[#allocation2 + $0x8c] sm:$0xf]
    %v1428 = vld [vmem:[#allocation2 + $0x90] sm:$0xf]
    %v1429 = vld [vmem:[#allocation2 + $0x94] sm:$0xf]
    %v1430 = vld [vmem:[#allocation2 + $0x98] sm:$0xf]
    %v1431 = vld [vmem:[#allocation2 + $0x9c] sm:$0xf]
    %v1432 = vpack.c.bf16 %v1423, %v1422
    %v1441 = vunpack.c.l.b16 %v1424
    %v1442 = vunpack.c.l.b16 %v1425
    %v1443 = vunpack.c.l.b16 %v1426
    %v1444 = vunpack.c.l.b16 %v1427
    %v1445 = vunpack.c.l.b16 %v1428
    %v1446 = vunpack.c.l.b16 %v1429
    %v1447 = vunpack.c.l.b16 %v1430
    %v1448 = vunpack.c.l.b16 %v1431
    %v1449 = vpack.c.b16 %v1442, %v1441
    %v1450 = vpack.c.b16 %v1444, %v1443
    %v1451 = vpack.c.b16 %v1446, %v1445
    %v1452 = vpack.c.b16 %v1448, %v1447
    %v1458 = vsel %vm772, %v1432, 0
    %1460 = vmatpush.bf16.msra.mxu0 0
    %1461 = vmatpush.bf16.msra.mxu0 0
    %1462 = vmatpush.bf16.msra.mxu0 0
    %1463 = vmatpush.bf16.msra.mxu0 0
    %1464 = vmatpush.bf16.msra.mxu0 %v1452
    %1465 = vmatpush.bf16.msra.mxu0 %v1451
    %1466 = vmatpush.bf16.msra.mxu0 %v1450
    %1467 = vmatpush.bf16.msra.mxu0 %v1449
    %1468 = vmatmul.bf16.gmra.mxu0 %v1458
    %v1469 = vpop.f32.mrf.mxu0
    %v1470 = vadd.f32 0.0, %v1469
    %v1471 = vpop.f32.mrf.mxu0
    %v1472 = vadd.f32 0.0, %v1471
    %1473 = vdwg.mxu0
    %v1474 = vadd.f32 %v1332, %v1470
    %v1475 = vadd.f32 %v1333, %v1472
    %v1476 = vld [vmem:[%s8 + $0xb] sm:$0x1]
    %v1477 = vperm.slane %v1476, 0
    %v1478 = vadd.f32 %v1474, %v1477
    %v1479 = vadd.f32 %v1475, %v1477
    %v1480 = vld [vmem:[%s8 + $0x2a] sm:$0x1]
    %v1481 = vld [vmem:[%s8 + $0x2b] sm:$0x1]
    %v1482 = vsel %vm103, %v1478, 0.0
    %1483 = vadd.xlane.f32.xlu0 %v1482
    %v1484 = vpop.xlane.xlu0 %1483
    %v1485 = vsel %vm103, %v1479, 0.0
    %1486 = vadd.xlane.f32.xlu0 %v1485
    %v1487 = vpop.xlane.xlu0 %1486
    %v1488 = vmul.f32 %v1484, %v116
    %v1489 = vmul.f32 %v1487, %v116
    %v1490 = vsub.f32 %v1478, %v1488
    %v1491 = vsub.f32 %v1479, %v1489
    %v1492 = vmul.f32 %v1490, %v1490
    %v1493 = vmul.f32 %v1491, %v1491
    %v1494 = vsel %vm103, %v1492, 0.0
    %1495 = vadd.xlane.f32.xlu0 %v1494
    %v1496 = vpop.xlane.xlu0 %1495
    %v1497 = vsel %vm103, %v1493, 0.0
    %1498 = vadd.xlane.f32.xlu0 %v1497
    %v1499 = vpop.xlane.xlu0 %1498
    %v1500 = vmul.f32 %v1496, %v116
    %v1501 = vmul.f32 %v1499, %v116
    %v1502 = vadd.f32 %v1500, 1e-06
    %v1503 = vadd.f32 %v1501, 1e-06
    %v1504 = vrsqrt.pop %v1502
    %v1505 = vmul.f32 %v1504, %v1502
    %v1506 = vmul.f32 %v1505, %v1504
    %v1507 = vmul.f32 0.5, %v1506
    %v1508 = vsub.f32 1.5, %v1507
    %v1509 = vmul.f32 %v1504, %v1508
    %vm1510 = vweird.f32 %v1502
    %vm1511 = vweird.f32 %v1504
    %vm1512 = vmor %vm1510, %vm1511
    %v1513 = vsel %vm1512, %v1504, %v1509
    %v1514 = vrsqrt.pop %v1503
    %v1515 = vmul.f32 %v1514, %v1503
    %v1516 = vmul.f32 %v1515, %v1514
    %v1517 = vmul.f32 0.5, %v1516
    %v1518 = vsub.f32 1.5, %v1517
    %v1519 = vmul.f32 %v1514, %v1518
    %vm1520 = vweird.f32 %v1503
    %vm1521 = vweird.f32 %v1514
    %vm1522 = vmor %vm1520, %vm1521
    %v1523 = vsel %vm1522, %v1514, %v1519
    %v1524 = vmul.f32 %v1490, %v1513
    %v1525 = vmul.f32 %v1491, %v1523
    %v1526 = vperm.slane %v1480, 0
    %v1527 = vmul.f32 %v1524, %v1526
    %v1528 = vmul.f32 %v1525, %v1526
    %v1529 = vperm.slane %v1481, 0
    %v1530 = vadd.f32 %v1527, %v1529
    %v1531 = vadd.f32 %v1528, %v1529
    %v1532 = vld [vmem:[%s1] sm:$0xff]
    %v1533 = vld [vmem:[%s1 + $0x8] sm:$0xff]
    %1534 = vset.pattern.permute.xlu0 0
    %1535 = vperm.xlu0 %1534, %v1532
    %v1536 = vpop.permute.xlu0 %1535
    %1537 = vset.pattern.permute.xlu0 0
    %1538 = vperm.xlu0 %1537, %v1533
    %v1539 = vpop.permute.xlu0 %1538
    %vm1540 = vcmp.eq.s32.totalorder %v59, %v1536
    %vm1541 = vcmp.eq.s32.totalorder %v59, %v1539
    %v1542 = vld [vmem:[#allocation2 + $0x1a8] sm:$0xf]
    %v1543 = vld [vmem:[#allocation2 + $0x1ac] sm:$0xf]
    %v1544 = vsel %vm1540, 1, 0
    %v1545 = vsel %vm1541, 1, 0
    %v1546 = vcvt.s32.f32 %v1544
    %v1547 = vcvt.s32.f32 %v1545
    %v1548 = vpack.c.bf16 %v1547, %v1546
    %v1549 = vld [vmem:[%s3] sm:$0xff]
    %v1550 = vld [vmem:[%s3 + $0x8] sm:$0xff]
    %v1553 = vunpack.c.l.b16 %v1542
    %v1554 = vunpack.c.l.b16 %v1543
    %v1555 = vpack.c.b16 %v1554, %v1553
    %v1558 = vsel %vm83, %v1548, 0
    %1560 = vmatpush.bf16.msra.mxu0 0
    %1561 = vmatpush.bf16.msra.mxu0 0
    %1562 = vmatpush.bf16.msra.mxu0 0
    %1563 = vmatpush.bf16.msra.mxu0 0
    %1564 = vmatpush.bf16.msra.mxu0 0
    %1565 = vmatpush.bf16.msra.mxu0 0
    %1566 = vmatpush.bf16.msra.mxu0 0
    %1567 = vmatpush.bf16.msra.mxu0 %v1555
    %1568 = vmatmul.bf16.gmra.mxu0 %v1558
    %v1569 = vpop.f32.mrf.mxu0
    %v1570 = vadd.f32 %v1549, %v1569
    %v1571 = vpop.f32.mrf.mxu0
    %v1572 = vadd.f32 %v1550, %v1571
    %1573 = vdwg.mxu0
    %v1574 = vld [vmem:[%s8 + $0x17] sm:$0x1]
    %v1575 = vld [vmem:[%s8 + $0x18] sm:$0x1]
    %v1576 = vsel %vm103, %v1570, 0.0
    %1577 = vadd.xlane.f32.xlu0 %v1576
    %v1578 = vpop.xlane.xlu0 %1577
    %v1579 = vsel %vm103, %v1572, 0.0
    %1580 = vadd.xlane.f32.xlu0 %v1579
    %v1581 = vpop.xlane.xlu0 %1580
    %v1582 = vmul.f32 %v1578, %v116
    %v1583 = vmul.f32 %v1581, %v116
    %v1584 = vsub.f32 %v1570, %v1582
    %v1585 = vsub.f32 %v1572, %v1583
    %v1586 = vmul.f32 %v1584, %v1584
    %v1587 = vmul.f32 %v1585, %v1585
    %v1588 = vsel %vm103, %v1586, 0.0
    %1589 = vadd.xlane.f32.xlu0 %v1588
    %v1590 = vpop.xlane.xlu0 %1589
    %v1591 = vsel %vm103, %v1587, 0.0
    %1592 = vadd.xlane.f32.xlu0 %v1591
    %v1593 = vpop.xlane.xlu0 %1592
    %v1594 = vmul.f32 %v1590, %v116
    %v1595 = vmul.f32 %v1593, %v116
    %v1596 = vadd.f32 %v1594, 1e-06
    %v1597 = vadd.f32 %v1595, 1e-06
    %v1598 = vrsqrt.pop %v1596
    %v1599 = vmul.f32 %v1598, %v1596
    %v1600 = vmul.f32 %v1599, %v1598
    %v1601 = vmul.f32 0.5, %v1600
    %v1602 = vsub.f32 1.5, %v1601
    %v1603 = vmul.f32 %v1598, %v1602
    %vm1604 = vweird.f32 %v1596
    %vm1605 = vweird.f32 %v1598
    %vm1606 = vmor %vm1604, %vm1605
    %v1607 = vsel %vm1606, %v1598, %v1603
    %v1608 = vrsqrt.pop %v1597
    %v1609 = vmul.f32 %v1608, %v1597
    %v1610 = vmul.f32 %v1609, %v1608
    %v1611 = vmul.f32 0.5, %v1610
    %v1612 = vsub.f32 1.5, %v1611
    %v1613 = vmul.f32 %v1608, %v1612
    %vm1614 = vweird.f32 %v1597
    %vm1615 = vweird.f32 %v1608
    %vm1616 = vmor %vm1614, %vm1615
    %v1617 = vsel %vm1616, %v1608, %v1613
    %v1618 = vmul.f32 %v1584, %v1607
    %v1619 = vmul.f32 %v1585, %v1617
    %v1620 = vperm.slane %v1574, 0
    %v1621 = vmul.f32 %v1618, %v1620
    %v1622 = vmul.f32 %v1619, %v1620
    %v1623 = vperm.slane %v1575, 0
    %v1624 = vadd.f32 %v1621, %v1623
    %v1625 = vadd.f32 %v1622, %v1623
    %v1626 = vld [vmem:[#allocation2 + $0xa0] sm:$0xf]
    %v1627 = vld [vmem:[#allocation2 + $0xa4] sm:$0xf]
    %v1628 = vld [vmem:[#allocation2 + $0xa8] sm:$0xf]
    %v1629 = vld [vmem:[#allocation2 + $0xac] sm:$0xf]
    %v1630 = vpack.c.bf16 %v1625, %v1624
    %v1631 = vld [vmem:[%s8 + $0x10] sm:$0x1]
    %v1632 = vperm.slane %v1631, 0
    %v1637 = vunpack.c.l.b16 %v1626
    %v1638 = vunpack.c.l.b16 %v1627
    %v1639 = vunpack.c.l.b16 %v1628
    %v1640 = vunpack.c.l.b16 %v1629
    %v1641 = vpack.c.b16 %v1638, %v1637
    %v1642 = vpack.c.b16 %v1640, %v1639
    %v1646 = vsel %vm103, %v1630, 0
    %1648 = vmatpush.bf16.msra.mxu0 0
    %1649 = vmatpush.bf16.msra.mxu0 0
    %1650 = vmatpush.bf16.msra.mxu0 0
    %1651 = vmatpush.bf16.msra.mxu0 0
    %1652 = vmatpush.bf16.msra.mxu0 0
    %1653 = vmatpush.bf16.msra.mxu0 0
    %1654 = vmatpush.bf16.msra.mxu0 %v1642
    %1655 = vmatpush.bf16.msra.mxu0 %v1641
    %1656 = vmatmul.bf16.gmra.mxu0 %v1646
    %v1657 = vpop.f32.mrf.mxu0
    %v1658 = vadd.f32 %v1632, %v1657
    %v1659 = vpop.f32.mrf.mxu0
    %v1660 = vadd.f32 %v1632, %v1659
    %1661 = vdwg.mxu0
    %v1662 = vld [vmem:[#allocation2 + $0xb0] sm:$0xf]
    %v1663 = vld [vmem:[#allocation2 + $0xb4] sm:$0xf]
    %v1664 = vld [vmem:[#allocation2 + $0xb8] sm:$0xf]
    %v1665 = vld [vmem:[#allocation2 + $0xbc] sm:$0xf]
    %v1666 = vld [vmem:[%s8 + $0x11] sm:$0x1]
    %1669 = vrot.lane.b32.xlu0 %v1658, 120
    %v1670 = vpop.permute.xlu0 %1669
    %1671 = vrot.lane.b32.xlu0 %v1660, 120
    %v1672 = vpop.permute.xlu0 %1671
    %1673 = vrot.lane.b32.xlu0 %v1658, 112
    %v1674 = vpop.permute.xlu0 %1673
    %1675 = vrot.lane.b32.xlu0 %v1660, 112
    %v1676 = vpop.permute.xlu0 %1675
    %1677 = vrot.lane.b32.xlu0 %v1658, 104
    %v1678 = vpop.permute.xlu0 %1677
    %1679 = vrot.lane.b32.xlu0 %v1660, 104
    %v1680 = vpop.permute.xlu0 %1679
    %1681 = vrot.lane.b32.xlu0 %v1658, 96
    %v1682 = vpop.permute.xlu0 %1681
    %1683 = vrot.lane.b32.xlu0 %v1660, 96
    %v1684 = vpop.permute.xlu0 %1683
    %v1685 = vsel %vm220, %v1658, 0
    %v1687 = vsel %vm220, %v1660, 0
    %v1689 = vsel %vm220, %v1682, 0
    %v1691 = vsel %vm220, %v1684, 0
    %1693 = vmatpush.xpose.msra.mxu0 0.0
    %1694 = vmatpush.xpose.msra.mxu0 0.0
    %1695 = vmatpush.xpose.msra.mxu0 0.0
    %1696 = vmatpush.xpose.msra.mxu0 0.0
    %1697 = vmatpush.xpose.msra.mxu0 0.0
    %1698 = vmatpush.xpose.msra.mxu0 0.0
    %1699 = vmatpush.xpose.msra.mxu0 0.0
    %1700 = vmatpush.xpose.msra.mxu0 0.0
    %1701 = vmatpush.xpose.msra.mxu0 0.0
    %1702 = vmatpush.xpose.msra.mxu0 0.0
    %1703 = vmatpush.xpose.msra.mxu0 0.0
    %1704 = vmatpush.xpose.msra.mxu0 0.0
    %1705 = vmatpush.xpose.msra.mxu0 0.0
    %1706 = vmatpush.xpose.msra.mxu0 0.0
    %1707 = vmatpush.xpose.msra.mxu0 %v1691
    %1708 = vmatpush.xpose.msra.mxu0 %v1689
    %1709 = vmatmul.f32.gmra.mxu0 %v1685
    %v1710 = vpop.f32.mrf.mxu0
    %v1711 = vadd.f32 %v52, %v1710
    %1712 = vmatmul.f32.gmra.mxu0 %v1687
    %v1713 = vpop.f32.mrf.mxu0
    %v1714 = vadd.f32 %v53, %v1713
    %1715 = vdwg.mxu0
    %1716 = vrot.lane.b32.xlu0 %v1670, 96
    %v1717 = vpop.permute.xlu0 %1716
    %1718 = vrot.lane.b32.xlu0 %v1672, 96
    %v1719 = vpop.permute.xlu0 %1718
    %v1720 = vsel %vm220, %v1670, 0
    %v1722 = vsel %vm220, %v1672, 0
    %v1724 = vsel %vm220, %v1717, 0
    %v1726 = vsel %vm220, %v1719, 0
    %1728 = vmatpush.xpose.msra.mxu0 0.0
    %1729 = vmatpush.xpose.msra.mxu0 0.0
    %1730 = vmatpush.xpose.msra.mxu0 0.0
    %1731 = vmatpush.xpose.msra.mxu0 0.0
    %1732 = vmatpush.xpose.msra.mxu0 0.0
    %1733 = vmatpush.xpose.msra.mxu0 0.0
    %1734 = vmatpush.xpose.msra.mxu0 0.0
    %1735 = vmatpush.xpose.msra.mxu0 0.0
    %1736 = vmatpush.xpose.msra.mxu0 0.0
    %1737 = vmatpush.xpose.msra.mxu0 0.0
    %1738 = vmatpush.xpose.msra.mxu0 0.0
    %1739 = vmatpush.xpose.msra.mxu0 0.0
    %1740 = vmatpush.xpose.msra.mxu0 0.0
    %1741 = vmatpush.xpose.msra.mxu0 0.0
    %1742 = vmatpush.xpose.msra.mxu0 %v1726
    %1743 = vmatpush.xpose.msra.mxu0 %v1724
    %1744 = vmatmul.f32.gmra.mxu0 %v1720
    %v1745 = vpop.f32.mrf.mxu0
    %v1746 = vadd.f32 %v52, %v1745
    %1747 = vmatmul.f32.gmra.mxu0 %v1722
    %v1748 = vpop.f32.mrf.mxu0
    %v1749 = vadd.f32 %v53, %v1748
    %1750 = vdwg.mxu0
    %1751 = vrot.lane.b32.xlu0 %v1674, 96
    %v1752 = vpop.permute.xlu0 %1751
    %1753 = vrot.lane.b32.xlu0 %v1676, 96
    %v1754 = vpop.permute.xlu0 %1753
    %v1755 = vsel %vm220, %v1674, 0
    %v1757 = vsel %vm220, %v1676, 0
    %v1759 = vsel %vm220, %v1752, 0
    %v1761 = vsel %vm220, %v1754, 0
    %1763 = vmatpush.xpose.msra.mxu0 0.0
    %1764 = vmatpush.xpose.msra.mxu0 0.0
    %1765 = vmatpush.xpose.msra.mxu0 0.0
    %1766 = vmatpush.xpose.msra.mxu0 0.0
    %1767 = vmatpush.xpose.msra.mxu0 0.0
    %1768 = vmatpush.xpose.msra.mxu0 0.0
    %1769 = vmatpush.xpose.msra.mxu0 0.0
    %1770 = vmatpush.xpose.msra.mxu0 0.0
    %1771 = vmatpush.xpose.msra.mxu0 0.0
    %1772 = vmatpush.xpose.msra.mxu0 0.0
    %1773 = vmatpush.xpose.msra.mxu0 0.0
    %1774 = vmatpush.xpose.msra.mxu0 0.0
    %1775 = vmatpush.xpose.msra.mxu0 0.0
    %1776 = vmatpush.xpose.msra.mxu0 0.0
    %1777 = vmatpush.xpose.msra.mxu0 %v1761
    %1778 = vmatpush.xpose.msra.mxu0 %v1759
    %1779 = vmatmul.f32.gmra.mxu0 %v1755
    %v1780 = vpop.f32.mrf.mxu0
    %v1781 = vadd.f32 %v52, %v1780
    %1782 = vmatmul.f32.gmra.mxu0 %v1757
    %v1783 = vpop.f32.mrf.mxu0
    %v1784 = vadd.f32 %v53, %v1783
    %1785 = vdwg.mxu0
    %1786 = vrot.lane.b32.xlu0 %v1678, 96
    %v1787 = vpop.permute.xlu0 %1786
    %1788 = vrot.lane.b32.xlu0 %v1680, 96
    %v1789 = vpop.permute.xlu0 %1788
    %v1790 = vsel %vm220, %v1678, 0
    %v1792 = vsel %vm220, %v1680, 0
    %v1794 = vsel %vm220, %v1787, 0
    %v1796 = vsel %vm220, %v1789, 0
    %1798 = vmatpush.xpose.msra.mxu0 0.0
    %1799 = vmatpush.xpose.msra.mxu0 0.0
    %1800 = vmatpush.xpose.msra.mxu0 0.0
    %1801 = vmatpush.xpose.msra.mxu0 0.0
    %1802 = vmatpush.xpose.msra.mxu0 0.0
    %1803 = vmatpush.xpose.msra.mxu0 0.0
    %1804 = vmatpush.xpose.msra.mxu0 0.0
    %1805 = vmatpush.xpose.msra.mxu0 0.0
    %1806 = vmatpush.xpose.msra.mxu0 0.0
    %1807 = vmatpush.xpose.msra.mxu0 0.0
    %1808 = vmatpush.xpose.msra.mxu0 0.0
    %1809 = vmatpush.xpose.msra.mxu0 0.0
    %1810 = vmatpush.xpose.msra.mxu0 0.0
    %1811 = vmatpush.xpose.msra.mxu0 0.0
    %1812 = vmatpush.xpose.msra.mxu0 %v1796
    %1813 = vmatpush.xpose.msra.mxu0 %v1794
    %1814 = vmatmul.f32.gmra.mxu0 %v1790
    %v1815 = vpop.f32.mrf.mxu0
    %v1816 = vadd.f32 %v52, %v1815
    %1817 = vmatmul.f32.gmra.mxu0 %v1792
    %v1818 = vpop.f32.mrf.mxu0
    %v1819 = vadd.f32 %v53, %v1818
    %1820 = vdwg.mxu0
    %v1821 = vsel %vm83, %v1711, -inf
    %1822 = vmax.xlane.f32.xlu0 %v1821
    %v1823 = vpop.xlane.xlu0 %1822
    %v1824 = vsel %vm83, %v1714, -inf
    %1825 = vmax.xlane.f32.xlu0 %v1824
    %v1826 = vpop.xlane.xlu0 %1825
    %v1827 = vsel %vm83, %v1746, -inf
    %1828 = vmax.xlane.f32.xlu0 %v1827
    %v1829 = vpop.xlane.xlu0 %1828
    %v1830 = vsel %vm83, %v1749, -inf
    %1831 = vmax.xlane.f32.xlu0 %v1830
    %v1832 = vpop.xlane.xlu0 %1831
    %v1833 = vsel %vm83, %v1781, -inf
    %1834 = vmax.xlane.f32.xlu0 %v1833
    %v1835 = vpop.xlane.xlu0 %1834
    %v1836 = vsel %vm83, %v1784, -inf
    %1837 = vmax.xlane.f32.xlu0 %v1836
    %v1838 = vpop.xlane.xlu0 %1837
    %v1839 = vsel %vm83, %v1816, -inf
    %1840 = vmax.xlane.f32.xlu0 %v1839
    %v1841 = vpop.xlane.xlu0 %1840
    %v1842 = vsel %vm83, %v1819, -inf
    %1843 = vmax.xlane.f32.xlu0 %v1842
    %v1844 = vpop.xlane.xlu0 %1843
    %v1845 = vsub.f32 %v1711, %v1823
    %v1846 = vsub.f32 %v1714, %v1826
    %v1847 = vsub.f32 %v1746, %v1829
    %v1848 = vsub.f32 %v1749, %v1832
    %v1849 = vsub.f32 %v1781, %v1835
    %v1850 = vsub.f32 %v1784, %v1838
    %v1851 = vsub.f32 %v1816, %v1841
    %v1852 = vsub.f32 %v1819, %v1844
    %v1853 = vmul.f32 %v1845, 1.442695
    %v1854 = vpow.pop %v1853
    %v1855 = vmul.f32 %v1846, 1.442695
    %v1856 = vpow.pop %v1855
    %v1857 = vmul.f32 %v1847, 1.442695
    %v1858 = vpow.pop %v1857
    %v1859 = vmul.f32 %v1848, 1.442695
    %v1860 = vpow.pop %v1859
    %v1861 = vmul.f32 %v1849, 1.442695
    %v1862 = vpow.pop %v1861
    %v1863 = vmul.f32 %v1850, 1.442695
    %v1864 = vpow.pop %v1863
    %v1865 = vmul.f32 %v1851, 1.442695
    %v1866 = vpow.pop %v1865
    %v1867 = vmul.f32 %v1852, 1.442695
    %v1868 = vpow.pop %v1867
    %v1869 = vsel %vm83, %v1854, 0.0
    %1870 = vadd.xlane.f32.xlu0 %v1869
    %v1871 = vpop.xlane.xlu0 %1870
    %v1872 = vsel %vm83, %v1856, 0.0
    %1873 = vadd.xlane.f32.xlu0 %v1872
    %v1874 = vpop.xlane.xlu0 %1873
    %v1875 = vsel %vm83, %v1858, 0.0
    %1876 = vadd.xlane.f32.xlu0 %v1875
    %v1877 = vpop.xlane.xlu0 %1876
    %v1878 = vsel %vm83, %v1860, 0.0
    %1879 = vadd.xlane.f32.xlu0 %v1878
    %v1880 = vpop.xlane.xlu0 %1879
    %v1881 = vsel %vm83, %v1862, 0.0
    %1882 = vadd.xlane.f32.xlu0 %v1881
    %v1883 = vpop.xlane.xlu0 %1882
    %v1884 = vsel %vm83, %v1864, 0.0
    %1885 = vadd.xlane.f32.xlu0 %v1884
    %v1886 = vpop.xlane.xlu0 %1885
    %v1887 = vsel %vm83, %v1866, 0.0
    %1888 = vadd.xlane.f32.xlu0 %v1887
    %v1889 = vpop.xlane.xlu0 %1888
    %v1890 = vsel %vm83, %v1868, 0.0
    %1891 = vadd.xlane.f32.xlu0 %v1890
    %v1892 = vpop.xlane.xlu0 %1891
    %v1893 = vrcp.pop %v1871
    %v1894 = vrcp.pop %v1874
    %v1895 = vrcp.pop %v1877
    %v1896 = vrcp.pop %v1880
    %v1897 = vrcp.pop %v1883
    %v1898 = vrcp.pop %v1886
    %v1899 = vrcp.pop %v1889
    %v1900 = vrcp.pop %v1892
    %v1901 = vmul.f32 %v1854, %v1893
    %v1902 = vmul.f32 %v1856, %v1894
    %v1903 = vmul.f32 %v1858, %v1895
    %v1904 = vmul.f32 %v1860, %v1896
    %v1905 = vmul.f32 %v1862, %v1897
    %v1906 = vmul.f32 %v1864, %v1898
    %v1907 = vmul.f32 %v1866, %v1899
    %v1908 = vmul.f32 %v1868, %v1900
    %1909 = vrot.lane.b32.xlu0 %v1658, 64
    %v1910 = vpop.permute.xlu0 %1909
    %1911 = vrot.lane.b32.xlu0 %v1660, 64
    %v1912 = vpop.permute.xlu0 %1911
    %v1916 = vsel %vm83, %v1901, 0
    %v1919 = vsel %vm83, %v1902, 0
    %1921 = vmatpush.msra.mxu0 0.0
    %1922 = vmatpush.msra.mxu0 0.0
    %1923 = vmatpush.msra.mxu0 0.0
    %1924 = vmatpush.msra.mxu0 0.0
    %1925 = vmatpush.msra.mxu0 0.0
    %1926 = vmatpush.msra.mxu0 0.0
    %1927 = vmatpush.msra.mxu0 0.0
    %1928 = vmatpush.msra.mxu0 0.0
    %1929 = vmatpush.msra.mxu0 0.0
    %1930 = vmatpush.msra.mxu0 0.0
    %1931 = vmatpush.msra.mxu0 0.0
    %1932 = vmatpush.msra.mxu0 0.0
    %1933 = vmatpush.msra.mxu0 0.0
    %1934 = vmatpush.msra.mxu0 0.0
    %1935 = vmatpush.msra.mxu0 %v1912
    %1936 = vmatpush.msra.mxu0 %v1910
    %1937 = vmatmul.f32.gmra.mxu0 %v1916
    %v1938 = vpop.f32.mrf.mxu0
    %v1939 = vadd.f32 0.0, %v1938
    %1940 = vmatmul.f32.gmra.mxu0 %v1919
    %v1941 = vpop.f32.mrf.mxu0
    %v1942 = vadd.f32 0.0, %v1941
    %1943 = vdwg.mxu0
    %1944 = vrot.lane.b32.xlu0 %v1670, 64
    %v1945 = vpop.permute.xlu0 %1944
    %1946 = vrot.lane.b32.xlu0 %v1672, 64
    %v1947 = vpop.permute.xlu0 %1946
    %v1951 = vsel %vm83, %v1903, 0
    %v1954 = vsel %vm83, %v1904, 0
    %1956 = vmatpush.msra.mxu0 0.0
    %1957 = vmatpush.msra.mxu0 0.0
    %1958 = vmatpush.msra.mxu0 0.0
    %1959 = vmatpush.msra.mxu0 0.0
    %1960 = vmatpush.msra.mxu0 0.0
    %1961 = vmatpush.msra.mxu0 0.0
    %1962 = vmatpush.msra.mxu0 0.0
    %1963 = vmatpush.msra.mxu0 0.0
    %1964 = vmatpush.msra.mxu0 0.0
    %1965 = vmatpush.msra.mxu0 0.0
    %1966 = vmatpush.msra.mxu0 0.0
    %1967 = vmatpush.msra.mxu0 0.0
    %1968 = vmatpush.msra.mxu0 0.0
    %1969 = vmatpush.msra.mxu0 0.0
    %1970 = vmatpush.msra.mxu0 %v1947
    %1971 = vmatpush.msra.mxu0 %v1945
    %1972 = vmatmul.f32.gmra.mxu0 %v1951
    %v1973 = vpop.f32.mrf.mxu0
    %v1974 = vadd.f32 0.0, %v1973
    %1975 = vmatmul.f32.gmra.mxu0 %v1954
    %v1976 = vpop.f32.mrf.mxu0
    %v1977 = vadd.f32 0.0, %v1976
    %1978 = vdwg.mxu0
    %1979 = vrot.lane.b32.xlu0 %v1674, 64
    %v1980 = vpop.permute.xlu0 %1979
    %1981 = vrot.lane.b32.xlu0 %v1676, 64
    %v1982 = vpop.permute.xlu0 %1981
    %v1986 = vsel %vm83, %v1905, 0
    %v1989 = vsel %vm83, %v1906, 0
    %1991 = vmatpush.msra.mxu0 0.0
    %1992 = vmatpush.msra.mxu0 0.0
    %1993 = vmatpush.msra.mxu0 0.0
    %1994 = vmatpush.msra.mxu0 0.0
    %1995 = vmatpush.msra.mxu0 0.0
    %1996 = vmatpush.msra.mxu0 0.0
    %1997 = vmatpush.msra.mxu0 0.0
    %1998 = vmatpush.msra.mxu0 0.0
    %1999 = vmatpush.msra.mxu0 0.0
    %2000 = vmatpush.msra.mxu0 0.0
    %2001 = vmatpush.msra.mxu0 0.0
    %2002 = vmatpush.msra.mxu0 0.0
    %2003 = vmatpush.msra.mxu0 0.0
    %2004 = vmatpush.msra.mxu0 0.0
    %2005 = vmatpush.msra.mxu0 %v1982
    %2006 = vmatpush.msra.mxu0 %v1980
    %2007 = vmatmul.f32.gmra.mxu0 %v1986
    %v2008 = vpop.f32.mrf.mxu0
    %v2009 = vadd.f32 0.0, %v2008
    %2010 = vmatmul.f32.gmra.mxu0 %v1989
    %v2011 = vpop.f32.mrf.mxu0
    %v2012 = vadd.f32 0.0, %v2011
    %2013 = vdwg.mxu0
    %2014 = vrot.lane.b32.xlu0 %v1678, 64
    %v2015 = vpop.permute.xlu0 %2014
    %2016 = vrot.lane.b32.xlu0 %v1680, 64
    %v2017 = vpop.permute.xlu0 %2016
    %v2021 = vsel %vm83, %v1907, 0
    %v2024 = vsel %vm83, %v1908, 0
    %2026 = vmatpush.msra.mxu0 0.0
    %2027 = vmatpush.msra.mxu0 0.0
    %2028 = vmatpush.msra.mxu0 0.0
    %2029 = vmatpush.msra.mxu0 0.0
    %2030 = vmatpush.msra.mxu0 0.0
    %2031 = vmatpush.msra.mxu0 0.0
    %2032 = vmatpush.msra.mxu0 0.0
    %2033 = vmatpush.msra.mxu0 0.0
    %2034 = vmatpush.msra.mxu0 0.0
    %2035 = vmatpush.msra.mxu0 0.0
    %2036 = vmatpush.msra.mxu0 0.0
    %2037 = vmatpush.msra.mxu0 0.0
    %2038 = vmatpush.msra.mxu0 0.0
    %2039 = vmatpush.msra.mxu0 0.0
    %2040 = vmatpush.msra.mxu0 %v2017
    %2041 = vmatpush.msra.mxu0 %v2015
    %2042 = vmatmul.f32.gmra.mxu0 %v2021
    %v2043 = vpop.f32.mrf.mxu0
    %v2044 = vadd.f32 0.0, %v2043
    %2045 = vmatmul.f32.gmra.mxu0 %v2024
    %v2046 = vpop.f32.mrf.mxu0
    %v2047 = vadd.f32 0.0, %v2046
    %2048 = vdwg.mxu0
    %2051 = vrot.lane.b32.xlu0 %v1974, 8
    %v2052 = vpop.permute.xlu0 %2051
    %2053 = vrot.lane.b32.xlu0 %v1977, 8
    %v2054 = vpop.permute.xlu0 %2053
    %2059 = vrot.lane.b32.xlu0 %v2009, 16
    %v2060 = vpop.permute.xlu0 %2059
    %2061 = vrot.lane.b32.xlu0 %v2012, 16
    %v2062 = vpop.permute.xlu0 %2061
    %2067 = vrot.lane.b32.xlu0 %v2044, 24
    %v2068 = vpop.permute.xlu0 %2067
    %2069 = vrot.lane.b32.xlu0 %v2047, 24
    %v2070 = vpop.permute.xlu0 %2069
    %v2073 = vsel %vm220, %v1939, %v2052
    %v2074 = vsel %vm220, %v1942, %v2054
    %v2075 = vsel %vm83, %v2073, %v2060
    %v2076 = vsel %vm83, %v2074, %v2062
    %v2077 = vsel %vm613, %v2075, %v2068
    %v2078 = vsel %vm613, %v2076, %v2070
    %v2079 = vpack.c.bf16 %v2078, %v2077
    %v2080 = vperm.slane %v1666, 0
    %v2085 = vunpack.c.l.b16 %v1662
    %v2086 = vunpack.c.l.b16 %v1663
    %v2087 = vunpack.c.l.b16 %v1664
    %v2088 = vunpack.c.l.b16 %v1665
    %v2089 = vpack.c.b16 %v2086, %v2085
    %v2090 = vpack.c.b16 %v2088, %v2087
    %v2094 = vsel %vm103, %v2079, 0
    %2096 = vmatpush.bf16.msra.mxu0 0
    %2097 = vmatpush.bf16.msra.mxu0 0
    %2098 = vmatpush.bf16.msra.mxu0 0
    %2099 = vmatpush.bf16.msra.mxu0 0
    %2100 = vmatpush.bf16.msra.mxu0 0
    %2101 = vmatpush.bf16.msra.mxu0 0
    %2102 = vmatpush.bf16.msra.mxu0 %v2090
    %2103 = vmatpush.bf16.msra.mxu0 %v2089
    %2104 = vmatmul.bf16.gmra.mxu0 %v2094
    %v2105 = vpop.f32.mrf.mxu0
    %v2106 = vadd.f32 %v2080, %v2105
    %v2107 = vpop.f32.mrf.mxu0
    %v2108 = vadd.f32 %v2080, %v2107
    %2109 = vdwg.mxu0
    %v2110 = vadd.f32 %v1570, %v2106
    %v2111 = vadd.f32 %v1572, %v2108
    %v2112 = vld [vmem:[%s8 + $0x19] sm:$0x1]
    %v2113 = vld [vmem:[%s8 + $0x1a] sm:$0x1]
    %v2114 = vsel %vm103, %v2110, 0.0
    %2115 = vadd.xlane.f32.xlu0 %v2114
    %v2116 = vpop.xlane.xlu0 %2115
    %v2117 = vsel %vm103, %v2111, 0.0
    %2118 = vadd.xlane.f32.xlu0 %v2117
    %v2119 = vpop.xlane.xlu0 %2118
    %v2120 = vmul.f32 %v2116, %v116
    %v2121 = vmul.f32 %v2119, %v116
    %v2122 = vsub.f32 %v2110, %v2120
    %v2123 = vsub.f32 %v2111, %v2121
    %v2124 = vmul.f32 %v2122, %v2122
    %v2125 = vmul.f32 %v2123, %v2123
    %v2126 = vsel %vm103, %v2124, 0.0
    %2127 = vadd.xlane.f32.xlu0 %v2126
    %v2128 = vpop.xlane.xlu0 %2127
    %v2129 = vsel %vm103, %v2125, 0.0
    %2130 = vadd.xlane.f32.xlu0 %v2129
    %v2131 = vpop.xlane.xlu0 %2130
    %v2132 = vmul.f32 %v2128, %v116
    %v2133 = vmul.f32 %v2131, %v116
    %v2134 = vadd.f32 %v2132, 1e-06
    %v2135 = vadd.f32 %v2133, 1e-06
    %v2136 = vrsqrt.pop %v2134
    %v2137 = vmul.f32 %v2136, %v2134
    %v2138 = vmul.f32 %v2137, %v2136
    %v2139 = vmul.f32 0.5, %v2138
    %v2140 = vsub.f32 1.5, %v2139
    %v2141 = vmul.f32 %v2136, %v2140
    %vm2142 = vweird.f32 %v2134
    %vm2143 = vweird.f32 %v2136
    %vm2144 = vmor %vm2142, %vm2143
    %v2145 = vsel %vm2144, %v2136, %v2141
    %v2146 = vrsqrt.pop %v2135
    %v2147 = vmul.f32 %v2146, %v2135
    %v2148 = vmul.f32 %v2147, %v2146
    %v2149 = vmul.f32 0.5, %v2148
    %v2150 = vsub.f32 1.5, %v2149
    %v2151 = vmul.f32 %v2146, %v2150
    %vm2152 = vweird.f32 %v2135
    %vm2153 = vweird.f32 %v2146
    %vm2154 = vmor %vm2152, %vm2153
    %v2155 = vsel %vm2154, %v2146, %v2151
    %v2156 = vmul.f32 %v2122, %v2145
    %v2157 = vmul.f32 %v2123, %v2155
    %v2158 = vperm.slane %v2112, 0
    %v2159 = vmul.f32 %v2156, %v2158
    %v2160 = vmul.f32 %v2157, %v2158
    %v2161 = vperm.slane %v2113, 0
    %v2162 = vadd.f32 %v2159, %v2161
    %v2163 = vadd.f32 %v2160, %v2161
    %v2164 = vld [vmem:[#allocation2 + $0xc0] sm:$0xf]
    %v2165 = vld [vmem:[#allocation2 + $0xc4] sm:$0xf]
    %v2166 = vld [vmem:[#allocation2 + $0xc8] sm:$0xf]
    %v2167 = vld [vmem:[#allocation2 + $0xcc] sm:$0xf]
    %v2168 = vpack.c.bf16 %v2163, %v2162
    %v2169 = vld [vmem:[%s8 + $0x12] sm:$0x1]
    %v2170 = vperm.slane %v2169, 0
    %v2175 = vunpack.c.l.b16 %v2164
    %v2176 = vunpack.c.l.b16 %v2165
    %v2177 = vunpack.c.l.b16 %v2166
    %v2178 = vunpack.c.l.b16 %v2167
    %v2179 = vpack.c.b16 %v2176, %v2175
    %v2180 = vpack.c.b16 %v2178, %v2177
    %v2184 = vsel %vm103, %v2168, 0
    %2186 = vmatpush.bf16.msra.mxu0 0
    %2187 = vmatpush.bf16.msra.mxu0 0
    %2188 = vmatpush.bf16.msra.mxu0 0
    %2189 = vmatpush.bf16.msra.mxu0 0
    %2190 = vmatpush.bf16.msra.mxu0 0
    %2191 = vmatpush.bf16.msra.mxu0 0
    %2192 = vmatpush.bf16.msra.mxu0 %v2180
    %2193 = vmatpush.bf16.msra.mxu0 %v2179
    %2194 = vmatmul.bf16.gmra.mxu0 %v2184
    %v2195 = vpop.f32.mrf.mxu0
    %v2196 = vadd.f32 %v2170, %v2195
    %v2197 = vpop.f32.mrf.mxu0
    %v2198 = vadd.f32 %v2170, %v2197
    %2199 = vdwg.mxu0
    %v2200 = vld [vmem:[#allocation2 + $0xd0] sm:$0xf]
    %v2201 = vld [vmem:[#allocation2 + $0xd4] sm:$0xf]
    %v2202 = vld [vmem:[#allocation2 + $0xd8] sm:$0xf]
    %v2203 = vld [vmem:[#allocation2 + $0xdc] sm:$0xf]
    %v2204 = vpack.c.bf16 %v1531, %v1530
    %v2205 = vld [vmem:[%s8 + $0x13] sm:$0x1]
    %v2206 = vperm.slane %v2205, 0
    %v2211 = vunpack.c.l.b16 %v2200
    %v2212 = vunpack.c.l.b16 %v2201
    %v2213 = vunpack.c.l.b16 %v2202
    %v2214 = vunpack.c.l.b16 %v2203
    %v2215 = vpack.c.b16 %v2212, %v2211
    %v2216 = vpack.c.b16 %v2214, %v2213
    %v2220 = vsel %vm103, %v2204, 0
    %2222 = vmatpush.bf16.msra.mxu0 0
    %2223 = vmatpush.bf16.msra.mxu0 0
    %2224 = vmatpush.bf16.msra.mxu0 0
    %2225 = vmatpush.bf16.msra.mxu0 0
    %2226 = vmatpush.bf16.msra.mxu0 0
    %2227 = vmatpush.bf16.msra.mxu0 0
    %2228 = vmatpush.bf16.msra.mxu0 %v2216
    %2229 = vmatpush.bf16.msra.mxu0 %v2215
    %2230 = vmatmul.bf16.gmra.mxu0 %v2220
    %v2231 = vpop.f32.mrf.mxu0
    %v2232 = vadd.f32 %v2206, %v2231
    %v2233 = vpop.f32.mrf.mxu0
    %v2234 = vadd.f32 %v2206, %v2233
    %2235 = vdwg.mxu0
    %v2236 = vld [vmem:[#allocation2 + $0xe0] sm:$0xf]
    %v2237 = vld [vmem:[#allocation2 + $0xe4] sm:$0xf]
    %v2238 = vld [vmem:[#allocation2 + $0xe8] sm:$0xf]
    %v2239 = vld [vmem:[#allocation2 + $0xec] sm:$0xf]
    %v2240 = vld [vmem:[%s8 + $0x14] sm:$0x1]
    %2243 = vrot.lane.b32.xlu0 %v2196, 120
    %v2244 = vpop.permute.xlu0 %2243
    %2245 = vrot.lane.b32.xlu0 %v2198, 120
    %v2246 = vpop.permute.xlu0 %2245
    %2247 = vrot.lane.b32.xlu0 %v2196, 112
    %v2248 = vpop.permute.xlu0 %2247
    %2249 = vrot.lane.b32.xlu0 %v2198, 112
    %v2250 = vpop.permute.xlu0 %2249
    %2251 = vrot.lane.b32.xlu0 %v2196, 104
    %v2252 = vpop.permute.xlu0 %2251
    %2253 = vrot.lane.b32.xlu0 %v2198, 104
    %v2254 = vpop.permute.xlu0 %2253
    %2257 = vrot.lane.b32.xlu0 %v2232, 120
    %v2258 = vpop.permute.xlu0 %2257
    %2259 = vrot.lane.b32.xlu0 %v2234, 120
    %v2260 = vpop.permute.xlu0 %2259
    %2261 = vrot.lane.b32.xlu0 %v2232, 112
    %v2262 = vpop.permute.xlu0 %2261
    %2263 = vrot.lane.b32.xlu0 %v2234, 112
    %v2264 = vpop.permute.xlu0 %2263
    %2265 = vrot.lane.b32.xlu0 %v2232, 104
    %v2266 = vpop.permute.xlu0 %2265
    %2267 = vrot.lane.b32.xlu0 %v2234, 104
    %v2268 = vpop.permute.xlu0 %2267
    %v2269 = vsel %vm220, %v2196, 0
    %v2271 = vsel %vm220, %v2198, 0
    %v2273 = vsel %vm220, %v2232, 0
    %v2275 = vsel %vm220, %v2234, 0
    %2277 = vmatpush.xpose.msra.mxu0 0.0
    %2278 = vmatpush.xpose.msra.mxu0 0.0
    %2279 = vmatpush.xpose.msra.mxu0 0.0
    %2280 = vmatpush.xpose.msra.mxu0 0.0
    %2281 = vmatpush.xpose.msra.mxu0 0.0
    %2282 = vmatpush.xpose.msra.mxu0 0.0
    %2283 = vmatpush.xpose.msra.mxu0 0.0
    %2284 = vmatpush.xpose.msra.mxu0 0.0
    %2285 = vmatpush.xpose.msra.mxu0 0.0
    %2286 = vmatpush.xpose.msra.mxu0 0.0
    %2287 = vmatpush.xpose.msra.mxu0 0.0
    %2288 = vmatpush.xpose.msra.mxu0 0.0
    %2289 = vmatpush.xpose.msra.mxu0 0.0
    %2290 = vmatpush.xpose.msra.mxu0 0.0
    %2291 = vmatpush.xpose.msra.mxu0 %v2275
    %2292 = vmatpush.xpose.msra.mxu0 %v2273
    %2293 = vmatmul.f32.gmra.mxu0 %v2269
    %v2294 = vpop.f32.mrf.mxu0
    %v2295 = vadd.f32 %v54, %v2294
    %2296 = vmatmul.f32.gmra.mxu0 %v2271
    %v2297 = vpop.f32.mrf.mxu0
    %v2298 = vadd.f32 %v55, %v2297
    %2299 = vdwg.mxu0
    %v2300 = vsel %vm220, %v2244, 0
    %v2302 = vsel %vm220, %v2246, 0
    %v2304 = vsel %vm220, %v2258, 0
    %v2306 = vsel %vm220, %v2260, 0
    %2308 = vmatpush.xpose.msra.mxu0 0.0
    %2309 = vmatpush.xpose.msra.mxu0 0.0
    %2310 = vmatpush.xpose.msra.mxu0 0.0
    %2311 = vmatpush.xpose.msra.mxu0 0.0
    %2312 = vmatpush.xpose.msra.mxu0 0.0
    %2313 = vmatpush.xpose.msra.mxu0 0.0
    %2314 = vmatpush.xpose.msra.mxu0 0.0
    %2315 = vmatpush.xpose.msra.mxu0 0.0
    %2316 = vmatpush.xpose.msra.mxu0 0.0
    %2317 = vmatpush.xpose.msra.mxu0 0.0
    %2318 = vmatpush.xpose.msra.mxu0 0.0
    %2319 = vmatpush.xpose.msra.mxu0 0.0
    %2320 = vmatpush.xpose.msra.mxu0 0.0
    %2321 = vmatpush.xpose.msra.mxu0 0.0
    %2322 = vmatpush.xpose.msra.mxu0 %v2306
    %2323 = vmatpush.xpose.msra.mxu0 %v2304
    %2324 = vmatmul.f32.gmra.mxu0 %v2300
    %v2325 = vpop.f32.mrf.mxu0
    %v2326 = vadd.f32 %v54, %v2325
    %2327 = vmatmul.f32.gmra.mxu0 %v2302
    %v2328 = vpop.f32.mrf.mxu0
    %v2329 = vadd.f32 %v55, %v2328
    %2330 = vdwg.mxu0
    %v2331 = vsel %vm220, %v2248, 0
    %v2333 = vsel %vm220, %v2250, 0
    %v2335 = vsel %vm220, %v2262, 0
    %v2337 = vsel %vm220, %v2264, 0
    %2339 = vmatpush.xpose.msra.mxu0 0.0
    %2340 = vmatpush.xpose.msra.mxu0 0.0
    %2341 = vmatpush.xpose.msra.mxu0 0.0
    %2342 = vmatpush.xpose.msra.mxu0 0.0
    %2343 = vmatpush.xpose.msra.mxu0 0.0
    %2344 = vmatpush.xpose.msra.mxu0 0.0
    %2345 = vmatpush.xpose.msra.mxu0 0.0
    %2346 = vmatpush.xpose.msra.mxu0 0.0
    %2347 = vmatpush.xpose.msra.mxu0 0.0
    %2348 = vmatpush.xpose.msra.mxu0 0.0
    %2349 = vmatpush.xpose.msra.mxu0 0.0
    %2350 = vmatpush.xpose.msra.mxu0 0.0
    %2351 = vmatpush.xpose.msra.mxu0 0.0
    %2352 = vmatpush.xpose.msra.mxu0 0.0
    %2353 = vmatpush.xpose.msra.mxu0 %v2337
    %2354 = vmatpush.xpose.msra.mxu0 %v2335
    %2355 = vmatmul.f32.gmra.mxu0 %v2331
    %v2356 = vpop.f32.mrf.mxu0
    %v2357 = vadd.f32 %v54, %v2356
    %2358 = vmatmul.f32.gmra.mxu0 %v2333
    %v2359 = vpop.f32.mrf.mxu0
    %v2360 = vadd.f32 %v55, %v2359
    %2361 = vdwg.mxu0
    %v2362 = vsel %vm220, %v2252, 0
    %v2364 = vsel %vm220, %v2254, 0
    %v2366 = vsel %vm220, %v2266, 0
    %v2368 = vsel %vm220, %v2268, 0
    %2370 = vmatpush.xpose.msra.mxu0 0.0
    %2371 = vmatpush.xpose.msra.mxu0 0.0
    %2372 = vmatpush.xpose.msra.mxu0 0.0
    %2373 = vmatpush.xpose.msra.mxu0 0.0
    %2374 = vmatpush.xpose.msra.mxu0 0.0
    %2375 = vmatpush.xpose.msra.mxu0 0.0
    %2376 = vmatpush.xpose.msra.mxu0 0.0
    %2377 = vmatpush.xpose.msra.mxu0 0.0
    %2378 = vmatpush.xpose.msra.mxu0 0.0
    %2379 = vmatpush.xpose.msra.mxu0 0.0
    %2380 = vmatpush.xpose.msra.mxu0 0.0
    %2381 = vmatpush.xpose.msra.mxu0 0.0
    %2382 = vmatpush.xpose.msra.mxu0 0.0
    %2383 = vmatpush.xpose.msra.mxu0 0.0
    %2384 = vmatpush.xpose.msra.mxu0 %v2368
    %2385 = vmatpush.xpose.msra.mxu0 %v2366
    %2386 = vmatmul.f32.gmra.mxu0 %v2362
    %v2387 = vpop.f32.mrf.mxu0
    %v2388 = vadd.f32 %v54, %v2387
    %2389 = vmatmul.f32.gmra.mxu0 %v2364
    %v2390 = vpop.f32.mrf.mxu0
    %v2391 = vadd.f32 %v55, %v2390
    %2392 = vdwg.mxu0
    %v2393 = vsel %vm83, %v2295, -inf
    %2394 = vmax.xlane.f32.xlu0 %v2393
    %v2395 = vpop.xlane.xlu0 %2394
    %v2396 = vsel %vm83, %v2298, -inf
    %2397 = vmax.xlane.f32.xlu0 %v2396
    %v2398 = vpop.xlane.xlu0 %2397
    %v2399 = vsel %vm83, %v2326, -inf
    %2400 = vmax.xlane.f32.xlu0 %v2399
    %v2401 = vpop.xlane.xlu0 %2400
    %v2402 = vsel %vm83, %v2329, -inf
    %2403 = vmax.xlane.f32.xlu0 %v2402
    %v2404 = vpop.xlane.xlu0 %2403
    %v2405 = vsel %vm83, %v2357, -inf
    %2406 = vmax.xlane.f32.xlu0 %v2405
    %v2407 = vpop.xlane.xlu0 %2406
    %v2408 = vsel %vm83, %v2360, -inf
    %2409 = vmax.xlane.f32.xlu0 %v2408
    %v2410 = vpop.xlane.xlu0 %2409
    %v2411 = vsel %vm83, %v2388, -inf
    %2412 = vmax.xlane.f32.xlu0 %v2411
    %v2413 = vpop.xlane.xlu0 %2412
    %v2414 = vsel %vm83, %v2391, -inf
    %2415 = vmax.xlane.f32.xlu0 %v2414
    %v2416 = vpop.xlane.xlu0 %2415
    %v2417 = vsub.f32 %v2295, %v2395
    %v2418 = vsub.f32 %v2298, %v2398
    %v2419 = vsub.f32 %v2326, %v2401
    %v2420 = vsub.f32 %v2329, %v2404
    %v2421 = vsub.f32 %v2357, %v2407
    %v2422 = vsub.f32 %v2360, %v2410
    %v2423 = vsub.f32 %v2388, %v2413
    %v2424 = vsub.f32 %v2391, %v2416
    %v2425 = vmul.f32 %v2417, 1.442695
    %v2426 = vpow.pop %v2425
    %v2427 = vmul.f32 %v2418, 1.442695
    %v2428 = vpow.pop %v2427
    %v2429 = vmul.f32 %v2419, 1.442695
    %v2430 = vpow.pop %v2429
    %v2431 = vmul.f32 %v2420, 1.442695
    %v2432 = vpow.pop %v2431
    %v2433 = vmul.f32 %v2421, 1.442695
    %v2434 = vpow.pop %v2433
    %v2435 = vmul.f32 %v2422, 1.442695
    %v2436 = vpow.pop %v2435
    %v2437 = vmul.f32 %v2423, 1.442695
    %v2438 = vpow.pop %v2437
    %v2439 = vmul.f32 %v2424, 1.442695
    %v2440 = vpow.pop %v2439
    %v2441 = vsel %vm83, %v2426, 0.0
    %2442 = vadd.xlane.f32.xlu0 %v2441
    %v2443 = vpop.xlane.xlu0 %2442
    %v2444 = vsel %vm83, %v2428, 0.0
    %2445 = vadd.xlane.f32.xlu0 %v2444
    %v2446 = vpop.xlane.xlu0 %2445
    %v2447 = vsel %vm83, %v2430, 0.0
    %2448 = vadd.xlane.f32.xlu0 %v2447
    %v2449 = vpop.xlane.xlu0 %2448
    %v2450 = vsel %vm83, %v2432, 0.0
    %2451 = vadd.xlane.f32.xlu0 %v2450
    %v2452 = vpop.xlane.xlu0 %2451
    %v2453 = vsel %vm83, %v2434, 0.0
    %2454 = vadd.xlane.f32.xlu0 %v2453
    %v2455 = vpop.xlane.xlu0 %2454
    %v2456 = vsel %vm83, %v2436, 0.0
    %2457 = vadd.xlane.f32.xlu0 %v2456
    %v2458 = vpop.xlane.xlu0 %2457
    %v2459 = vsel %vm83, %v2438, 0.0
    %2460 = vadd.xlane.f32.xlu0 %v2459
    %v2461 = vpop.xlane.xlu0 %2460
    %v2462 = vsel %vm83, %v2440, 0.0
    %2463 = vadd.xlane.f32.xlu0 %v2462
    %v2464 = vpop.xlane.xlu0 %2463
    %v2465 = vrcp.pop %v2443
    %v2466 = vrcp.pop %v2446
    %v2467 = vrcp.pop %v2449
    %v2468 = vrcp.pop %v2452
    %v2469 = vrcp.pop %v2455
    %v2470 = vrcp.pop %v2458
    %v2471 = vrcp.pop %v2461
    %v2472 = vrcp.pop %v2464
    %v2473 = vmul.f32 %v2426, %v2465
    %v2474 = vmul.f32 %v2428, %v2466
    %v2475 = vmul.f32 %v2430, %v2467
    %v2476 = vmul.f32 %v2432, %v2468
    %v2477 = vmul.f32 %v2434, %v2469
    %v2478 = vmul.f32 %v2436, %v2470
    %v2479 = vmul.f32 %v2438, %v2471
    %v2480 = vmul.f32 %v2440, %v2472
    %2481 = vrot.lane.b32.xlu0 %v2232, 96
    %v2482 = vpop.permute.xlu0 %2481
    %2483 = vrot.lane.b32.xlu0 %v2234, 96
    %v2484 = vpop.permute.xlu0 %2483
    %v2488 = vsel %vm83, %v2473, 0
    %v2491 = vsel %vm83, %v2474, 0
    %2493 = vmatpush.msra.mxu0 0.0
    %2494 = vmatpush.msra.mxu0 0.0
    %2495 = vmatpush.msra.mxu0 0.0
    %2496 = vmatpush.msra.mxu0 0.0
    %2497 = vmatpush.msra.mxu0 0.0
    %2498 = vmatpush.msra.mxu0 0.0
    %2499 = vmatpush.msra.mxu0 0.0
    %2500 = vmatpush.msra.mxu0 0.0
    %2501 = vmatpush.msra.mxu0 0.0
    %2502 = vmatpush.msra.mxu0 0.0
    %2503 = vmatpush.msra.mxu0 0.0
    %2504 = vmatpush.msra.mxu0 0.0
    %2505 = vmatpush.msra.mxu0 0.0
    %2506 = vmatpush.msra.mxu0 0.0
    %2507 = vmatpush.msra.mxu0 %v2484
    %2508 = vmatpush.msra.mxu0 %v2482
    %2509 = vmatmul.f32.gmra.mxu0 %v2488
    %v2510 = vpop.f32.mrf.mxu0
    %v2511 = vadd.f32 0.0, %v2510
    %2512 = vmatmul.f32.gmra.mxu0 %v2491
    %v2513 = vpop.f32.mrf.mxu0
    %v2514 = vadd.f32 0.0, %v2513
    %2515 = vdwg.mxu0
    %2516 = vrot.lane.b32.xlu0 %v2258, 96
    %v2517 = vpop.permute.xlu0 %2516
    %2518 = vrot.lane.b32.xlu0 %v2260, 96
    %v2519 = vpop.permute.xlu0 %2518
    %v2523 = vsel %vm83, %v2475, 0
    %v2526 = vsel %vm83, %v2476, 0
    %2528 = vmatpush.msra.mxu0 0.0
    %2529 = vmatpush.msra.mxu0 0.0
    %2530 = vmatpush.msra.mxu0 0.0
    %2531 = vmatpush.msra.mxu0 0.0
    %2532 = vmatpush.msra.mxu0 0.0
    %2533 = vmatpush.msra.mxu0 0.0
    %2534 = vmatpush.msra.mxu0 0.0
    %2535 = vmatpush.msra.mxu0 0.0
    %2536 = vmatpush.msra.mxu0 0.0
    %2537 = vmatpush.msra.mxu0 0.0
    %2538 = vmatpush.msra.mxu0 0.0
    %2539 = vmatpush.msra.mxu0 0.0
    %2540 = vmatpush.msra.mxu0 0.0
    %2541 = vmatpush.msra.mxu0 0.0
    %2542 = vmatpush.msra.mxu0 %v2519
    %2543 = vmatpush.msra.mxu0 %v2517
    %2544 = vmatmul.f32.gmra.mxu0 %v2523
    %v2545 = vpop.f32.mrf.mxu0
    %v2546 = vadd.f32 0.0, %v2545
    %2547 = vmatmul.f32.gmra.mxu0 %v2526
    %v2548 = vpop.f32.mrf.mxu0
    %v2549 = vadd.f32 0.0, %v2548
    %2550 = vdwg.mxu0
    %2551 = vrot.lane.b32.xlu0 %v2262, 96
    %v2552 = vpop.permute.xlu0 %2551
    %2553 = vrot.lane.b32.xlu0 %v2264, 96
    %v2554 = vpop.permute.xlu0 %2553
    %v2558 = vsel %vm83, %v2477, 0
    %v2561 = vsel %vm83, %v2478, 0
    %2563 = vmatpush.msra.mxu0 0.0
    %2564 = vmatpush.msra.mxu0 0.0
    %2565 = vmatpush.msra.mxu0 0.0
    %2566 = vmatpush.msra.mxu0 0.0
    %2567 = vmatpush.msra.mxu0 0.0
    %2568 = vmatpush.msra.mxu0 0.0
    %2569 = vmatpush.msra.mxu0 0.0
    %2570 = vmatpush.msra.mxu0 0.0
    %2571 = vmatpush.msra.mxu0 0.0
    %2572 = vmatpush.msra.mxu0 0.0
    %2573 = vmatpush.msra.mxu0 0.0
    %2574 = vmatpush.msra.mxu0 0.0
    %2575 = vmatpush.msra.mxu0 0.0
    %2576 = vmatpush.msra.mxu0 0.0
    %2577 = vmatpush.msra.mxu0 %v2554
    %2578 = vmatpush.msra.mxu0 %v2552
    %2579 = vmatmul.f32.gmra.mxu0 %v2558
    %v2580 = vpop.f32.mrf.mxu0
    %v2581 = vadd.f32 0.0, %v2580
    %2582 = vmatmul.f32.gmra.mxu0 %v2561
    %v2583 = vpop.f32.mrf.mxu0
    %v2584 = vadd.f32 0.0, %v2583
    %2585 = vdwg.mxu0
    %2586 = vrot.lane.b32.xlu0 %v2266, 96
    %v2587 = vpop.permute.xlu0 %2586
    %2588 = vrot.lane.b32.xlu0 %v2268, 96
    %v2589 = vpop.permute.xlu0 %2588
    %v2593 = vsel %vm83, %v2479, 0
    %v2596 = vsel %vm83, %v2480, 0
    %2598 = vmatpush.msra.mxu0 0.0
    %2599 = vmatpush.msra.mxu0 0.0
    %2600 = vmatpush.msra.mxu0 0.0
    %2601 = vmatpush.msra.mxu0 0.0
    %2602 = vmatpush.msra.mxu0 0.0
    %2603 = vmatpush.msra.mxu0 0.0
    %2604 = vmatpush.msra.mxu0 0.0
    %2605 = vmatpush.msra.mxu0 0.0
    %2606 = vmatpush.msra.mxu0 0.0
    %2607 = vmatpush.msra.mxu0 0.0
    %2608 = vmatpush.msra.mxu0 0.0
    %2609 = vmatpush.msra.mxu0 0.0
    %2610 = vmatpush.msra.mxu0 0.0
    %2611 = vmatpush.msra.mxu0 0.0
    %2612 = vmatpush.msra.mxu0 %v2589
    %2613 = vmatpush.msra.mxu0 %v2587
    %2614 = vmatmul.f32.gmra.mxu0 %v2593
    %v2615 = vpop.f32.mrf.mxu0
    %v2616 = vadd.f32 0.0, %v2615
    %2617 = vmatmul.f32.gmra.mxu0 %v2596
    %v2618 = vpop.f32.mrf.mxu0
    %v2619 = vadd.f32 0.0, %v2618
    %2620 = vdwg.mxu0
    %2623 = vrot.lane.b32.xlu0 %v2546, 8
    %v2624 = vpop.permute.xlu0 %2623
    %2625 = vrot.lane.b32.xlu0 %v2549, 8
    %v2626 = vpop.permute.xlu0 %2625
    %2631 = vrot.lane.b32.xlu0 %v2581, 16
    %v2632 = vpop.permute.xlu0 %2631
    %2633 = vrot.lane.b32.xlu0 %v2584, 16
    %v2634 = vpop.permute.xlu0 %2633
    %2639 = vrot.lane.b32.xlu0 %v2616, 24
    %v2640 = vpop.permute.xlu0 %2639
    %2641 = vrot.lane.b32.xlu0 %v2619, 24
    %v2642 = vpop.permute.xlu0 %2641
    %v2645 = vsel %vm220, %v2511, %v2624
    %v2646 = vsel %vm220, %v2514, %v2626
    %v2647 = vsel %vm83, %v2645, %v2632
    %v2648 = vsel %vm83, %v2646, %v2634
    %v2649 = vsel %vm613, %v2647, %v2640
    %v2650 = vsel %vm613, %v2648, %v2642
    %v2651 = vpack.c.bf16 %v2650, %v2649
    %v2652 = vperm.slane %v2240, 0
    %v2657 = vunpack.c.l.b16 %v2236
    %v2658 = vunpack.c.l.b16 %v2237
    %v2659 = vunpack.c.l.b16 %v2238
    %v2660 = vunpack.c.l.b16 %v2239
    %v2661 = vpack.c.b16 %v2658, %v2657
    %v2662 = vpack.c.b16 %v2660, %v2659
    %v2666 = vsel %vm103, %v2651, 0
    %2668 = vmatpush.bf16.msra.mxu0 0
    %2669 = vmatpush.bf16.msra.mxu0 0
    %2670 = vmatpush.bf16.msra.mxu0 0
    %2671 = vmatpush.bf16.msra.mxu0 0
    %2672 = vmatpush.bf16.msra.mxu0 0
    %2673 = vmatpush.bf16.msra.mxu0 0
    %2674 = vmatpush.bf16.msra.mxu0 %v2662
    %2675 = vmatpush.bf16.msra.mxu0 %v2661
    %2676 = vmatmul.bf16.gmra.mxu0 %v2666
    %v2677 = vpop.f32.mrf.mxu0
    %v2678 = vadd.f32 %v2652, %v2677
    %v2679 = vpop.f32.mrf.mxu0
    %v2680 = vadd.f32 %v2652, %v2679
    %2681 = vdwg.mxu0
    %v2682 = vadd.f32 %v2110, %v2678
    %v2683 = vadd.f32 %v2111, %v2680
    %v2684 = vld [vmem:[%s8 + $0x1b] sm:$0x1]
    %v2685 = vld [vmem:[%s8 + $0x1c] sm:$0x1]
    %v2686 = vsel %vm103, %v2682, 0.0
    %2687 = vadd.xlane.f32.xlu0 %v2686
    %v2688 = vpop.xlane.xlu0 %2687
    %v2689 = vsel %vm103, %v2683, 0.0
    %2690 = vadd.xlane.f32.xlu0 %v2689
    %v2691 = vpop.xlane.xlu0 %2690
    %v2692 = vmul.f32 %v2688, %v116
    %v2693 = vmul.f32 %v2691, %v116
    %v2694 = vsub.f32 %v2682, %v2692
    %v2695 = vsub.f32 %v2683, %v2693
    %v2696 = vmul.f32 %v2694, %v2694
    %v2697 = vmul.f32 %v2695, %v2695
    %v2698 = vsel %vm103, %v2696, 0.0
    %2699 = vadd.xlane.f32.xlu0 %v2698
    %v2700 = vpop.xlane.xlu0 %2699
    %v2701 = vsel %vm103, %v2697, 0.0
    %2702 = vadd.xlane.f32.xlu0 %v2701
    %v2703 = vpop.xlane.xlu0 %2702
    %v2704 = vmul.f32 %v2700, %v116
    %v2705 = vmul.f32 %v2703, %v116
    %v2706 = vadd.f32 %v2704, 1e-06
    %v2707 = vadd.f32 %v2705, 1e-06
    %v2708 = vrsqrt.pop %v2706
    %v2709 = vmul.f32 %v2708, %v2706
    %v2710 = vmul.f32 %v2709, %v2708
    %v2711 = vmul.f32 0.5, %v2710
    %v2712 = vsub.f32 1.5, %v2711
    %v2713 = vmul.f32 %v2708, %v2712
    %vm2714 = vweird.f32 %v2706
    %vm2715 = vweird.f32 %v2708
    %vm2716 = vmor %vm2714, %vm2715
    %v2717 = vsel %vm2716, %v2708, %v2713
    %v2718 = vrsqrt.pop %v2707
    %v2719 = vmul.f32 %v2718, %v2707
    %v2720 = vmul.f32 %v2719, %v2718
    %v2721 = vmul.f32 0.5, %v2720
    %v2722 = vsub.f32 1.5, %v2721
    %v2723 = vmul.f32 %v2718, %v2722
    %vm2724 = vweird.f32 %v2707
    %vm2725 = vweird.f32 %v2718
    %vm2726 = vmor %vm2724, %vm2725
    %v2727 = vsel %vm2726, %v2718, %v2723
    %v2728 = vmul.f32 %v2694, %v2717
    %v2729 = vmul.f32 %v2695, %v2727
    %v2730 = vperm.slane %v2684, 0
    %v2731 = vmul.f32 %v2728, %v2730
    %v2732 = vmul.f32 %v2729, %v2730
    %v2733 = vperm.slane %v2685, 0
    %v2734 = vadd.f32 %v2731, %v2733
    %v2735 = vadd.f32 %v2732, %v2733
    %v2736 = vld [vmem:[#allocation2 + $0xf0] sm:$0xf]
    %v2737 = vld [vmem:[#allocation2 + $0xf4] sm:$0xf]
    %v2738 = vld [vmem:[#allocation2 + $0xf8] sm:$0xf]
    %v2739 = vld [vmem:[#allocation2 + $0xfc] sm:$0xf]
    %v2740 = vpack.c.bf16 %v2735, %v2734
    %v2741 = vld [vmem:[%s8 + $0x15] sm:$0x1]
    %v2742 = vperm.slane %v2741, 0
    %v2747 = vunpack.c.l.b16 %v2736
    %v2748 = vunpack.c.l.b16 %v2737
    %v2749 = vunpack.c.l.b16 %v2738
    %v2750 = vunpack.c.l.b16 %v2739
    %v2751 = vpack.c.b16 %v2748, %v2747
    %v2752 = vpack.c.b16 %v2750, %v2749
    %v2756 = vsel %vm103, %v2740, 0
    %2758 = vmatpush.bf16.msra.mxu0 0
    %2759 = vmatpush.bf16.msra.mxu0 0
    %2760 = vmatpush.bf16.msra.mxu0 0
    %2761 = vmatpush.bf16.msra.mxu0 0
    %2762 = vmatpush.bf16.msra.mxu0 0
    %2763 = vmatpush.bf16.msra.mxu0 0
    %2764 = vmatpush.bf16.msra.mxu0 %v2752
    %2765 = vmatpush.bf16.msra.mxu0 %v2751
    %2766 = vmatmul.bf16.gmra.mxu0 %v2756
    %v2767 = vpop.f32.mrf.mxu0
    %v2768 = vadd.f32 %v2742, %v2767
    %v2769 = vpop.f32.mrf.mxu0
    %v2770 = vadd.f32 %v2742, %v2769
    %2771 = vdwg.mxu0
    %v2772 = vmax.f32 %v2768, 0.0
    %v2773 = vmax.f32 %v2770, 0.0
    %v2774 = vld [vmem:[#allocation2 + $0x100] sm:$0xf]
    %v2775 = vld [vmem:[#allocation2 + $0x104] sm:$0xf]
    %v2776 = vld [vmem:[#allocation2 + $0x108] sm:$0xf]
    %v2777 = vld [vmem:[#allocation2 + $0x10c] sm:$0xf]
    %v2778 = vld [vmem:[#allocation2 + $0x110] sm:$0xf]
    %v2779 = vld [vmem:[#allocation2 + $0x114] sm:$0xf]
    %v2780 = vld [vmem:[#allocation2 + $0x118] sm:$0xf]
    %v2781 = vld [vmem:[#allocation2 + $0x11c] sm:$0xf]
    %v2782 = vpack.c.bf16 %v2773, %v2772
    %v2791 = vunpack.c.l.b16 %v2774
    %v2792 = vunpack.c.l.b16 %v2775
    %v2793 = vunpack.c.l.b16 %v2776
    %v2794 = vunpack.c.l.b16 %v2777
    %v2795 = vunpack.c.l.b16 %v2778
    %v2796 = vunpack.c.l.b16 %v2779
    %v2797 = vunpack.c.l.b16 %v2780
    %v2798 = vunpack.c.l.b16 %v2781
    %v2799 = vpack.c.b16 %v2792, %v2791
    %v2800 = vpack.c.b16 %v2794, %v2793
    %v2801 = vpack.c.b16 %v2796, %v2795
    %v2802 = vpack.c.b16 %v2798, %v2797
    %v2808 = vsel %vm772, %v2782, 0
    %2810 = vmatpush.bf16.msra.mxu0 0
    %2811 = vmatpush.bf16.msra.mxu0 0
    %2812 = vmatpush.bf16.msra.mxu0 0
    %2813 = vmatpush.bf16.msra.mxu0 0
    %2814 = vmatpush.bf16.msra.mxu0 %v2802
    %2815 = vmatpush.bf16.msra.mxu0 %v2801
    %2816 = vmatpush.bf16.msra.mxu0 %v2800
    %2817 = vmatpush.bf16.msra.mxu0 %v2799
    %2818 = vmatmul.bf16.gmra.mxu0 %v2808
    %v2819 = vpop.f32.mrf.mxu0
    %v2820 = vadd.f32 0.0, %v2819
    %v2821 = vpop.f32.mrf.mxu0
    %v2822 = vadd.f32 0.0, %v2821
    %2823 = vdwg.mxu0
    %v2824 = vadd.f32 %v2682, %v2820
    %v2825 = vadd.f32 %v2683, %v2822
    %v2826 = vld [vmem:[%s8 + $0x16] sm:$0x1]
    %v2827 = vperm.slane %v2826, 0
    %v2828 = vadd.f32 %v2824, %v2827
    %v2829 = vadd.f32 %v2825, %v2827
    %v2830 = vld [vmem:[%s8 + $0x24] sm:$0x1]
    %v2831 = vld [vmem:[%s8 + $0x25] sm:$0x1]
    %v2832 = vsel %vm103, %v2828, 0.0
    %2833 = vadd.xlane.f32.xlu0 %v2832
    %v2834 = vpop.xlane.xlu0 %2833
    %v2835 = vsel %vm103, %v2829, 0.0
    %2836 = vadd.xlane.f32.xlu0 %v2835
    %v2837 = vpop.xlane.xlu0 %2836
    %v2838 = vmul.f32 %v2834, %v116
    %v2839 = vmul.f32 %v2837, %v116
    %v2840 = vsub.f32 %v2828, %v2838
    %v2841 = vsub.f32 %v2829, %v2839
    %v2842 = vmul.f32 %v2840, %v2840
    %v2843 = vmul.f32 %v2841, %v2841
    %v2844 = vsel %vm103, %v2842, 0.0
    %2845 = vadd.xlane.f32.xlu0 %v2844
    %v2846 = vpop.xlane.xlu0 %2845
    %v2847 = vsel %vm103, %v2843, 0.0
    %2848 = vadd.xlane.f32.xlu0 %v2847
    %v2849 = vpop.xlane.xlu0 %2848
    %v2850 = vmul.f32 %v2846, %v116
    %v2851 = vmul.f32 %v2849, %v116
    %v2852 = vadd.f32 %v2850, 1e-06
    %v2853 = vadd.f32 %v2851, 1e-06
    %v2854 = vrsqrt.pop %v2852
    %v2855 = vmul.f32 %v2854, %v2852
    %v2856 = vmul.f32 %v2855, %v2854
    %v2857 = vmul.f32 0.5, %v2856
    %v2858 = vsub.f32 1.5, %v2857
    %v2859 = vmul.f32 %v2854, %v2858
    %vm2860 = vweird.f32 %v2852
    %vm2861 = vweird.f32 %v2854
    %vm2862 = vmor %vm2860, %vm2861
    %v2863 = vsel %vm2862, %v2854, %v2859
    %v2864 = vrsqrt.pop %v2853
    %v2865 = vmul.f32 %v2864, %v2853
    %v2866 = vmul.f32 %v2865, %v2864
    %v2867 = vmul.f32 0.5, %v2866
    %v2868 = vsub.f32 1.5, %v2867
    %v2869 = vmul.f32 %v2864, %v2868
    %vm2870 = vweird.f32 %v2853
    %vm2871 = vweird.f32 %v2864
    %vm2872 = vmor %vm2870, %vm2871
    %v2873 = vsel %vm2872, %v2864, %v2869
    %v2874 = vmul.f32 %v2840, %v2863
    %v2875 = vmul.f32 %v2841, %v2873
    %v2876 = vperm.slane %v2830, 0
    %v2877 = vmul.f32 %v2874, %v2876
    %v2878 = vmul.f32 %v2875, %v2876
    %v2879 = vperm.slane %v2831, 0
    %v2880 = vadd.f32 %v2877, %v2879
    %v2881 = vadd.f32 %v2878, %v2879
    %v2882 = vld [vmem:[#allocation2 + $0x120] sm:$0xf]
    %v2883 = vld [vmem:[#allocation2 + $0x124] sm:$0xf]
    %v2884 = vld [vmem:[#allocation2 + $0x128] sm:$0xf]
    %v2885 = vld [vmem:[#allocation2 + $0x12c] sm:$0xf]
    %v2886 = vpack.c.bf16 %v2881, %v2880
    %v2887 = vld [vmem:[%s8 + $0x1d] sm:$0x1]
    %v2888 = vperm.slane %v2887, 0
    %v2893 = vunpack.c.l.b16 %v2882
    %v2894 = vunpack.c.l.b16 %v2883
    %v2895 = vunpack.c.l.b16 %v2884
    %v2896 = vunpack.c.l.b16 %v2885
    %v2897 = vpack.c.b16 %v2894, %v2893
    %v2898 = vpack.c.b16 %v2896, %v2895
    %v2902 = vsel %vm103, %v2886, 0
    %2904 = vmatpush.bf16.msra.mxu0 0
    %2905 = vmatpush.bf16.msra.mxu0 0
    %2906 = vmatpush.bf16.msra.mxu0 0
    %2907 = vmatpush.bf16.msra.mxu0 0
    %2908 = vmatpush.bf16.msra.mxu0 0
    %2909 = vmatpush.bf16.msra.mxu0 0
    %2910 = vmatpush.bf16.msra.mxu0 %v2898
    %2911 = vmatpush.bf16.msra.mxu0 %v2897
    %2912 = vmatmul.bf16.gmra.mxu0 %v2902
    %v2913 = vpop.f32.mrf.mxu0
    %v2914 = vadd.f32 %v2888, %v2913
    %v2915 = vpop.f32.mrf.mxu0
    %v2916 = vadd.f32 %v2888, %v2915
    %2917 = vdwg.mxu0
    %v2918 = vld [vmem:[#allocation2 + $0x130] sm:$0xf]
    %v2919 = vld [vmem:[#allocation2 + $0x134] sm:$0xf]
    %v2920 = vld [vmem:[#allocation2 + $0x138] sm:$0xf]
    %v2921 = vld [vmem:[#allocation2 + $0x13c] sm:$0xf]
    %v2922 = vld [vmem:[%s8 + $0x1e] sm:$0x1]
    %2925 = vrot.lane.b32.xlu0 %v2914, 120
    %v2926 = vpop.permute.xlu0 %2925
    %2927 = vrot.lane.b32.xlu0 %v2916, 120
    %v2928 = vpop.permute.xlu0 %2927
    %2929 = vrot.lane.b32.xlu0 %v2914, 112
    %v2930 = vpop.permute.xlu0 %2929
    %2931 = vrot.lane.b32.xlu0 %v2916, 112
    %v2932 = vpop.permute.xlu0 %2931
    %2933 = vrot.lane.b32.xlu0 %v2914, 104
    %v2934 = vpop.permute.xlu0 %2933
    %2935 = vrot.lane.b32.xlu0 %v2916, 104
    %v2936 = vpop.permute.xlu0 %2935
    %2937 = vrot.lane.b32.xlu0 %v2914, 96
    %v2938 = vpop.permute.xlu0 %2937
    %2939 = vrot.lane.b32.xlu0 %v2916, 96
    %v2940 = vpop.permute.xlu0 %2939
    %v2941 = vsel %vm220, %v2914, 0
    %v2943 = vsel %vm220, %v2916, 0
    %v2945 = vsel %vm220, %v2938, 0
    %v2947 = vsel %vm220, %v2940, 0
    %2949 = vmatpush.xpose.msra.mxu0 0.0
    %2950 = vmatpush.xpose.msra.mxu0 0.0
    %2951 = vmatpush.xpose.msra.mxu0 0.0
    %2952 = vmatpush.xpose.msra.mxu0 0.0
    %2953 = vmatpush.xpose.msra.mxu0 0.0
    %2954 = vmatpush.xpose.msra.mxu0 0.0
    %2955 = vmatpush.xpose.msra.mxu0 0.0
    %2956 = vmatpush.xpose.msra.mxu0 0.0
    %2957 = vmatpush.xpose.msra.mxu0 0.0
    %2958 = vmatpush.xpose.msra.mxu0 0.0
    %2959 = vmatpush.xpose.msra.mxu0 0.0
    %2960 = vmatpush.xpose.msra.mxu0 0.0
    %2961 = vmatpush.xpose.msra.mxu0 0.0
    %2962 = vmatpush.xpose.msra.mxu0 0.0
    %2963 = vmatpush.xpose.msra.mxu0 %v2947
    %2964 = vmatpush.xpose.msra.mxu0 %v2945
    %2965 = vmatmul.f32.gmra.mxu0 %v2941
    %v2966 = vpop.f32.mrf.mxu0
    %v2967 = vadd.f32 %v52, %v2966
    %2968 = vmatmul.f32.gmra.mxu0 %v2943
    %v2969 = vpop.f32.mrf.mxu0
    %v2970 = vadd.f32 %v53, %v2969
    %2971 = vdwg.mxu0
    %2972 = vrot.lane.b32.xlu0 %v2926, 96
    %v2973 = vpop.permute.xlu0 %2972
    %2974 = vrot.lane.b32.xlu0 %v2928, 96
    %v2975 = vpop.permute.xlu0 %2974
    %v2976 = vsel %vm220, %v2926, 0
    %v2978 = vsel %vm220, %v2928, 0
    %v2980 = vsel %vm220, %v2973, 0
    %v2982 = vsel %vm220, %v2975, 0
    %2984 = vmatpush.xpose.msra.mxu0 0.0
    %2985 = vmatpush.xpose.msra.mxu0 0.0
    %2986 = vmatpush.xpose.msra.mxu0 0.0
    %2987 = vmatpush.xpose.msra.mxu0 0.0
    %2988 = vmatpush.xpose.msra.mxu0 0.0
    %2989 = vmatpush.xpose.msra.mxu0 0.0
    %2990 = vmatpush.xpose.msra.mxu0 0.0
    %2991 = vmatpush.xpose.msra.mxu0 0.0
    %2992 = vmatpush.xpose.msra.mxu0 0.0
    %2993 = vmatpush.xpose.msra.mxu0 0.0
    %2994 = vmatpush.xpose.msra.mxu0 0.0
    %2995 = vmatpush.xpose.msra.mxu0 0.0
    %2996 = vmatpush.xpose.msra.mxu0 0.0
    %2997 = vmatpush.xpose.msra.mxu0 0.0
    %2998 = vmatpush.xpose.msra.mxu0 %v2982
    %2999 = vmatpush.xpose.msra.mxu0 %v2980
    %3000 = vmatmul.f32.gmra.mxu0 %v2976
    %v3001 = vpop.f32.mrf.mxu0
    %v3002 = vadd.f32 %v52, %v3001
    %3003 = vmatmul.f32.gmra.mxu0 %v2978
    %v3004 = vpop.f32.mrf.mxu0
    %v3005 = vadd.f32 %v53, %v3004
    %3006 = vdwg.mxu0
    %3007 = vrot.lane.b32.xlu0 %v2930, 96
    %v3008 = vpop.permute.xlu0 %3007
    %3009 = vrot.lane.b32.xlu0 %v2932, 96
    %v3010 = vpop.permute.xlu0 %3009
    %v3011 = vsel %vm220, %v2930, 0
    %v3013 = vsel %vm220, %v2932, 0
    %v3015 = vsel %vm220, %v3008, 0
    %v3017 = vsel %vm220, %v3010, 0
    %3019 = vmatpush.xpose.msra.mxu0 0.0
    %3020 = vmatpush.xpose.msra.mxu0 0.0
    %3021 = vmatpush.xpose.msra.mxu0 0.0
    %3022 = vmatpush.xpose.msra.mxu0 0.0
    %3023 = vmatpush.xpose.msra.mxu0 0.0
    %3024 = vmatpush.xpose.msra.mxu0 0.0
    %3025 = vmatpush.xpose.msra.mxu0 0.0
    %3026 = vmatpush.xpose.msra.mxu0 0.0
    %3027 = vmatpush.xpose.msra.mxu0 0.0
    %3028 = vmatpush.xpose.msra.mxu0 0.0
    %3029 = vmatpush.xpose.msra.mxu0 0.0
    %3030 = vmatpush.xpose.msra.mxu0 0.0
    %3031 = vmatpush.xpose.msra.mxu0 0.0
    %3032 = vmatpush.xpose.msra.mxu0 0.0
    %3033 = vmatpush.xpose.msra.mxu0 %v3017
    %3034 = vmatpush.xpose.msra.mxu0 %v3015
    %3035 = vmatmul.f32.gmra.mxu0 %v3011
    %v3036 = vpop.f32.mrf.mxu0
    %v3037 = vadd.f32 %v52, %v3036
    %3038 = vmatmul.f32.gmra.mxu0 %v3013
    %v3039 = vpop.f32.mrf.mxu0
    %v3040 = vadd.f32 %v53, %v3039
    %3041 = vdwg.mxu0
    %3042 = vrot.lane.b32.xlu0 %v2934, 96
    %v3043 = vpop.permute.xlu0 %3042
    %3044 = vrot.lane.b32.xlu0 %v2936, 96
    %v3045 = vpop.permute.xlu0 %3044
    %v3046 = vsel %vm220, %v2934, 0
    %v3048 = vsel %vm220, %v2936, 0
    %v3050 = vsel %vm220, %v3043, 0
    %v3052 = vsel %vm220, %v3045, 0
    %3054 = vmatpush.xpose.msra.mxu0 0.0
    %3055 = vmatpush.xpose.msra.mxu0 0.0
    %3056 = vmatpush.xpose.msra.mxu0 0.0
    %3057 = vmatpush.xpose.msra.mxu0 0.0
    %3058 = vmatpush.xpose.msra.mxu0 0.0
    %3059 = vmatpush.xpose.msra.mxu0 0.0
    %3060 = vmatpush.xpose.msra.mxu0 0.0
    %3061 = vmatpush.xpose.msra.mxu0 0.0
    %3062 = vmatpush.xpose.msra.mxu0 0.0
    %3063 = vmatpush.xpose.msra.mxu0 0.0
    %3064 = vmatpush.xpose.msra.mxu0 0.0
    %3065 = vmatpush.xpose.msra.mxu0 0.0
    %3066 = vmatpush.xpose.msra.mxu0 0.0
    %3067 = vmatpush.xpose.msra.mxu0 0.0
    %3068 = vmatpush.xpose.msra.mxu0 %v3052
    %3069 = vmatpush.xpose.msra.mxu0 %v3050
    %3070 = vmatmul.f32.gmra.mxu0 %v3046
    %v3071 = vpop.f32.mrf.mxu0
    %v3072 = vadd.f32 %v52, %v3071
    %3073 = vmatmul.f32.gmra.mxu0 %v3048
    %v3074 = vpop.f32.mrf.mxu0
    %v3075 = vadd.f32 %v53, %v3074
    %3076 = vdwg.mxu0
    %v3077 = vsel %vm83, %v2967, -inf
    %3078 = vmax.xlane.f32.xlu0 %v3077
    %v3079 = vpop.xlane.xlu0 %3078
    %v3080 = vsel %vm83, %v2970, -inf
    %3081 = vmax.xlane.f32.xlu0 %v3080
    %v3082 = vpop.xlane.xlu0 %3081
    %v3083 = vsel %vm83, %v3002, -inf
    %3084 = vmax.xlane.f32.xlu0 %v3083
    %v3085 = vpop.xlane.xlu0 %3084
    %v3086 = vsel %vm83, %v3005, -inf
    %3087 = vmax.xlane.f32.xlu0 %v3086
    %v3088 = vpop.xlane.xlu0 %3087
    %v3089 = vsel %vm83, %v3037, -inf
    %3090 = vmax.xlane.f32.xlu0 %v3089
    %v3091 = vpop.xlane.xlu0 %3090
    %v3092 = vsel %vm83, %v3040, -inf
    %3093 = vmax.xlane.f32.xlu0 %v3092
    %v3094 = vpop.xlane.xlu0 %3093
    %v3095 = vsel %vm83, %v3072, -inf
    %3096 = vmax.xlane.f32.xlu0 %v3095
    %v3097 = vpop.xlane.xlu0 %3096
    %v3098 = vsel %vm83, %v3075, -inf
    %3099 = vmax.xlane.f32.xlu0 %v3098
    %v3100 = vpop.xlane.xlu0 %3099
    %v3101 = vsub.f32 %v2967, %v3079
    %v3102 = vsub.f32 %v2970, %v3082
    %v3103 = vsub.f32 %v3002, %v3085
    %v3104 = vsub.f32 %v3005, %v3088
    %v3105 = vsub.f32 %v3037, %v3091
    %v3106 = vsub.f32 %v3040, %v3094
    %v3107 = vsub.f32 %v3072, %v3097
    %v3108 = vsub.f32 %v3075, %v3100
    %v3109 = vmul.f32 %v3101, 1.442695
    %v3110 = vpow.pop %v3109
    %v3111 = vmul.f32 %v3102, 1.442695
    %v3112 = vpow.pop %v3111
    %v3113 = vmul.f32 %v3103, 1.442695
    %v3114 = vpow.pop %v3113
    %v3115 = vmul.f32 %v3104, 1.442695
    %v3116 = vpow.pop %v3115
    %v3117 = vmul.f32 %v3105, 1.442695
    %v3118 = vpow.pop %v3117
    %v3119 = vmul.f32 %v3106, 1.442695
    %v3120 = vpow.pop %v3119
    %v3121 = vmul.f32 %v3107, 1.442695
    %v3122 = vpow.pop %v3121
    %v3123 = vmul.f32 %v3108, 1.442695
    %v3124 = vpow.pop %v3123
    %v3125 = vsel %vm83, %v3110, 0.0
    %3126 = vadd.xlane.f32.xlu0 %v3125
    %v3127 = vpop.xlane.xlu0 %3126
    %v3128 = vsel %vm83, %v3112, 0.0
    %3129 = vadd.xlane.f32.xlu0 %v3128
    %v3130 = vpop.xlane.xlu0 %3129
    %v3131 = vsel %vm83, %v3114, 0.0
    %3132 = vadd.xlane.f32.xlu0 %v3131
    %v3133 = vpop.xlane.xlu0 %3132
    %v3134 = vsel %vm83, %v3116, 0.0
    %3135 = vadd.xlane.f32.xlu0 %v3134
    %v3136 = vpop.xlane.xlu0 %3135
    %v3137 = vsel %vm83, %v3118, 0.0
    %3138 = vadd.xlane.f32.xlu0 %v3137
    %v3139 = vpop.xlane.xlu0 %3138
    %v3140 = vsel %vm83, %v3120, 0.0
    %3141 = vadd.xlane.f32.xlu0 %v3140
    %v3142 = vpop.xlane.xlu0 %3141
    %v3143 = vsel %vm83, %v3122, 0.0
    %3144 = vadd.xlane.f32.xlu0 %v3143
    %v3145 = vpop.xlane.xlu0 %3144
    %v3146 = vsel %vm83, %v3124, 0.0
    %3147 = vadd.xlane.f32.xlu0 %v3146
    %v3148 = vpop.xlane.xlu0 %3147
    %v3149 = vrcp.pop %v3127
    %v3150 = vrcp.pop %v3130
    %v3151 = vrcp.pop %v3133
    %v3152 = vrcp.pop %v3136
    %v3153 = vrcp.pop %v3139
    %v3154 = vrcp.pop %v3142
    %v3155 = vrcp.pop %v3145
    %v3156 = vrcp.pop %v3148
    %v3157 = vmul.f32 %v3110, %v3149
    %v3158 = vmul.f32 %v3112, %v3150
    %v3159 = vmul.f32 %v3114, %v3151
    %v3160 = vmul.f32 %v3116, %v3152
    %v3161 = vmul.f32 %v3118, %v3153
    %v3162 = vmul.f32 %v3120, %v3154
    %v3163 = vmul.f32 %v3122, %v3155
    %v3164 = vmul.f32 %v3124, %v3156
    %3165 = vrot.lane.b32.xlu0 %v2914, 64
    %v3166 = vpop.permute.xlu0 %3165
    %3167 = vrot.lane.b32.xlu0 %v2916, 64
    %v3168 = vpop.permute.xlu0 %3167
    %v3172 = vsel %vm83, %v3157, 0
    %v3175 = vsel %vm83, %v3158, 0
    %3177 = vmatpush.msra.mxu0 0.0
    %3178 = vmatpush.msra.mxu0 0.0
    %3179 = vmatpush.msra.mxu0 0.0
    %3180 = vmatpush.msra.mxu0 0.0
    %3181 = vmatpush.msra.mxu0 0.0
    %3182 = vmatpush.msra.mxu0 0.0
    %3183 = vmatpush.msra.mxu0 0.0
    %3184 = vmatpush.msra.mxu0 0.0
    %3185 = vmatpush.msra.mxu0 0.0
    %3186 = vmatpush.msra.mxu0 0.0
    %3187 = vmatpush.msra.mxu0 0.0
    %3188 = vmatpush.msra.mxu0 0.0
    %3189 = vmatpush.msra.mxu0 0.0
    %3190 = vmatpush.msra.mxu0 0.0
    %3191 = vmatpush.msra.mxu0 %v3168
    %3192 = vmatpush.msra.mxu0 %v3166
    %3193 = vmatmul.f32.gmra.mxu0 %v3172
    %v3194 = vpop.f32.mrf.mxu0
    %v3195 = vadd.f32 0.0, %v3194
    %3196 = vmatmul.f32.gmra.mxu0 %v3175
    %v3197 = vpop.f32.mrf.mxu0
    %v3198 = vadd.f32 0.0, %v3197
    %3199 = vdwg.mxu0
    %3200 = vrot.lane.b32.xlu0 %v2926, 64
    %v3201 = vpop.permute.xlu0 %3200
    %3202 = vrot.lane.b32.xlu0 %v2928, 64
    %v3203 = vpop.permute.xlu0 %3202
    %v3207 = vsel %vm83, %v3159, 0
    %v3210 = vsel %vm83, %v3160, 0
    %3212 = vmatpush.msra.mxu0 0.0
    %3213 = vmatpush.msra.mxu0 0.0
    %3214 = vmatpush.msra.mxu0 0.0
    %3215 = vmatpush.msra.mxu0 0.0
    %3216 = vmatpush.msra.mxu0 0.0
    %3217 = vmatpush.msra.mxu0 0.0
    %3218 = vmatpush.msra.mxu0 0.0
    %3219 = vmatpush.msra.mxu0 0.0
    %3220 = vmatpush.msra.mxu0 0.0
    %3221 = vmatpush.msra.mxu0 0.0
    %3222 = vmatpush.msra.mxu0 0.0
    %3223 = vmatpush.msra.mxu0 0.0
    %3224 = vmatpush.msra.mxu0 0.0
    %3225 = vmatpush.msra.mxu0 0.0
    %3226 = vmatpush.msra.mxu0 %v3203
    %3227 = vmatpush.msra.mxu0 %v3201
    %3228 = vmatmul.f32.gmra.mxu0 %v3207
    %v3229 = vpop.f32.mrf.mxu0
    %v3230 = vadd.f32 0.0, %v3229
    %3231 = vmatmul.f32.gmra.mxu0 %v3210
    %v3232 = vpop.f32.mrf.mxu0
    %v3233 = vadd.f32 0.0, %v3232
    %3234 = vdwg.mxu0
    %3235 = vrot.lane.b32.xlu0 %v2930, 64
    %v3236 = vpop.permute.xlu0 %3235
    %3237 = vrot.lane.b32.xlu0 %v2932, 64
    %v3238 = vpop.permute.xlu0 %3237
    %v3242 = vsel %vm83, %v3161, 0
    %v3245 = vsel %vm83, %v3162, 0
    %3247 = vmatpush.msra.mxu0 0.0
    %3248 = vmatpush.msra.mxu0 0.0
    %3249 = vmatpush.msra.mxu0 0.0
    %3250 = vmatpush.msra.mxu0 0.0
    %3251 = vmatpush.msra.mxu0 0.0
    %3252 = vmatpush.msra.mxu0 0.0
    %3253 = vmatpush.msra.mxu0 0.0
    %3254 = vmatpush.msra.mxu0 0.0
    %3255 = vmatpush.msra.mxu0 0.0
    %3256 = vmatpush.msra.mxu0 0.0
    %3257 = vmatpush.msra.mxu0 0.0
    %3258 = vmatpush.msra.mxu0 0.0
    %3259 = vmatpush.msra.mxu0 0.0
    %3260 = vmatpush.msra.mxu0 0.0
    %3261 = vmatpush.msra.mxu0 %v3238
    %3262 = vmatpush.msra.mxu0 %v3236
    %3263 = vmatmul.f32.gmra.mxu0 %v3242
    %v3264 = vpop.f32.mrf.mxu0
    %v3265 = vadd.f32 0.0, %v3264
    %3266 = vmatmul.f32.gmra.mxu0 %v3245
    %v3267 = vpop.f32.mrf.mxu0
    %v3268 = vadd.f32 0.0, %v3267
    %3269 = vdwg.mxu0
    %3270 = vrot.lane.b32.xlu0 %v2934, 64
    %v3271 = vpop.permute.xlu0 %3270
    %3272 = vrot.lane.b32.xlu0 %v2936, 64
    %v3273 = vpop.permute.xlu0 %3272
    %v3277 = vsel %vm83, %v3163, 0
    %v3280 = vsel %vm83, %v3164, 0
    %3282 = vmatpush.msra.mxu0 0.0
    %3283 = vmatpush.msra.mxu0 0.0
    %3284 = vmatpush.msra.mxu0 0.0
    %3285 = vmatpush.msra.mxu0 0.0
    %3286 = vmatpush.msra.mxu0 0.0
    %3287 = vmatpush.msra.mxu0 0.0
    %3288 = vmatpush.msra.mxu0 0.0
    %3289 = vmatpush.msra.mxu0 0.0
    %3290 = vmatpush.msra.mxu0 0.0
    %3291 = vmatpush.msra.mxu0 0.0
    %3292 = vmatpush.msra.mxu0 0.0
    %3293 = vmatpush.msra.mxu0 0.0
    %3294 = vmatpush.msra.mxu0 0.0
    %3295 = vmatpush.msra.mxu0 0.0
    %3296 = vmatpush.msra.mxu0 %v3273
    %3297 = vmatpush.msra.mxu0 %v3271
    %3298 = vmatmul.f32.gmra.mxu0 %v3277
    %v3299 = vpop.f32.mrf.mxu0
    %v3300 = vadd.f32 0.0, %v3299
    %3301 = vmatmul.f32.gmra.mxu0 %v3280
    %v3302 = vpop.f32.mrf.mxu0
    %v3303 = vadd.f32 0.0, %v3302
    %3304 = vdwg.mxu0
    %3307 = vrot.lane.b32.xlu0 %v3230, 8
    %v3308 = vpop.permute.xlu0 %3307
    %3309 = vrot.lane.b32.xlu0 %v3233, 8
    %v3310 = vpop.permute.xlu0 %3309
    %3315 = vrot.lane.b32.xlu0 %v3265, 16
    %v3316 = vpop.permute.xlu0 %3315
    %3317 = vrot.lane.b32.xlu0 %v3268, 16
    %v3318 = vpop.permute.xlu0 %3317
    %3323 = vrot.lane.b32.xlu0 %v3300, 24
    %v3324 = vpop.permute.xlu0 %3323
    %3325 = vrot.lane.b32.xlu0 %v3303, 24
    %v3326 = vpop.permute.xlu0 %3325
    %v3329 = vsel %vm220, %v3195, %v3308
    %v3330 = vsel %vm220, %v3198, %v3310
    %v3331 = vsel %vm83, %v3329, %v3316
    %v3332 = vsel %vm83, %v3330, %v3318
    %v3333 = vsel %vm613, %v3331, %v3324
    %v3334 = vsel %vm613, %v3332, %v3326
    %v3335 = vpack.c.bf16 %v3334, %v3333
    %v3336 = vperm.slane %v2922, 0
    %v3341 = vunpack.c.l.b16 %v2918
    %v3342 = vunpack.c.l.b16 %v2919
    %v3343 = vunpack.c.l.b16 %v2920
    %v3344 = vunpack.c.l.b16 %v2921
    %v3345 = vpack.c.b16 %v3342, %v3341
    %v3346 = vpack.c.b16 %v3344, %v3343
    %v3350 = vsel %vm103, %v3335, 0
    %3352 = vmatpush.bf16.msra.mxu0 0
    %3353 = vmatpush.bf16.msra.mxu0 0
    %3354 = vmatpush.bf16.msra.mxu0 0
    %3355 = vmatpush.bf16.msra.mxu0 0
    %3356 = vmatpush.bf16.msra.mxu0 0
    %3357 = vmatpush.bf16.msra.mxu0 0
    %3358 = vmatpush.bf16.msra.mxu0 %v3346
    %3359 = vmatpush.bf16.msra.mxu0 %v3345
    %3360 = vmatmul.bf16.gmra.mxu0 %v3350
    %v3361 = vpop.f32.mrf.mxu0
    %v3362 = vadd.f32 %v3336, %v3361
    %v3363 = vpop.f32.mrf.mxu0
    %v3364 = vadd.f32 %v3336, %v3363
    %3365 = vdwg.mxu0
    %v3366 = vadd.f32 %v2828, %v3362
    %v3367 = vadd.f32 %v2829, %v3364
    %v3368 = vld [vmem:[%s8 + $0x26] sm:$0x1]
    %v3369 = vld [vmem:[%s8 + $0x27] sm:$0x1]
    %v3370 = vsel %vm103, %v3366, 0.0
    %3371 = vadd.xlane.f32.xlu0 %v3370
    %v3372 = vpop.xlane.xlu0 %3371
    %v3373 = vsel %vm103, %v3367, 0.0
    %3374 = vadd.xlane.f32.xlu0 %v3373
    %v3375 = vpop.xlane.xlu0 %3374
    %v3376 = vmul.f32 %v3372, %v116
    %v3377 = vmul.f32 %v3375, %v116
    %v3378 = vsub.f32 %v3366, %v3376
    %v3379 = vsub.f32 %v3367, %v3377
    %v3380 = vmul.f32 %v3378, %v3378
    %v3381 = vmul.f32 %v3379, %v3379
    %v3382 = vsel %vm103, %v3380, 0.0
    %3383 = vadd.xlane.f32.xlu0 %v3382
    %v3384 = vpop.xlane.xlu0 %3383
    %v3385 = vsel %vm103, %v3381, 0.0
    %3386 = vadd.xlane.f32.xlu0 %v3385
    %v3387 = vpop.xlane.xlu0 %3386
    %v3388 = vmul.f32 %v3384, %v116
    %v3389 = vmul.f32 %v3387, %v116
    %v3390 = vadd.f32 %v3388, 1e-06
    %v3391 = vadd.f32 %v3389, 1e-06
    %v3392 = vrsqrt.pop %v3390
    %v3393 = vmul.f32 %v3392, %v3390
    %v3394 = vmul.f32 %v3393, %v3392
    %v3395 = vmul.f32 0.5, %v3394
    %v3396 = vsub.f32 1.5, %v3395
    %v3397 = vmul.f32 %v3392, %v3396
    %vm3398 = vweird.f32 %v3390
    %vm3399 = vweird.f32 %v3392
    %vm3400 = vmor %vm3398, %vm3399
    %v3401 = vsel %vm3400, %v3392, %v3397
    %v3402 = vrsqrt.pop %v3391
    %v3403 = vmul.f32 %v3402, %v3391
    %v3404 = vmul.f32 %v3403, %v3402
    %v3405 = vmul.f32 0.5, %v3404
    %v3406 = vsub.f32 1.5, %v3405
    %v3407 = vmul.f32 %v3402, %v3406
    %vm3408 = vweird.f32 %v3391
    %vm3409 = vweird.f32 %v3402
    %vm3410 = vmor %vm3408, %vm3409
    %v3411 = vsel %vm3410, %v3402, %v3407
    %v3412 = vmul.f32 %v3378, %v3401
    %v3413 = vmul.f32 %v3379, %v3411
    %v3414 = vperm.slane %v3368, 0
    %v3415 = vmul.f32 %v3412, %v3414
    %v3416 = vmul.f32 %v3413, %v3414
    %v3417 = vperm.slane %v3369, 0
    %v3418 = vadd.f32 %v3415, %v3417
    %v3419 = vadd.f32 %v3416, %v3417
    %v3420 = vld [vmem:[#allocation2 + $0x140] sm:$0xf]
    %v3421 = vld [vmem:[#allocation2 + $0x144] sm:$0xf]
    %v3422 = vld [vmem:[#allocation2 + $0x148] sm:$0xf]
    %v3423 = vld [vmem:[#allocation2 + $0x14c] sm:$0xf]
    %v3424 = vpack.c.bf16 %v3419, %v3418
    %v3425 = vld [vmem:[%s8 + $0x1f] sm:$0x1]
    %v3426 = vperm.slane %v3425, 0
    %v3431 = vunpack.c.l.b16 %v3420
    %v3432 = vunpack.c.l.b16 %v3421
    %v3433 = vunpack.c.l.b16 %v3422
    %v3434 = vunpack.c.l.b16 %v3423
    %v3435 = vpack.c.b16 %v3432, %v3431
    %v3436 = vpack.c.b16 %v3434, %v3433
    %v3440 = vsel %vm103, %v3424, 0
    %3442 = vmatpush.bf16.msra.mxu0 0
    %3443 = vmatpush.bf16.msra.mxu0 0
    %3444 = vmatpush.bf16.msra.mxu0 0
    %3445 = vmatpush.bf16.msra.mxu0 0
    %3446 = vmatpush.bf16.msra.mxu0 0
    %3447 = vmatpush.bf16.msra.mxu0 0
    %3448 = vmatpush.bf16.msra.mxu0 %v3436
    %3449 = vmatpush.bf16.msra.mxu0 %v3435
    %3450 = vmatmul.bf16.gmra.mxu0 %v3440
    %v3451 = vpop.f32.mrf.mxu0
    %v3452 = vadd.f32 %v3426, %v3451
    %v3453 = vpop.f32.mrf.mxu0
    %v3454 = vadd.f32 %v3426, %v3453
    %3455 = vdwg.mxu0
    %v3456 = vld [vmem:[#allocation2 + $0x150] sm:$0xf]
    %v3457 = vld [vmem:[#allocation2 + $0x154] sm:$0xf]
    %v3458 = vld [vmem:[#allocation2 + $0x158] sm:$0xf]
    %v3459 = vld [vmem:[#allocation2 + $0x15c] sm:$0xf]
    %v3460 = vld [vmem:[%s8 + $0x20] sm:$0x1]
    %v3461 = vperm.slane %v3460, 0
    %v3466 = vunpack.c.l.b16 %v3456
    %v3467 = vunpack.c.l.b16 %v3457
    %v3468 = vunpack.c.l.b16 %v3458
    %v3469 = vunpack.c.l.b16 %v3459
    %v3470 = vpack.c.b16 %v3467, %v3466
    %v3471 = vpack.c.b16 %v3469, %v3468
    %3474 = vmatpush.bf16.msra.mxu0 0
    %3475 = vmatpush.bf16.msra.mxu0 0
    %3476 = vmatpush.bf16.msra.mxu0 0
    %3477 = vmatpush.bf16.msra.mxu0 0
    %3478 = vmatpush.bf16.msra.mxu0 0
    %3479 = vmatpush.bf16.msra.mxu0 0
    %3480 = vmatpush.bf16.msra.mxu0 %v3471
    %3481 = vmatpush.bf16.msra.mxu0 %v3470
    %3482 = vmatmul.bf16.gmra.mxu0 %v2220
    %v3483 = vpop.f32.mrf.mxu0
    %v3484 = vadd.f32 %v3461, %v3483
    %v3485 = vpop.f32.mrf.mxu0
    %v3486 = vadd.f32 %v3461, %v3485
    %3487 = vdwg.mxu0
    %v3488 = vld [vmem:[#allocation2 + $0x160] sm:$0xf]
    %v3489 = vld [vmem:[#allocation2 + $0x164] sm:$0xf]
    %v3490 = vld [vmem:[#allocation2 + $0x168] sm:$0xf]
    %v3491 = vld [vmem:[#allocation2 + $0x16c] sm:$0xf]
    %v3492 = vld [vmem:[%s8 + $0x21] sm:$0x1]
    %3495 = vrot.lane.b32.xlu0 %v3452, 120
    %v3496 = vpop.permute.xlu0 %3495
    %3497 = vrot.lane.b32.xlu0 %v3454, 120
    %v3498 = vpop.permute.xlu0 %3497
    %3499 = vrot.lane.b32.xlu0 %v3452, 112
    %v3500 = vpop.permute.xlu0 %3499
    %3501 = vrot.lane.b32.xlu0 %v3454, 112
    %v3502 = vpop.permute.xlu0 %3501
    %3503 = vrot.lane.b32.xlu0 %v3452, 104
    %v3504 = vpop.permute.xlu0 %3503
    %3505 = vrot.lane.b32.xlu0 %v3454, 104
    %v3506 = vpop.permute.xlu0 %3505
    %3509 = vrot.lane.b32.xlu0 %v3484, 120
    %v3510 = vpop.permute.xlu0 %3509
    %3511 = vrot.lane.b32.xlu0 %v3486, 120
    %v3512 = vpop.permute.xlu0 %3511
    %3513 = vrot.lane.b32.xlu0 %v3484, 112
    %v3514 = vpop.permute.xlu0 %3513
    %3515 = vrot.lane.b32.xlu0 %v3486, 112
    %v3516 = vpop.permute.xlu0 %3515
    %3517 = vrot.lane.b32.xlu0 %v3484, 104
    %v3518 = vpop.permute.xlu0 %3517
    %3519 = vrot.lane.b32.xlu0 %v3486, 104
    %v3520 = vpop.permute.xlu0 %3519
    %v3521 = vsel %vm220, %v3452, 0
    %v3523 = vsel %vm220, %v3454, 0
    %v3525 = vsel %vm220, %v3484, 0
    %v3527 = vsel %vm220, %v3486, 0
    %3529 = vmatpush.xpose.msra.mxu0 0.0
    %3530 = vmatpush.xpose.msra.mxu0 0.0
    %3531 = vmatpush.xpose.msra.mxu0 0.0
    %3532 = vmatpush.xpose.msra.mxu0 0.0
    %3533 = vmatpush.xpose.msra.mxu0 0.0
    %3534 = vmatpush.xpose.msra.mxu0 0.0
    %3535 = vmatpush.xpose.msra.mxu0 0.0
    %3536 = vmatpush.xpose.msra.mxu0 0.0
    %3537 = vmatpush.xpose.msra.mxu0 0.0
    %3538 = vmatpush.xpose.msra.mxu0 0.0
    %3539 = vmatpush.xpose.msra.mxu0 0.0
    %3540 = vmatpush.xpose.msra.mxu0 0.0
    %3541 = vmatpush.xpose.msra.mxu0 0.0
    %3542 = vmatpush.xpose.msra.mxu0 0.0
    %3543 = vmatpush.xpose.msra.mxu0 %v3527
    %3544 = vmatpush.xpose.msra.mxu0 %v3525
    %3545 = vmatmul.f32.gmra.mxu0 %v3521
    %v3546 = vpop.f32.mrf.mxu0
    %v3547 = vadd.f32 %v54, %v3546
    %3548 = vmatmul.f32.gmra.mxu0 %v3523
    %v3549 = vpop.f32.mrf.mxu0
    %v3550 = vadd.f32 %v55, %v3549
    %3551 = vdwg.mxu0
    %v3552 = vsel %vm220, %v3496, 0
    %v3554 = vsel %vm220, %v3498, 0
    %v3556 = vsel %vm220, %v3510, 0
    %v3558 = vsel %vm220, %v3512, 0
    %3560 = vmatpush.xpose.msra.mxu0 0.0
    %3561 = vmatpush.xpose.msra.mxu0 0.0
    %3562 = vmatpush.xpose.msra.mxu0 0.0
    %3563 = vmatpush.xpose.msra.mxu0 0.0
    %3564 = vmatpush.xpose.msra.mxu0 0.0
    %3565 = vmatpush.xpose.msra.mxu0 0.0
    %3566 = vmatpush.xpose.msra.mxu0 0.0
    %3567 = vmatpush.xpose.msra.mxu0 0.0
    %3568 = vmatpush.xpose.msra.mxu0 0.0
    %3569 = vmatpush.xpose.msra.mxu0 0.0
    %3570 = vmatpush.xpose.msra.mxu0 0.0
    %3571 = vmatpush.xpose.msra.mxu0 0.0
    %3572 = vmatpush.xpose.msra.mxu0 0.0
    %3573 = vmatpush.xpose.msra.mxu0 0.0
    %3574 = vmatpush.xpose.msra.mxu0 %v3558
    %3575 = vmatpush.xpose.msra.mxu0 %v3556
    %3576 = vmatmul.f32.gmra.mxu0 %v3552
    %v3577 = vpop.f32.mrf.mxu0
    %v3578 = vadd.f32 %v54, %v3577
    %3579 = vmatmul.f32.gmra.mxu0 %v3554
    %v3580 = vpop.f32.mrf.mxu0
    %v3581 = vadd.f32 %v55, %v3580
    %3582 = vdwg.mxu0
    %v3583 = vsel %vm220, %v3500, 0
    %v3585 = vsel %vm220, %v3502, 0
    %v3587 = vsel %vm220, %v3514, 0
    %v3589 = vsel %vm220, %v3516, 0
    %3591 = vmatpush.xpose.msra.mxu0 0.0
    %3592 = vmatpush.xpose.msra.mxu0 0.0
    %3593 = vmatpush.xpose.msra.mxu0 0.0
    %3594 = vmatpush.xpose.msra.mxu0 0.0
    %3595 = vmatpush.xpose.msra.mxu0 0.0
    %3596 = vmatpush.xpose.msra.mxu0 0.0
    %3597 = vmatpush.xpose.msra.mxu0 0.0
    %3598 = vmatpush.xpose.msra.mxu0 0.0
    %3599 = vmatpush.xpose.msra.mxu0 0.0
    %3600 = vmatpush.xpose.msra.mxu0 0.0
    %3601 = vmatpush.xpose.msra.mxu0 0.0
    %3602 = vmatpush.xpose.msra.mxu0 0.0
    %3603 = vmatpush.xpose.msra.mxu0 0.0
    %3604 = vmatpush.xpose.msra.mxu0 0.0
    %3605 = vmatpush.xpose.msra.mxu0 %v3589
    %3606 = vmatpush.xpose.msra.mxu0 %v3587
    %3607 = vmatmul.f32.gmra.mxu0 %v3583
    %v3608 = vpop.f32.mrf.mxu0
    %v3609 = vadd.f32 %v54, %v3608
    %3610 = vmatmul.f32.gmra.mxu0 %v3585
    %v3611 = vpop.f32.mrf.mxu0
    %v3612 = vadd.f32 %v55, %v3611
    %3613 = vdwg.mxu0
    %v3614 = vsel %vm220, %v3504, 0
    %v3616 = vsel %vm220, %v3506, 0
    %v3618 = vsel %vm220, %v3518, 0
    %v3620 = vsel %vm220, %v3520, 0
    %3622 = vmatpush.xpose.msra.mxu0 0.0
    %3623 = vmatpush.xpose.msra.mxu0 0.0
    %3624 = vmatpush.xpose.msra.mxu0 0.0
    %3625 = vmatpush.xpose.msra.mxu0 0.0
    %3626 = vmatpush.xpose.msra.mxu0 0.0
    %3627 = vmatpush.xpose.msra.mxu0 0.0
    %3628 = vmatpush.xpose.msra.mxu0 0.0
    %3629 = vmatpush.xpose.msra.mxu0 0.0
    %3630 = vmatpush.xpose.msra.mxu0 0.0
    %3631 = vmatpush.xpose.msra.mxu0 0.0
    %3632 = vmatpush.xpose.msra.mxu0 0.0
    %3633 = vmatpush.xpose.msra.mxu0 0.0
    %3634 = vmatpush.xpose.msra.mxu0 0.0
    %3635 = vmatpush.xpose.msra.mxu0 0.0
    %3636 = vmatpush.xpose.msra.mxu0 %v3620
    %3637 = vmatpush.xpose.msra.mxu0 %v3618
    %3638 = vmatmul.f32.gmra.mxu0 %v3614
    %v3639 = vpop.f32.mrf.mxu0
    %v3640 = vadd.f32 %v54, %v3639
    %3641 = vmatmul.f32.gmra.mxu0 %v3616
    %v3642 = vpop.f32.mrf.mxu0
    %v3643 = vadd.f32 %v55, %v3642
    %3644 = vdwg.mxu0
    %v3645 = vsel %vm83, %v3547, -inf
    %3646 = vmax.xlane.f32.xlu0 %v3645
    %v3647 = vpop.xlane.xlu0 %3646
    %v3648 = vsel %vm83, %v3550, -inf
    %3649 = vmax.xlane.f32.xlu0 %v3648
    %v3650 = vpop.xlane.xlu0 %3649
    %v3651 = vsel %vm83, %v3578, -inf
    %3652 = vmax.xlane.f32.xlu0 %v3651
    %v3653 = vpop.xlane.xlu0 %3652
    %v3654 = vsel %vm83, %v3581, -inf
    %3655 = vmax.xlane.f32.xlu0 %v3654
    %v3656 = vpop.xlane.xlu0 %3655
    %v3657 = vsel %vm83, %v3609, -inf
    %3658 = vmax.xlane.f32.xlu0 %v3657
    %v3659 = vpop.xlane.xlu0 %3658
    %v3660 = vsel %vm83, %v3612, -inf
    %3661 = vmax.xlane.f32.xlu0 %v3660
    %v3662 = vpop.xlane.xlu0 %3661
    %v3663 = vsel %vm83, %v3640, -inf
    %3664 = vmax.xlane.f32.xlu0 %v3663
    %v3665 = vpop.xlane.xlu0 %3664
    %v3666 = vsel %vm83, %v3643, -inf
    %3667 = vmax.xlane.f32.xlu0 %v3666
    %v3668 = vpop.xlane.xlu0 %3667
    %v3669 = vsub.f32 %v3547, %v3647
    %v3670 = vsub.f32 %v3550, %v3650
    %v3671 = vsub.f32 %v3578, %v3653
    %v3672 = vsub.f32 %v3581, %v3656
    %v3673 = vsub.f32 %v3609, %v3659
    %v3674 = vsub.f32 %v3612, %v3662
    %v3675 = vsub.f32 %v3640, %v3665
    %v3676 = vsub.f32 %v3643, %v3668
    %v3677 = vmul.f32 %v3669, 1.442695
    %v3678 = vpow.pop %v3677
    %v3679 = vmul.f32 %v3670, 1.442695
    %v3680 = vpow.pop %v3679
    %v3681 = vmul.f32 %v3671, 1.442695
    %v3682 = vpow.pop %v3681
    %v3683 = vmul.f32 %v3672, 1.442695
    %v3684 = vpow.pop %v3683
    %v3685 = vmul.f32 %v3673, 1.442695
    %v3686 = vpow.pop %v3685
    %v3687 = vmul.f32 %v3674, 1.442695
    %v3688 = vpow.pop %v3687
    %v3689 = vmul.f32 %v3675, 1.442695
    %v3690 = vpow.pop %v3689
    %v3691 = vmul.f32 %v3676, 1.442695
    %v3692 = vpow.pop %v3691
    %v3693 = vsel %vm83, %v3678, 0.0
    %3694 = vadd.xlane.f32.xlu0 %v3693
    %v3695 = vpop.xlane.xlu0 %3694
    %v3696 = vsel %vm83, %v3680, 0.0
    %3697 = vadd.xlane.f32.xlu0 %v3696
    %v3698 = vpop.xlane.xlu0 %3697
    %v3699 = vsel %vm83, %v3682, 0.0
    %3700 = vadd.xlane.f32.xlu0 %v3699
    %v3701 = vpop.xlane.xlu0 %3700
    %v3702 = vsel %vm83, %v3684, 0.0
    %3703 = vadd.xlane.f32.xlu0 %v3702
    %v3704 = vpop.xlane.xlu0 %3703
    %v3705 = vsel %vm83, %v3686, 0.0
    %3706 = vadd.xlane.f32.xlu0 %v3705
    %v3707 = vpop.xlane.xlu0 %3706
    %v3708 = vsel %vm83, %v3688, 0.0
    %3709 = vadd.xlane.f32.xlu0 %v3708
    %v3710 = vpop.xlane.xlu0 %3709
    %v3711 = vsel %vm83, %v3690, 0.0
    %3712 = vadd.xlane.f32.xlu0 %v3711
    %v3713 = vpop.xlane.xlu0 %3712
    %v3714 = vsel %vm83, %v3692, 0.0
    %3715 = vadd.xlane.f32.xlu0 %v3714
    %v3716 = vpop.xlane.xlu0 %3715
    %v3717 = vrcp.pop %v3695
    %v3718 = vrcp.pop %v3698
    %v3719 = vrcp.pop %v3701
    %v3720 = vrcp.pop %v3704
    %v3721 = vrcp.pop %v3707
    %v3722 = vrcp.pop %v3710
    %v3723 = vrcp.pop %v3713
    %v3724 = vrcp.pop %v3716
    %v3725 = vmul.f32 %v3678, %v3717
    %v3726 = vmul.f32 %v3680, %v3718
    %v3727 = vmul.f32 %v3682, %v3719
    %v3728 = vmul.f32 %v3684, %v3720
    %v3729 = vmul.f32 %v3686, %v3721
    %v3730 = vmul.f32 %v3688, %v3722
    %v3731 = vmul.f32 %v3690, %v3723
    %v3732 = vmul.f32 %v3692, %v3724
    %3733 = vrot.lane.b32.xlu0 %v3484, 96
    %v3734 = vpop.permute.xlu0 %3733
    %3735 = vrot.lane.b32.xlu0 %v3486, 96
    %v3736 = vpop.permute.xlu0 %3735
    %v3740 = vsel %vm83, %v3725, 0
    %v3743 = vsel %vm83, %v3726, 0
    %3745 = vmatpush.msra.mxu0 0.0
    %3746 = vmatpush.msra.mxu0 0.0
    %3747 = vmatpush.msra.mxu0 0.0
    %3748 = vmatpush.msra.mxu0 0.0
    %3749 = vmatpush.msra.mxu0 0.0
    %3750 = vmatpush.msra.mxu0 0.0
    %3751 = vmatpush.msra.mxu0 0.0
    %3752 = vmatpush.msra.mxu0 0.0
    %3753 = vmatpush.msra.mxu0 0.0
    %3754 = vmatpush.msra.mxu0 0.0
    %3755 = vmatpush.msra.mxu0 0.0
    %3756 = vmatpush.msra.mxu0 0.0
    %3757 = vmatpush.msra.mxu0 0.0
    %3758 = vmatpush.msra.mxu0 0.0
    %3759 = vmatpush.msra.mxu0 %v3736
    %3760 = vmatpush.msra.mxu0 %v3734
    %3761 = vmatmul.f32.gmra.mxu0 %v3740
    %v3762 = vpop.f32.mrf.mxu0
    %v3763 = vadd.f32 0.0, %v3762
    %3764 = vmatmul.f32.gmra.mxu0 %v3743
    %v3765 = vpop.f32.mrf.mxu0
    %v3766 = vadd.f32 0.0, %v3765
    %3767 = vdwg.mxu0
    %3768 = vrot.lane.b32.xlu0 %v3510, 96
    %v3769 = vpop.permute.xlu0 %3768
    %3770 = vrot.lane.b32.xlu0 %v3512, 96
    %v3771 = vpop.permute.xlu0 %3770
    %v3775 = vsel %vm83, %v3727, 0
    %v3778 = vsel %vm83, %v3728, 0
    %3780 = vmatpush.msra.mxu0 0.0
    %3781 = vmatpush.msra.mxu0 0.0
    %3782 = vmatpush.msra.mxu0 0.0
    %3783 = vmatpush.msra.mxu0 0.0
    %3784 = vmatpush.msra.mxu0 0.0
    %3785 = vmatpush.msra.mxu0 0.0
    %3786 = vmatpush.msra.mxu0 0.0
    %3787 = vmatpush.msra.mxu0 0.0
    %3788 = vmatpush.msra.mxu0 0.0
    %3789 = vmatpush.msra.mxu0 0.0
    %3790 = vmatpush.msra.mxu0 0.0
    %3791 = vmatpush.msra.mxu0 0.0
    %3792 = vmatpush.msra.mxu0 0.0
    %3793 = vmatpush.msra.mxu0 0.0
    %3794 = vmatpush.msra.mxu0 %v3771
    %3795 = vmatpush.msra.mxu0 %v3769
    %3796 = vmatmul.f32.gmra.mxu0 %v3775
    %v3797 = vpop.f32.mrf.mxu0
    %v3798 = vadd.f32 0.0, %v3797
    %3799 = vmatmul.f32.gmra.mxu0 %v3778
    %v3800 = vpop.f32.mrf.mxu0
    %v3801 = vadd.f32 0.0, %v3800
    %3802 = vdwg.mxu0
    %3803 = vrot.lane.b32.xlu0 %v3514, 96
    %v3804 = vpop.permute.xlu0 %3803
    %3805 = vrot.lane.b32.xlu0 %v3516, 96
    %v3806 = vpop.permute.xlu0 %3805
    %v3810 = vsel %vm83, %v3729, 0
    %v3813 = vsel %vm83, %v3730, 0
    %3815 = vmatpush.msra.mxu0 0.0
    %3816 = vmatpush.msra.mxu0 0.0
    %3817 = vmatpush.msra.mxu0 0.0
    %3818 = vmatpush.msra.mxu0 0.0
    %3819 = vmatpush.msra.mxu0 0.0
    %3820 = vmatpush.msra.mxu0 0.0
    %3821 = vmatpush.msra.mxu0 0.0
    %3822 = vmatpush.msra.mxu0 0.0
    %3823 = vmatpush.msra.mxu0 0.0
    %3824 = vmatpush.msra.mxu0 0.0
    %3825 = vmatpush.msra.mxu0 0.0
    %3826 = vmatpush.msra.mxu0 0.0
    %3827 = vmatpush.msra.mxu0 0.0
    %3828 = vmatpush.msra.mxu0 0.0
    %3829 = vmatpush.msra.mxu0 %v3806
    %3830 = vmatpush.msra.mxu0 %v3804
    %3831 = vmatmul.f32.gmra.mxu0 %v3810
    %v3832 = vpop.f32.mrf.mxu0
    %v3833 = vadd.f32 0.0, %v3832
    %3834 = vmatmul.f32.gmra.mxu0 %v3813
    %v3835 = vpop.f32.mrf.mxu0
    %v3836 = vadd.f32 0.0, %v3835
    %3837 = vdwg.mxu0
    %3838 = vrot.lane.b32.xlu0 %v3518, 96
    %v3839 = vpop.permute.xlu0 %3838
    %3840 = vrot.lane.b32.xlu0 %v3520, 96
    %v3841 = vpop.permute.xlu0 %3840
    %v3845 = vsel %vm83, %v3731, 0
    %v3848 = vsel %vm83, %v3732, 0
    %3850 = vmatpush.msra.mxu0 0.0
    %3851 = vmatpush.msra.mxu0 0.0
    %3852 = vmatpush.msra.mxu0 0.0
    %3853 = vmatpush.msra.mxu0 0.0
    %3854 = vmatpush.msra.mxu0 0.0
    %3855 = vmatpush.msra.mxu0 0.0
    %3856 = vmatpush.msra.mxu0 0.0
    %3857 = vmatpush.msra.mxu0 0.0
    %3858 = vmatpush.msra.mxu0 0.0
    %3859 = vmatpush.msra.mxu0 0.0
    %3860 = vmatpush.msra.mxu0 0.0
    %3861 = vmatpush.msra.mxu0 0.0
    %3862 = vmatpush.msra.mxu0 0.0
    %3863 = vmatpush.msra.mxu0 0.0
    %3864 = vmatpush.msra.mxu0 %v3841
    %3865 = vmatpush.msra.mxu0 %v3839
    %3866 = vmatmul.f32.gmra.mxu0 %v3845
    %v3867 = vpop.f32.mrf.mxu0
    %v3868 = vadd.f32 0.0, %v3867
    %3869 = vmatmul.f32.gmra.mxu0 %v3848
    %v3870 = vpop.f32.mrf.mxu0
    %v3871 = vadd.f32 0.0, %v3870
    %3872 = vdwg.mxu0
    %3875 = vrot.lane.b32.xlu0 %v3798, 8
    %v3876 = vpop.permute.xlu0 %3875
    %3877 = vrot.lane.b32.xlu0 %v3801, 8
    %v3878 = vpop.permute.xlu0 %3877
    %3883 = vrot.lane.b32.xlu0 %v3833, 16
    %v3884 = vpop.permute.xlu0 %3883
    %3885 = vrot.lane.b32.xlu0 %v3836, 16
    %v3886 = vpop.permute.xlu0 %3885
    %3891 = vrot.lane.b32.xlu0 %v3868, 24
    %v3892 = vpop.permute.xlu0 %3891
    %3893 = vrot.lane.b32.xlu0 %v3871, 24
    %v3894 = vpop.permute.xlu0 %3893
    %v3897 = vsel %vm220, %v3763, %v3876
    %v3898 = vsel %vm220, %v3766, %v3878
    %v3899 = vsel %vm83, %v3897, %v3884
    %v3900 = vsel %vm83, %v3898, %v3886
    %v3901 = vsel %vm613, %v3899, %v3892
    %v3902 = vsel %vm613, %v3900, %v3894
    %v3903 = vpack.c.bf16 %v3902, %v3901
    %v3904 = vperm.slane %v3492, 0
    %v3909 = vunpack.c.l.b16 %v3488
    %v3910 = vunpack.c.l.b16 %v3489
    %v3911 = vunpack.c.l.b16 %v3490
    %v3912 = vunpack.c.l.b16 %v3491
    %v3913 = vpack.c.b16 %v3910, %v3909
    %v3914 = vpack.c.b16 %v3912, %v3911
    %v3918 = vsel %vm103, %v3903, 0
    %3920 = vmatpush.bf16.msra.mxu0 0
    %3921 = vmatpush.bf16.msra.mxu0 0
    %3922 = vmatpush.bf16.msra.mxu0 0
    %3923 = vmatpush.bf16.msra.mxu0 0
    %3924 = vmatpush.bf16.msra.mxu0 0
    %3925 = vmatpush.bf16.msra.mxu0 0
    %3926 = vmatpush.bf16.msra.mxu0 %v3914
    %3927 = vmatpush.bf16.msra.mxu0 %v3913
    %3928 = vmatmul.bf16.gmra.mxu0 %v3918
    %v3929 = vpop.f32.mrf.mxu0
    %v3930 = vadd.f32 %v3904, %v3929
    %v3931 = vpop.f32.mrf.mxu0
    %v3932 = vadd.f32 %v3904, %v3931
    %3933 = vdwg.mxu0
    %v3934 = vadd.f32 %v3366, %v3930
    %v3935 = vadd.f32 %v3367, %v3932
    %v3936 = vld [vmem:[%s8 + $0x28] sm:$0x1]
    %v3937 = vld [vmem:[%s8 + $0x29] sm:$0x1]
    %v3938 = vsel %vm103, %v3934, 0.0
    %3939 = vadd.xlane.f32.xlu0 %v3938
    %v3940 = vpop.xlane.xlu0 %3939
    %v3941 = vsel %vm103, %v3935, 0.0
    %3942 = vadd.xlane.f32.xlu0 %v3941
    %v3943 = vpop.xlane.xlu0 %3942
    %v3944 = vmul.f32 %v3940, %v116
    %v3945 = vmul.f32 %v3943, %v116
    %v3946 = vsub.f32 %v3934, %v3944
    %v3947 = vsub.f32 %v3935, %v3945
    %v3948 = vmul.f32 %v3946, %v3946
    %v3949 = vmul.f32 %v3947, %v3947
    %v3950 = vsel %vm103, %v3948, 0.0
    %3951 = vadd.xlane.f32.xlu0 %v3950
    %v3952 = vpop.xlane.xlu0 %3951
    %v3953 = vsel %vm103, %v3949, 0.0
    %3954 = vadd.xlane.f32.xlu0 %v3953
    %v3955 = vpop.xlane.xlu0 %3954
    %v3956 = vmul.f32 %v3952, %v116
    %v3957 = vmul.f32 %v3955, %v116
    %v3958 = vadd.f32 %v3956, 1e-06
    %v3959 = vadd.f32 %v3957, 1e-06
    %v3960 = vrsqrt.pop %v3958
    %v3961 = vmul.f32 %v3960, %v3958
    %v3962 = vmul.f32 %v3961, %v3960
    %v3963 = vmul.f32 0.5, %v3962
    %v3964 = vsub.f32 1.5, %v3963
    %v3965 = vmul.f32 %v3960, %v3964
    %vm3966 = vweird.f32 %v3958
    %vm3967 = vweird.f32 %v3960
    %vm3968 = vmor %vm3966, %vm3967
    %v3969 = vsel %vm3968, %v3960, %v3965
    %v3970 = vrsqrt.pop %v3959
    %v3971 = vmul.f32 %v3970, %v3959
    %v3972 = vmul.f32 %v3971, %v3970
    %v3973 = vmul.f32 0.5, %v3972
    %v3974 = vsub.f32 1.5, %v3973
    %v3975 = vmul.f32 %v3970, %v3974
    %vm3976 = vweird.f32 %v3959
    %vm3977 = vweird.f32 %v3970
    %vm3978 = vmor %vm3976, %vm3977
    %v3979 = vsel %vm3978, %v3970, %v3975
    %v3980 = vmul.f32 %v3946, %v3969
    %v3981 = vmul.f32 %v3947, %v3979
    %v3982 = vperm.slane %v3936, 0
    %v3983 = vmul.f32 %v3980, %v3982
    %v3984 = vmul.f32 %v3981, %v3982
    %v3985 = vperm.slane %v3937, 0
    %v3986 = vadd.f32 %v3983, %v3985
    %v3987 = vadd.f32 %v3984, %v3985
    %v3988 = vld [vmem:[#allocation2 + $0x170] sm:$0xf]
    %v3989 = vld [vmem:[#allocation2 + $0x174] sm:$0xf]
    %v3990 = vld [vmem:[#allocation2 + $0x178] sm:$0xf]
    %v3991 = vld [vmem:[#allocation2 + $0x17c] sm:$0xf]
    %v3992 = vpack.c.bf16 %v3987, %v3986
    %v3993 = vld [vmem:[%s8 + $0x22] sm:$0x1]
    %v3994 = vperm.slane %v3993, 0
    %v3999 = vunpack.c.l.b16 %v3988
    %v4000 = vunpack.c.l.b16 %v3989
    %v4001 = vunpack.c.l.b16 %v3990
    %v4002 = vunpack.c.l.b16 %v3991
    %v4003 = vpack.c.b16 %v4000, %v3999
    %v4004 = vpack.c.b16 %v4002, %v4001
    %v4008 = vsel %vm103, %v3992, 0
    %4010 = vmatpush.bf16.msra.mxu0 0
    %4011 = vmatpush.bf16.msra.mxu0 0
    %4012 = vmatpush.bf16.msra.mxu0 0
    %4013 = vmatpush.bf16.msra.mxu0 0
    %4014 = vmatpush.bf16.msra.mxu0 0
    %4015 = vmatpush.bf16.msra.mxu0 0
    %4016 = vmatpush.bf16.msra.mxu0 %v4004
    %4017 = vmatpush.bf16.msra.mxu0 %v4003
    %4018 = vmatmul.bf16.gmra.mxu0 %v4008
    %v4019 = vpop.f32.mrf.mxu0
    %v4020 = vadd.f32 %v3994, %v4019
    %v4021 = vpop.f32.mrf.mxu0
    %v4022 = vadd.f32 %v3994, %v4021
    %4023 = vdwg.mxu0
    %v4024 = vmax.f32 %v4020, 0.0
    %v4025 = vmax.f32 %v4022, 0.0
    %v4026 = vld [vmem:[#allocation2 + $0x180] sm:$0xf]
    %v4027 = vld [vmem:[#allocation2 + $0x184] sm:$0xf]
    %v4028 = vld [vmem:[#allocation2 + $0x188] sm:$0xf]
    %v4029 = vld [vmem:[#allocation2 + $0x18c] sm:$0xf]
    %v4030 = vld [vmem:[#allocation2 + $0x190] sm:$0xf]
    %v4031 = vld [vmem:[#allocation2 + $0x194] sm:$0xf]
    %v4032 = vld [vmem:[#allocation2 + $0x198] sm:$0xf]
    %v4033 = vld [vmem:[#allocation2 + $0x19c] sm:$0xf]
    %v4034 = vpack.c.bf16 %v4025, %v4024
    %v4043 = vunpack.c.l.b16 %v4026
    %v4044 = vunpack.c.l.b16 %v4027
    %v4045 = vunpack.c.l.b16 %v4028
    %v4046 = vunpack.c.l.b16 %v4029
    %v4047 = vunpack.c.l.b16 %v4030
    %v4048 = vunpack.c.l.b16 %v4031
    %v4049 = vunpack.c.l.b16 %v4032
    %v4050 = vunpack.c.l.b16 %v4033
    %v4051 = vpack.c.b16 %v4044, %v4043
    %v4052 = vpack.c.b16 %v4046, %v4045
    %v4053 = vpack.c.b16 %v4048, %v4047
    %v4054 = vpack.c.b16 %v4050, %v4049
    %v4060 = vsel %vm772, %v4034, 0
    %4062 = vmatpush.bf16.msra.mxu0 0
    %4063 = vmatpush.bf16.msra.mxu0 0
    %4064 = vmatpush.bf16.msra.mxu0 0
    %4065 = vmatpush.bf16.msra.mxu0 0
    %4066 = vmatpush.bf16.msra.mxu0 %v4054
    %4067 = vmatpush.bf16.msra.mxu0 %v4053
    %4068 = vmatpush.bf16.msra.mxu0 %v4052
    %4069 = vmatpush.bf16.msra.mxu0 %v4051
    %4070 = vmatmul.bf16.gmra.mxu0 %v4060
    %v4071 = vpop.f32.mrf.mxu0
    %v4072 = vadd.f32 0.0, %v4071
    %v4073 = vpop.f32.mrf.mxu0
    %v4074 = vadd.f32 0.0, %v4073
    %4075 = vdwg.mxu0
    %v4076 = vadd.f32 %v3934, %v4072
    %v4077 = vadd.f32 %v3935, %v4074
    %v4078 = vld [vmem:[%s8 + $0x23] sm:$0x1]
    %v4079 = vperm.slane %v4078, 0
    %v4080 = vadd.f32 %v4076, %v4079
    %v4081 = vadd.f32 %v4077, %v4079
    %v4082 = vld [vmem:[%s8 + $0x2c] sm:$0x1]
    %v4083 = vld [vmem:[%s8 + $0x2d] sm:$0x1]
    %v4084 = vsel %vm103, %v4080, 0.0
    %4085 = vadd.xlane.f32.xlu0 %v4084
    %v4086 = vpop.xlane.xlu0 %4085
    %v4087 = vsel %vm103, %v4081, 0.0
    %4088 = vadd.xlane.f32.xlu0 %v4087
    %v4089 = vpop.xlane.xlu0 %4088
    %v4090 = vmul.f32 %v4086, %v116
    %v4091 = vmul.f32 %v4089, %v116
    %v4092 = vsub.f32 %v4080, %v4090
    %v4093 = vsub.f32 %v4081, %v4091
    %v4094 = vmul.f32 %v4092, %v4092
    %v4095 = vmul.f32 %v4093, %v4093
    %v4096 = vsel %vm103, %v4094, 0.0
    %4097 = vadd.xlane.f32.xlu0 %v4096
    %v4098 = vpop.xlane.xlu0 %4097
    %v4099 = vsel %vm103, %v4095, 0.0
    %4100 = vadd.xlane.f32.xlu0 %v4099
    %v4101 = vpop.xlane.xlu0 %4100
    %v4102 = vmul.f32 %v4098, %v116
    %v4103 = vmul.f32 %v4101, %v116
    %v4104 = vadd.f32 %v4102, 1e-06
    %v4105 = vadd.f32 %v4103, 1e-06
    %v4106 = vrsqrt.pop %v4104
    %v4107 = vmul.f32 %v4106, %v4104
    %v4108 = vmul.f32 %v4107, %v4106
    %v4109 = vmul.f32 0.5, %v4108
    %v4110 = vsub.f32 1.5, %v4109
    %v4111 = vmul.f32 %v4106, %v4110
    %vm4112 = vweird.f32 %v4104
    %vm4113 = vweird.f32 %v4106
    %vm4114 = vmor %vm4112, %vm4113
    %v4115 = vsel %vm4114, %v4106, %v4111
    %v4116 = vrsqrt.pop %v4105
    %v4117 = vmul.f32 %v4116, %v4105
    %v4118 = vmul.f32 %v4117, %v4116
    %v4119 = vmul.f32 0.5, %v4118
    %v4120 = vsub.f32 1.5, %v4119
    %v4121 = vmul.f32 %v4116, %v4120
    %vm4122 = vweird.f32 %v4105
    %vm4123 = vweird.f32 %v4116
    %vm4124 = vmor %vm4122, %vm4123
    %v4125 = vsel %vm4124, %v4116, %v4121
    %v4126 = vmul.f32 %v4092, %v4115
    %v4127 = vmul.f32 %v4093, %v4125
    %v4128 = vperm.slane %v4082, 0
    %v4129 = vmul.f32 %v4126, %v4128
    %v4130 = vmul.f32 %v4127, %v4128
    %v4131 = vperm.slane %v4083, 0
    %v4132 = vadd.f32 %v4129, %v4131
    %v4133 = vadd.f32 %v4130, %v4131
    %4134 = vst.msk [vmem:[#allocation5] sm:$0xff] %vm103, %v4132
    %4135 = vst.msk [vmem:[#allocation5 + $0x8] sm:$0xff] %vm103, %v4133
    // Predicated region
    $region42: #{encode_decode_forward.1} parent=1 // pred_check
      _
    $region43: #{encode_decode_forward.1} parent=1 // pred_check_branch
      %4137 = sbr.rel (0) target = $region45
    $region44: #{encode_decode_forward.1} parent=1 // pred_region
      %4139 = vsyncadd [#allocation4], 0
      %s4140 = sshll.u32 [#allocation5], 4
      %s4141 = int_to_ptr.vmem [resolvable:$true] %s4140
      %s4142 = sshll.u32 %s9, 4
      %s4143 = int_to_ptr.hbm [resolvable:$true] %s4142
      %4148 = dma.vmem_to_hbm [thread:$0]  %s4141, 256, %s4143, [#allocation4], 128, 128, 8
    $region45: #{encode_decode_forward.1} parent=1 // pred_fallthru
      _
    // Predicated region
    $region46: #{encode_decode_forward.1} parent=1 // pred_check
      _
    $region47: #{encode_decode_forward.1} parent=1 // pred_check_branch
      %4150 = sbr.rel (0) target = $region49
    $region48: #{encode_decode_forward.1} parent=1 // pred_region
      %4152 = dma.done [#allocation4], 256
    $region49: #{encode_decode_forward.1} parent=1 // pred_fallthru
      _
    %4153 = vsyncpa [#allocation3], 1
    %4154 = vsyncpa [#allocation4], 1

</llo_original>
